<compile_context>
chip_gen: v7x
topology: tpu7x:2x2x1
jax: 0.10.0
libtpu: 0.0.40
codegen_flags: <defaults>
</compile_context>

<pallas_src>
import functools

import numpy as np

import jax
import jax.numpy as jnp
from jax.experimental import pallas as pl
from jax.experimental.pallas import tpu as pltpu


# ----------------------------------------------------------------------------
# Synthetic ViT configuration (stand-in for vit-large-patch32-384)
# ----------------------------------------------------------------------------
IMG = 32           # image spatial size
PATCH = 8          # patch size
CHANNELS = 3
HIDDEN = 32        # feature_dim
HEADS = 4
DH = HIDDEN // HEADS
LAYERS = 2
MLP_DIM = 4 * HIDDEN
NUM_CLASSES = 3
N_PATCH = (IMG // PATCH) ** 2
SEQ = N_PATCH + 1                      # +1 for CLS token
S_PAD = ((SEQ + 7) // 8) * 8           # pad tokens to a sublane multiple (17 -> 24)
PATCH_DIM = CHANNELS * PATCH * PATCH
LN_EPS = 1e-12
BN_EPS = 1e-5
SM_SCALE = 1.0 / (DH ** 0.5)
NEG_INF = -1e30


# ----------------------------------------------------------------------------
# Fused kernel
# ----------------------------------------------------------------------------

def _mxu(a, b_bf16):
    """MXU matmul: activation cast to bf16, weight already bf16, f32 accum."""
    return jnp.dot(a.astype(jnp.bfloat16), b_bf16,
                   preferred_element_type=jnp.float32)


def _layer_norm(x, gamma, beta):
    mu = jnp.mean(x, axis=-1, keepdims=True)
    var = jnp.mean((x - mu) * (x - mu), axis=-1, keepdims=True)
    return (x - mu) * jax.lax.rsqrt(var + LN_EPS) * gamma + beta


def _multimodel_kernel(
    patches_ref, add_ref, mask_ref, patch_w_ref,
    ln1g_ref, ln1b_ref, wqkv_ref, bqkv_ref, wo_ref, bo_ref,
    ln2g_ref, ln2b_ref, wm1_ref, bm1_ref, wm2_ref, bm2_ref,
    w1_ref, b1_ref, w2_ref, b2_ref, w3_ref, b3_ref, w4_ref, b4_ref,
    o_ref, *, batch):
    # --- patch embedding + CLS + positional embedding -------------------------
    # CLS / pad rows of `patches` are zero; `add` holds (cls+pos0), (patch_b+pos)
    # or 0 so no in-kernel select is needed.
    x = _mxu(patches_ref[...], patch_w_ref[...]) + add_ref[...]        # [T, D] f32
    mask_bias = mask_ref[...]                                          # [T, T] f32

    # --- transformer encoder (static unroll; all weights stay in VMEM) --------
    for l in range(LAYERS):
        # pre-norm self-attention with fused QKV projection
        # (1/sqrt(dh) is already folded into the Q weights/bias at pack time)
        h = _layer_norm(x, ln1g_ref[l], ln1b_ref[l])
        qkv = _mxu(h, wqkv_ref[l]) + bqkv_ref[l]                       # [T, 3D] f32
        qkv_bf = qkv.astype(jnp.bfloat16)                              # cast once
        o_heads = []
        for hh in range(HEADS):                                        # in-kernel head split
            q = qkv_bf[:, hh * DH:(hh + 1) * DH]
            k = qkv_bf[:, HIDDEN + hh * DH:HIDDEN + (hh + 1) * DH]
            v = qkv_bf[:, 2 * HIDDEN + hh * DH:2 * HIDDEN + (hh + 1) * DH]
            s = jax.lax.dot_general(q, k, (((1,), (1,)), ((), ())),
                                    preferred_element_type=jnp.float32)
            s = s + mask_bias                                          # additive mask (vadd)
            m = jnp.max(s, axis=-1, keepdims=True)
            p = jnp.exp(s - m)
            denom = jnp.sum(p, axis=-1, keepdims=True)
            p = p * pl.reciprocal(denom, approx=True)                  # EUP, not VALU
            o_h = jnp.dot(p.astype(jnp.bfloat16), v,                   # bf16 MXU, f32 acc
                          preferred_element_type=jnp.float32)
            o_heads.append(o_h.astype(jnp.bfloat16))
        # lane-concat heads (XLU), then one merged output projection (MXU)
        attn_in = jnp.concatenate(o_heads, axis=-1)                    # [T, D] bf16
        attn = jnp.dot(attn_in, wo_ref[l], preferred_element_type=jnp.float32)
        x = x + attn + bo_ref[l]

        # pre-norm MLP (tanh GELU -> EUP)
        h = _layer_norm(x, ln2g_ref[l], ln2b_ref[l])
        h = jax.nn.gelu(_mxu(h, wm1_ref[l]) + bm1_ref[l], approximate=True)
        x = x + _mxu(h, wm2_ref[l]) + bm2_ref[l]

    # --- CLS-token extraction: static sublane-aligned row slices --------------
    feats = jnp.concatenate(
        [x[b * S_PAD:b * S_PAD + 1, :] for b in range(batch)], axis=0)  # [B, D]

    # --- MLP head: BN folded into weights on host, dropout = identity (eval) --
    z = jnp.maximum(_mxu(feats, w1_ref[...]) + b1_ref[...], 0.0)
    z = jnp.maximum(_mxu(z, w2_ref[...]) + b2_ref[...], 0.0)
    z = jnp.maximum(_mxu(z, w3_ref[...]) + b3_ref[...], 0.0)
    logits = _mxu(z, w4_ref[...]) + b4_ref[...]
    o_ref[...] = logits.astype(o_ref.dtype)


# ----------------------------------------------------------------------------
# Parameters (synthetic), host-side packing, and the forward wrapper
# ----------------------------------------------------------------------------

def init_params(key):
    def nrm(k, shape, std=0.02):
        return (std * jax.random.normal(k, shape)).astype(jnp.float32)

    keys = iter(jax.random.split(key, 64))
    p = {}
    # patch embedding (conv stride=PATCH expressed as matmul on flattened patches)
    p["patch_w"] = nrm(next(keys), (PATCH_DIM, HIDDEN))
    p["patch_b"] = jnp.zeros((HIDDEN,), jnp.float32)
    p["cls"] = nrm(next(keys), (1, 1, HIDDEN))
    p["pos"] = nrm(next(keys), (1, SEQ, HIDDEN))
    p["layers"] = []
    for _ in range(LAYERS):
        lp = {
            "ln1_g": jnp.ones((HIDDEN,), jnp.float32),
            "ln1_b": jnp.zeros((HIDDEN,), jnp.float32),
            "wq": nrm(next(keys), (HIDDEN, HIDDEN)), "bq": jnp.zeros((HIDDEN,), jnp.float32),
            "wk": nrm(next(keys), (HIDDEN, HIDDEN)), "bk": jnp.zeros((HIDDEN,), jnp.float32),
            "wv": nrm(next(keys), (HIDDEN, HIDDEN)), "bv": jnp.zeros((HIDDEN,), jnp.float32),
            "wo": nrm(next(keys), (HIDDEN, HIDDEN)), "bo": jnp.zeros((HIDDEN,), jnp.float32),
            "ln2_g": jnp.ones((HIDDEN,), jnp.float32),
            "ln2_b": jnp.zeros((HIDDEN,), jnp.float32),
            "w_mlp1": nrm(next(keys), (HIDDEN, MLP_DIM)), "b_mlp1": jnp.zeros((MLP_DIM,), jnp.float32),
            "w_mlp2": nrm(next(keys), (MLP_DIM, HIDDEN)), "b_mlp2": jnp.zeros((HIDDEN,), jnp.float32),
        }
        p["layers"].append(lp)

    # MLP classification head (defined directly in MultiModel.__init__)
    dims = [(HIDDEN, 256), (256, 128), (128, 64), (64, NUM_CLASSES)]
    for n, (din, dout) in zip(["fc1", "fc2", "fc3", "fc4"], dims):
        bound = 1.0 / (din ** 0.5)
        p[f"{n}_w"] = jax.random.uniform(next(keys), (din, dout), jnp.float32, -bound, bound)
        p[f"{n}_b"] = jax.random.uniform(next(keys), (dout,), jnp.float32, -bound, bound)
    # BatchNorm1d (eval mode): gamma=1, beta=0, running_mean=0, running_var=1
    for n, d in zip(["bn1", "bn2", "bn3"], [256, 128, 64]):
        p[f"{n}_gamma"] = jnp.ones((d,), jnp.float32)
        p[f"{n}_beta"] = jnp.zeros((d,), jnp.float32)
        p[f"{n}_mean"] = jnp.zeros((d,), jnp.float32)
        p[f"{n}_var"] = jnp.ones((d,), jnp.float32)
    return p


def pack_params(p):
    """One-time host-side prep: merge QKV (with SM_SCALE folded into Q), stack
    per-layer weights, fold eval-mode BN, pre-cast all weight slabs to bf16."""
    packed = {"patch_w": p["patch_w"].astype(jnp.bfloat16)}

    # additive slab per token row: CLS row -> cls+pos0; patch rows -> patch_b+pos;
    # padded rows -> 0
    cls_row = (p["cls"][0, 0] + p["pos"][0, 0])[None, :]
    patch_rows = p["patch_b"][None, :] + p["pos"][0, 1:SEQ]
    pad_rows = jnp.zeros((S_PAD - SEQ, HIDDEN), jnp.float32)
    packed["add_slab"] = jnp.concatenate([cls_row, patch_rows, pad_rows], axis=0)  # [S_PAD, D]

    def stack(name):
        return jnp.stack([lp[name] for lp in p["layers"]], axis=0)

    packed["ln1_g"] = stack("ln1_g")[:, None, :]
    packed["ln1_b"] = stack("ln1_b")[:, None, :]
    # fold attention scale into the Q projection (weights AND bias)
    packed["wqkv"] = jnp.stack(
        [jnp.concatenate([lp["wq"] * SM_SCALE, lp["wk"], lp["wv"]], axis=1)
         for lp in p["layers"]], axis=0).astype(jnp.bfloat16)
    packed["bqkv"] = jnp.stack(
        [jnp.concatenate([lp["bq"] * SM_SCALE, lp["bk"], lp["bv"]], axis=0)
         for lp in p["layers"]], axis=0)[:, None, :]
    packed["wo"] = stack("wo").astype(jnp.bfloat16)
    packed["bo"] = stack("bo")[:, None, :]
    packed["ln2_g"] = stack("ln2_g")[:, None, :]
    packed["ln2_b"] = stack("ln2_b")[:, None, :]
    packed["w_mlp1"] = stack("w_mlp1").astype(jnp.bfloat16)
    packed["b_mlp1"] = stack("b_mlp1")[:, None, :]
    packed["w_mlp2"] = stack("w_mlp2").astype(jnp.bfloat16)
    packed["b_mlp2"] = stack("b_mlp2")[:, None, :]

    # fold eval-mode BatchNorm1d into the preceding Linear: bn(xW+b) = x(W*s) + (b*s + sh)
    def fold(w, b, g, beta, mean, var):
        scale = g * jax.lax.rsqrt(var + BN_EPS)
        return w * scale[None, :], b * scale + (beta - mean * scale)

    for i, n in enumerate(["fc1", "fc2", "fc3"], start=1):
        w, b = fold(p[f"{n}_w"], p[f"{n}_b"], p[f"bn{i}_gamma"], p[f"bn{i}_beta"],
                    p[f"bn{i}_mean"], p[f"bn{i}_var"])
        packed[f"{n}_w"], packed[f"{n}_b"] = w.astype(jnp.bfloat16), b[None, :]
    packed["fc4_w"] = p["fc4_w"].astype(jnp.bfloat16)
    packed["fc4_b"] = p["fc4_b"][None, :]
    return packed


@functools.lru_cache(maxsize=None)
def _make_mask_bias(batch):
    """Additive attention bias [T,T]: 0 for (same image && real token), -1e30
    otherwise. Built with numpy so it is a compile-time constant."""
    T = batch * S_PAD
    ri = np.arange(T)[:, None]
    cj = np.arange(T)[None, :]
    rb = ri // S_PAD
    cb = cj // S_PAD
    valid = (rb == cb) & ((cj - cb * S_PAD) < SEQ)
    return jnp.asarray(np.where(valid, 0.0, NEG_INF).astype(np.float32))


def extract_patches(pixel_values):
    # NCHW -> [B, N_PATCH, C*P*P], flattening each patch in (C, ph, pw) order
    # to match a PyTorch Conv2d(stride=patch) patch embedding.
    B = pixel_values.shape[0]
    n = IMG // PATCH
    x = pixel_values.reshape(B, CHANNELS, n, PATCH, n, PATCH)
    x = jnp.transpose(x, (0, 2, 4, 1, 3, 5))
    return x.reshape(B, n * n, PATCH_DIM)


def multi_model_forward(packed, pixel_values):
    B = pixel_values.shape[0]
    T = B * S_PAD
    patches = extract_patches(pixel_values.astype(jnp.float32))         # [B, Np, C*P*P]
    # insert a zero CLS row and zero padding rows so the token slab is sublane
    # aligned, then cast the activation slab to bf16 on the host side
    patches_pad = jnp.pad(patches, ((0, 0), (1, S_PAD - 1 - N_PATCH), (0, 0)))
    patches_pad = patches_pad.reshape(T, PATCH_DIM).astype(jnp.bfloat16)
    add_slab = jnp.broadcast_to(packed["add_slab"][None], (B, S_PAD, HIDDEN)).reshape(T, HIDDEN)
    mask_bias = _make_mask_bias(B)

    kernel = functools.partial(_multimodel_kernel, batch=B)
    return pl.pallas_call(
        kernel,
        out_shape=jax.ShapeDtypeStruct((B, NUM_CLASSES), jnp.float32),
        compiler_params=pltpu.CompilerParams(vmem_limit_bytes=16 * 1024 * 1024),
    )(
        patches_pad, add_slab, mask_bias, packed["patch_w"],
        packed["ln1_g"], packed["ln1_b"], packed["wqkv"], packed["bqkv"],
        packed["wo"], packed["bo"], packed["ln2_g"], packed["ln2_b"],
        packed["w_mlp1"], packed["b_mlp1"], packed["w_mlp2"], packed["b_mlp2"],
        packed["fc1_w"], packed["fc1_b"], packed["fc2_w"], packed["fc2_b"],
        packed["fc3_w"], packed["fc3_b"], packed["fc4_w"], packed["fc4_b"],
    )


if __name__ == "__main__":
    key = jax.random.PRNGKey(0)
    kp, kx = jax.random.split(key)
    params = init_params(kp)
    packed = pack_params(params)
    pixel_values = jax.random.normal(kx, (2, CHANNELS, IMG, IMG), jnp.float32)

    logits = jax.jit(multi_model_forward)(packed, pixel_values)
    jax.block_until_ready(logits)
    assert logits.shape == (2, NUM_CLASSES)
    assert bool(jnp.all(jnp.isfinite(logits)))
    print("KERNEL_OK")
</pallas_src>

<mosaic_0001>
module attributes {stable_mosaic.version = 11 : i64} {
  func.func @_multimodel_kernel(%arg0: memref<48x192xbf16, #tpu.memory_space<vmem>>, %arg1: memref<48x32xf32, #tpu.memory_space<vmem>>, %arg2: memref<48x48xf32, #tpu.memory_space<vmem>>, %arg3: memref<192x32xbf16, #tpu.memory_space<vmem>>, %arg4: memref<2x1x32xf32, #tpu.memory_space<vmem>>, %arg5: memref<2x1x32xf32, #tpu.memory_space<vmem>>, %arg6: memref<2x32x96xbf16, #tpu.memory_space<vmem>>, %arg7: memref<2x1x96xf32, #tpu.memory_space<vmem>>, %arg8: memref<2x32x32xbf16, #tpu.memory_space<vmem>>, %arg9: memref<2x1x32xf32, #tpu.memory_space<vmem>>, %arg10: memref<2x1x32xf32, #tpu.memory_space<vmem>>, %arg11: memref<2x1x32xf32, #tpu.memory_space<vmem>>, %arg12: memref<2x32x128xbf16, #tpu.memory_space<vmem>>, %arg13: memref<2x1x128xf32, #tpu.memory_space<vmem>>, %arg14: memref<2x128x32xbf16, #tpu.memory_space<vmem>>, %arg15: memref<2x1x32xf32, #tpu.memory_space<vmem>>, %arg16: memref<32x256xbf16, #tpu.memory_space<vmem>>, %arg17: memref<1x256xf32, #tpu.memory_space<vmem>>, %arg18: memref<256x128xbf16, #tpu.memory_space<vmem>>, %arg19: memref<1x128xf32, #tpu.memory_space<vmem>>, %arg20: memref<128x64xbf16, #tpu.memory_space<vmem>>, %arg21: memref<1x64xf32, #tpu.memory_space<vmem>>, %arg22: memref<64x3xbf16, #tpu.memory_space<vmem>>, %arg23: memref<1x3xf32, #tpu.memory_space<vmem>>, %arg24: memref<2x3xf32, #tpu.memory_space<vmem>>) attributes {dimension_semantics = [], scalar_prefetch = 0 : i64, scratch_operands = 0 : i64, tpu.core_type = #tpu.core_type<tc>} {
    %c0 = arith.constant 0 : index
    %c0_0 = arith.constant 0 : index
    %0 = vector.load %arg0[%c0, %c0_0] : memref<48x192xbf16, #tpu.memory_space<vmem>>, vector<48x192xbf16>
    %c0_1 = arith.constant 0 : index
    %c0_2 = arith.constant 0 : index
    %1 = vector.load %arg3[%c0_1, %c0_2] : memref<192x32xbf16, #tpu.memory_space<vmem>>, vector<192x32xbf16>
    %cst = arith.constant dense<0.000000e+00> : vector<48x32xf32>
    %2 = tpu.matmul %0, %1, %cst {dimension_numbers = #tpu.dot_dimension_numbers<[1], [0], [0], [1], [0, 0, 1, 1], [], []>} : vector<48x192xbf16>, vector<192x32xbf16>, vector<48x32xf32> -> vector<48x32xf32>
    %c0_3 = arith.constant 0 : index
    %c0_4 = arith.constant 0 : index
    %3 = vector.load %arg1[%c0_3, %c0_4] : memref<48x32xf32, #tpu.memory_space<vmem>>, vector<48x32xf32>
    %4 = arith.addf %2, %3 : vector<48x32xf32>
    %c0_5 = arith.constant 0 : index
    %c0_6 = arith.constant 0 : index
    %5 = vector.load %arg2[%c0_5, %c0_6] : memref<48x48xf32, #tpu.memory_space<vmem>>, vector<48x48xf32>
    %c0_7 = arith.constant 0 : index
    %c0_8 = arith.constant 0 : index
    %c0_9 = arith.constant 0 : index
    %6 = vector.load %arg4[%c0_7, %c0_8, %c0_9] : memref<2x1x32xf32, #tpu.memory_space<vmem>>, vector<1x1x32xf32>
    %7 = vector.shape_cast %6 : vector<1x1x32xf32> to vector<1x32xf32>
    %c0_10 = arith.constant 0 : index
    %c0_11 = arith.constant 0 : index
    %c0_12 = arith.constant 0 : index
    %8 = vector.load %arg5[%c0_10, %c0_11, %c0_12] : memref<2x1x32xf32, #tpu.memory_space<vmem>>, vector<1x1x32xf32>
    %9 = vector.shape_cast %8 : vector<1x1x32xf32> to vector<1x32xf32>
    %cst_13 = arith.constant dense<0.000000e+00> : vector<48xf32>
    %10 = vector.multi_reduction <add>, %4, %cst_13 [1] : vector<48x32xf32> to vector<48xf32>
    %11 = vector.shape_cast %10 : vector<48xf32> to vector<48x1xf32>
    %cst_14 = arith.constant 3.200000e+01 : f32
    %12 = vector.broadcast %cst_14 : f32 to vector<48x1xf32>
    %13 = arith.divf %11, %12 : vector<48x1xf32>
    %14 = vector.broadcast %13 : vector<48x1xf32> to vector<48x32xf32>
    %15 = arith.subf %4, %14 : vector<48x32xf32>
    %16 = vector.broadcast %13 : vector<48x1xf32> to vector<48x32xf32>
    %17 = arith.subf %4, %16 : vector<48x32xf32>
    %18 = arith.mulf %15, %17 : vector<48x32xf32>
    %cst_15 = arith.constant dense<0.000000e+00> : vector<48xf32>
    %19 = vector.multi_reduction <add>, %18, %cst_15 [1] : vector<48x32xf32> to vector<48xf32>
    %20 = vector.shape_cast %19 : vector<48xf32> to vector<48x1xf32>
    %cst_16 = arith.constant 3.200000e+01 : f32
    %21 = vector.broadcast %cst_16 : f32 to vector<48x1xf32>
    %22 = arith.divf %20, %21 : vector<48x1xf32>
    %23 = vector.broadcast %13 : vector<48x1xf32> to vector<48x32xf32>
    %24 = arith.subf %4, %23 : vector<48x32xf32>
    %cst_17 = arith.constant 9.99999996E-13 : f32
    %25 = vector.broadcast %cst_17 : f32 to vector<48x1xf32>
    %26 = arith.addf %22, %25 : vector<48x1xf32>
    %27 = math.rsqrt %26 : vector<48x1xf32>
    %28 = vector.broadcast %27 : vector<48x1xf32> to vector<48x32xf32>
    %29 = arith.mulf %24, %28 : vector<48x32xf32>
    %30 = vector.broadcast %7 : vector<1x32xf32> to vector<48x32xf32>
    %31 = arith.mulf %29, %30 : vector<48x32xf32>
    %32 = vector.broadcast %9 : vector<1x32xf32> to vector<48x32xf32>
    %33 = arith.addf %31, %32 : vector<48x32xf32>
    %c0_18 = arith.constant 0 : index
    %c0_19 = arith.constant 0 : index
    %c0_20 = arith.constant 0 : index
    %34 = vector.load %arg6[%c0_18, %c0_19, %c0_20] : memref<2x32x96xbf16, #tpu.memory_space<vmem>>, vector<1x32x96xbf16>
    %35 = vector.shape_cast %34 : vector<1x32x96xbf16> to vector<32x96xbf16>
    %36 = arith.truncf %33 : vector<48x32xf32> to vector<48x32xbf16>
    %cst_21 = arith.constant dense<0.000000e+00> : vector<48x96xf32>
    %37 = tpu.matmul %36, %35, %cst_21 {dimension_numbers = #tpu.dot_dimension_numbers<[1], [0], [0], [1], [0, 0, 1, 1], [], []>} : vector<48x32xbf16>, vector<32x96xbf16>, vector<48x96xf32> -> vector<48x96xf32>
    %c0_22 = arith.constant 0 : index
    %c0_23 = arith.constant 0 : index
    %c0_24 = arith.constant 0 : index
    %38 = vector.load %arg7[%c0_22, %c0_23, %c0_24] : memref<2x1x96xf32, #tpu.memory_space<vmem>>, vector<1x1x96xf32>
    %39 = vector.shape_cast %38 : vector<1x1x96xf32> to vector<1x96xf32>
    %40 = vector.broadcast %39 : vector<1x96xf32> to vector<48x96xf32>
    %41 = arith.addf %37, %40 : vector<48x96xf32>
    %42 = arith.truncf %41 : vector<48x96xf32> to vector<48x96xbf16>
    %43 = vector.extract_strided_slice %42 {offsets = [0, 0], sizes = [48, 8], strides = [1, 1]} : vector<48x96xbf16> to vector<48x8xbf16>
    %44 = vector.extract_strided_slice %42 {offsets = [0, 32], sizes = [48, 8], strides = [1, 1]} : vector<48x96xbf16> to vector<48x8xbf16>
    %45 = vector.extract_strided_slice %42 {offsets = [0, 64], sizes = [48, 8], strides = [1, 1]} : vector<48x96xbf16> to vector<48x8xbf16>
    %cst_25 = arith.constant dense<0.000000e+00> : vector<48x48xf32>
    %46 = tpu.matmul %43, %44, %cst_25 {dimension_numbers = #tpu.dot_dimension_numbers<[1], [1], [0], [0], [0, 0, 1, 0], [], []>} : vector<48x8xbf16>, vector<48x8xbf16>, vector<48x48xf32> -> vector<48x48xf32>
    %47 = arith.addf %46, %5 : vector<48x48xf32>
    %cst_26 = arith.constant dense<0xFF800000> : vector<48xf32>
    %48 = vector.multi_reduction <maximumf>, %47, %cst_26 [1] : vector<48x48xf32> to vector<48xf32>
    %49 = vector.shape_cast %48 : vector<48xf32> to vector<48x1xf32>
    %50 = vector.broadcast %49 : vector<48x1xf32> to vector<48x48xf32>
    %51 = arith.subf %47, %50 : vector<48x48xf32>
    %52 = math.exp %51 : vector<48x48xf32>
    %cst_27 = arith.constant dense<0.000000e+00> : vector<48xf32>
    %53 = vector.multi_reduction <add>, %52, %cst_27 [1] : vector<48x48xf32> to vector<48xf32>
    %54 = vector.shape_cast %53 : vector<48xf32> to vector<48x1xf32>
    %55 = tpu.reciprocal %54 {approx = true} : vector<48x1xf32> -> vector<48x1xf32>
    %56 = vector.broadcast %55 : vector<48x1xf32> to vector<48x48xf32>
    %57 = arith.mulf %52, %56 : vector<48x48xf32>
    %58 = arith.truncf %57 : vector<48x48xf32> to vector<48x48xbf16>
    %cst_28 = arith.constant dense<0.000000e+00> : vector<48x8xf32>
    %59 = tpu.matmul %58, %45, %cst_28 {dimension_numbers = #tpu.dot_dimension_numbers<[1], [0], [0], [1], [0, 0, 1, 1], [], []>} : vector<48x48xbf16>, vector<48x8xbf16>, vector<48x8xf32> -> vector<48x8xf32>
    %60 = arith.truncf %59 : vector<48x8xf32> to vector<48x8xbf16>
    %61 = vector.extract_strided_slice %42 {offsets = [0, 8], sizes = [48, 8], strides = [1, 1]} : vector<48x96xbf16> to vector<48x8xbf16>
    %62 = vector.extract_strided_slice %42 {offsets = [0, 40], sizes = [48, 8], strides = [1, 1]} : vector<48x96xbf16> to vector<48x8xbf16>
    %63 = vector.extract_strided_slice %42 {offsets = [0, 72], sizes = [48, 8], strides = [1, 1]} : vector<48x96xbf16> to vector<48x8xbf16>
    %cst_29 = arith.constant dense<0.000000e+00> : vector<48x48xf32>
    %64 = tpu.matmul %61, %62, %cst_29 {dimension_numbers = #tpu.dot_dimension_numbers<[1], [1], [0], [0], [0, 0, 1, 0], [], []>} : vector<48x8xbf16>, vector<48x8xbf16>, vector<48x48xf32> -> vector<48x48xf32>
    %65 = arith.addf %64, %5 : vector<48x48xf32>
    %cst_30 = arith.constant dense<0xFF800000> : vector<48xf32>
    %66 = vector.multi_reduction <maximumf>, %65, %cst_30 [1] : vector<48x48xf32> to vector<48xf32>
    %67 = vector.shape_cast %66 : vector<48xf32> to vector<48x1xf32>
    %68 = vector.broadcast %67 : vector<48x1xf32> to vector<48x48xf32>
    %69 = arith.subf %65, %68 : vector<48x48xf32>
    %70 = math.exp %69 : vector<48x48xf32>
    %cst_31 = arith.constant dense<0.000000e+00> : vector<48xf32>
    %71 = vector.multi_reduction <add>, %70, %cst_31 [1] : vector<48x48xf32> to vector<48xf32>
    %72 = vector.shape_cast %71 : vector<48xf32> to vector<48x1xf32>
    %73 = tpu.reciprocal %72 {approx = true} : vector<48x1xf32> -> vector<48x1xf32>
    %74 = vector.broadcast %73 : vector<48x1xf32> to vector<48x48xf32>
    %75 = arith.mulf %70, %74 : vector<48x48xf32>
    %76 = arith.truncf %75 : vector<48x48xf32> to vector<48x48xbf16>
    %cst_32 = arith.constant dense<0.000000e+00> : vector<48x8xf32>
    %77 = tpu.matmul %76, %63, %cst_32 {dimension_numbers = #tpu.dot_dimension_numbers<[1], [0], [0], [1], [0, 0, 1, 1], [], []>} : vector<48x48xbf16>, vector<48x8xbf16>, vector<48x8xf32> -> vector<48x8xf32>
    %78 = arith.truncf %77 : vector<48x8xf32> to vector<48x8xbf16>
    %79 = vector.extract_strided_slice %42 {offsets = [0, 16], sizes = [48, 8], strides = [1, 1]} : vector<48x96xbf16> to vector<48x8xbf16>
    %80 = vector.extract_strided_slice %42 {offsets = [0, 48], sizes = [48, 8], strides = [1, 1]} : vector<48x96xbf16> to vector<48x8xbf16>
    %81 = vector.extract_strided_slice %42 {offsets = [0, 80], sizes = [48, 8], strides = [1, 1]} : vector<48x96xbf16> to vector<48x8xbf16>
    %cst_33 = arith.constant dense<0.000000e+00> : vector<48x48xf32>
    %82 = tpu.matmul %79, %80, %cst_33 {dimension_numbers = #tpu.dot_dimension_numbers<[1], [1], [0], [0], [0, 0, 1, 0], [], []>} : vector<48x8xbf16>, vector<48x8xbf16>, vector<48x48xf32> -> vector<48x48xf32>
    %83 = arith.addf %82, %5 : vector<48x48xf32>
    %cst_34 = arith.constant dense<0xFF800000> : vector<48xf32>
    %84 = vector.multi_reduction <maximumf>, %83, %cst_34 [1] : vector<48x48xf32> to vector<48xf32>
    %85 = vector.shape_cast %84 : vector<48xf32> to vector<48x1xf32>
    %86 = vector.broadcast %85 : vector<48x1xf32> to vector<48x48xf32>
    %87 = arith.subf %83, %86 : vector<48x48xf32>
    %88 = math.exp %87 : vector<48x48xf32>
    %cst_35 = arith.constant dense<0.000000e+00> : vector<48xf32>
    %89 = vector.multi_reduction <add>, %88, %cst_35 [1] : vector<48x48xf32> to vector<48xf32>
    %90 = vector.shape_cast %89 : vector<48xf32> to vector<48x1xf32>
    %91 = tpu.reciprocal %90 {approx = true} : vector<48x1xf32> -> vector<48x1xf32>
    %92 = vector.broadcast %91 : vector<48x1xf32> to vector<48x48xf32>
    %93 = arith.mulf %88, %92 : vector<48x48xf32>
    %94 = arith.truncf %93 : vector<48x48xf32> to vector<48x48xbf16>
    %cst_36 = arith.constant dense<0.000000e+00> : vector<48x8xf32>
    %95 = tpu.matmul %94, %81, %cst_36 {dimension_numbers = #tpu.dot_dimension_numbers<[1], [0], [0], [1], [0, 0, 1, 1], [], []>} : vector<48x48xbf16>, vector<48x8xbf16>, vector<48x8xf32> -> vector<48x8xf32>
    %96 = arith.truncf %95 : vector<48x8xf32> to vector<48x8xbf16>
    %97 = vector.extract_strided_slice %42 {offsets = [0, 24], sizes = [48, 8], strides = [1, 1]} : vector<48x96xbf16> to vector<48x8xbf16>
    %98 = vector.extract_strided_slice %42 {offsets = [0, 56], sizes = [48, 8], strides = [1, 1]} : vector<48x96xbf16> to vector<48x8xbf16>
    %99 = vector.extract_strided_slice %42 {offsets = [0, 88], sizes = [48, 8], strides = [1, 1]} : vector<48x96xbf16> to vector<48x8xbf16>
    %cst_37 = arith.constant dense<0.000000e+00> : vector<48x48xf32>
    %100 = tpu.matmul %97, %98, %cst_37 {dimension_numbers = #tpu.dot_dimension_numbers<[1], [1], [0], [0], [0, 0, 1, 0], [], []>} : vector<48x8xbf16>, vector<48x8xbf16>, vector<48x48xf32> -> vector<48x48xf32>
    %101 = arith.addf %100, %5 : vector<48x48xf32>
    %cst_38 = arith.constant dense<0xFF800000> : vector<48xf32>
    %102 = vector.multi_reduction <maximumf>, %101, %cst_38 [1] : vector<48x48xf32> to vector<48xf32>
    %103 = vector.shape_cast %102 : vector<48xf32> to vector<48x1xf32>
    %104 = vector.broadcast %103 : vector<48x1xf32> to vector<48x48xf32>
    %105 = arith.subf %101, %104 : vector<48x48xf32>
    %106 = math.exp %105 : vector<48x48xf32>
    %cst_39 = arith.constant dense<0.000000e+00> : vector<48xf32>
    %107 = vector.multi_reduction <add>, %106, %cst_39 [1] : vector<48x48xf32> to vector<48xf32>
    %108 = vector.shape_cast %107 : vector<48xf32> to vector<48x1xf32>
    %109 = tpu.reciprocal %108 {approx = true} : vector<48x1xf32> -> vector<48x1xf32>
    %110 = vector.broadcast %109 : vector<48x1xf32> to vector<48x48xf32>
    %111 = arith.mulf %106, %110 : vector<48x48xf32>
    %112 = arith.truncf %111 : vector<48x48xf32> to vector<48x48xbf16>
    %cst_40 = arith.constant dense<0.000000e+00> : vector<48x8xf32>
    %113 = tpu.matmul %112, %99, %cst_40 {dimension_numbers = #tpu.dot_dimension_numbers<[1], [0], [0], [1], [0, 0, 1, 1], [], []>} : vector<48x48xbf16>, vector<48x8xbf16>, vector<48x8xf32> -> vector<48x8xf32>
    %114 = arith.truncf %113 : vector<48x8xf32> to vector<48x8xbf16>
    %115 = tpu.concatenate %60, %78, %96, %114 in 1 : vector<48x8xbf16>, vector<48x8xbf16>, vector<48x8xbf16>, vector<48x8xbf16> -> vector<48x32xbf16>
    %c0_41 = arith.constant 0 : index
    %c0_42 = arith.constant 0 : index
    %c0_43 = arith.constant 0 : index
    %116 = vector.load %arg8[%c0_41, %c0_42, %c0_43] : memref<2x32x32xbf16, #tpu.memory_space<vmem>>, vector<1x32x32xbf16>
    %117 = vector.shape_cast %116 : vector<1x32x32xbf16> to vector<32x32xbf16>
    %cst_44 = arith.constant dense<0.000000e+00> : vector<48x32xf32>
    %118 = tpu.matmul %115, %117, %cst_44 {dimension_numbers = #tpu.dot_dimension_numbers<[1], [0], [0], [1], [0, 0, 1, 1], [], []>} : vector<48x32xbf16>, vector<32x32xbf16>, vector<48x32xf32> -> vector<48x32xf32>
    %119 = arith.addf %4, %118 : vector<48x32xf32>
    %c0_45 = arith.constant 0 : index
    %c0_46 = arith.constant 0 : index
    %c0_47 = arith.constant 0 : index
    %120 = vector.load %arg9[%c0_45, %c0_46, %c0_47] : memref<2x1x32xf32, #tpu.memory_space<vmem>>, vector<1x1x32xf32>
    %121 = vector.shape_cast %120 : vector<1x1x32xf32> to vector<1x32xf32>
    %122 = vector.broadcast %121 : vector<1x32xf32> to vector<48x32xf32>
    %123 = arith.addf %119, %122 : vector<48x32xf32>
    %c0_48 = arith.constant 0 : index
    %c0_49 = arith.constant 0 : index
    %c0_50 = arith.constant 0 : index
    %124 = vector.load %arg10[%c0_48, %c0_49, %c0_50] : memref<2x1x32xf32, #tpu.memory_space<vmem>>, vector<1x1x32xf32>
    %125 = vector.shape_cast %124 : vector<1x1x32xf32> to vector<1x32xf32>
    %c0_51 = arith.constant 0 : index
    %c0_52 = arith.constant 0 : index
    %c0_53 = arith.constant 0 : index
    %126 = vector.load %arg11[%c0_51, %c0_52, %c0_53] : memref<2x1x32xf32, #tpu.memory_space<vmem>>, vector<1x1x32xf32>
    %127 = vector.shape_cast %126 : vector<1x1x32xf32> to vector<1x32xf32>
    %cst_54 = arith.constant dense<0.000000e+00> : vector<48xf32>
    %128 = vector.multi_reduction <add>, %123, %cst_54 [1] : vector<48x32xf32> to vector<48xf32>
    %129 = vector.shape_cast %128 : vector<48xf32> to vector<48x1xf32>
    %cst_55 = arith.constant 3.200000e+01 : f32
    %130 = vector.broadcast %cst_55 : f32 to vector<48x1xf32>
    %131 = arith.divf %129, %130 : vector<48x1xf32>
    %132 = vector.broadcast %131 : vector<48x1xf32> to vector<48x32xf32>
    %133 = arith.subf %123, %132 : vector<48x32xf32>
    %134 = vector.broadcast %131 : vector<48x1xf32> to vector<48x32xf32>
    %135 = arith.subf %123, %134 : vector<48x32xf32>
    %136 = arith.mulf %133, %135 : vector<48x32xf32>
    %cst_56 = arith.constant dense<0.000000e+00> : vector<48xf32>
    %137 = vector.multi_reduction <add>, %136, %cst_56 [1] : vector<48x32xf32> to vector<48xf32>
    %138 = vector.shape_cast %137 : vector<48xf32> to vector<48x1xf32>
    %cst_57 = arith.constant 3.200000e+01 : f32
    %139 = vector.broadcast %cst_57 : f32 to vector<48x1xf32>
    %140 = arith.divf %138, %139 : vector<48x1xf32>
    %141 = vector.broadcast %131 : vector<48x1xf32> to vector<48x32xf32>
    %142 = arith.subf %123, %141 : vector<48x32xf32>
    %cst_58 = arith.constant 9.99999996E-13 : f32
    %143 = vector.broadcast %cst_58 : f32 to vector<48x1xf32>
    %144 = arith.addf %140, %143 : vector<48x1xf32>
    %145 = math.rsqrt %144 : vector<48x1xf32>
    %146 = vector.broadcast %145 : vector<48x1xf32> to vector<48x32xf32>
    %147 = arith.mulf %142, %146 : vector<48x32xf32>
    %148 = vector.broadcast %125 : vector<1x32xf32> to vector<48x32xf32>
    %149 = arith.mulf %147, %148 : vector<48x32xf32>
    %150 = vector.broadcast %127 : vector<1x32xf32> to vector<48x32xf32>
    %151 = arith.addf %149, %150 : vector<48x32xf32>
    %c0_59 = arith.constant 0 : index
    %c0_60 = arith.constant 0 : index
    %c0_61 = arith.constant 0 : index
    %152 = vector.load %arg12[%c0_59, %c0_60, %c0_61] : memref<2x32x128xbf16, #tpu.memory_space<vmem>>, vector<1x32x128xbf16>
    %153 = vector.shape_cast %152 : vector<1x32x128xbf16> to vector<32x128xbf16>
    %154 = arith.truncf %151 : vector<48x32xf32> to vector<48x32xbf16>
    %cst_62 = arith.constant dense<0.000000e+00> : vector<48x128xf32>
    %155 = tpu.matmul %154, %153, %cst_62 {dimension_numbers = #tpu.dot_dimension_numbers<[1], [0], [0], [1], [0, 0, 1, 1], [], []>} : vector<48x32xbf16>, vector<32x128xbf16>, vector<48x128xf32> -> vector<48x128xf32>
    %c0_63 = arith.constant 0 : index
    %c0_64 = arith.constant 0 : index
    %c0_65 = arith.constant 0 : index
    %156 = vector.load %arg13[%c0_63, %c0_64, %c0_65] : memref<2x1x128xf32, #tpu.memory_space<vmem>>, vector<1x1x128xf32>
    %157 = vector.shape_cast %156 : vector<1x1x128xf32> to vector<1x128xf32>
    %158 = vector.broadcast %157 : vector<1x128xf32> to vector<48x128xf32>
    %159 = arith.addf %155, %158 : vector<48x128xf32>
    %160 = arith.mulf %159, %159 : vector<48x128xf32>
    %161 = arith.mulf %159, %160 : vector<48x128xf32>
    %cst_66 = arith.constant 4.471500e-02 : f32
    %162 = vector.broadcast %cst_66 : f32 to vector<48x128xf32>
    %163 = arith.mulf %162, %161 : vector<48x128xf32>
    %164 = arith.addf %159, %163 : vector<48x128xf32>
    %cst_67 = arith.constant 0.797884583 : f32
    %165 = vector.broadcast %cst_67 : f32 to vector<48x128xf32>
    %166 = arith.mulf %165, %164 : vector<48x128xf32>
    %167 = math.tanh %166 : vector<48x128xf32>
    %cst_68 = arith.constant 1.000000e+00 : f32
    %168 = vector.broadcast %cst_68 : f32 to vector<48x128xf32>
    %169 = arith.addf %168, %167 : vector<48x128xf32>
    %cst_69 = arith.constant 5.000000e-01 : f32
    %170 = vector.broadcast %cst_69 : f32 to vector<48x128xf32>
    %171 = arith.mulf %170, %169 : vector<48x128xf32>
    %172 = arith.mulf %159, %171 : vector<48x128xf32>
    %c0_70 = arith.constant 0 : index
    %c0_71 = arith.constant 0 : index
    %c0_72 = arith.constant 0 : index
    %173 = vector.load %arg14[%c0_70, %c0_71, %c0_72] : memref<2x128x32xbf16, #tpu.memory_space<vmem>>, vector<1x128x32xbf16>
    %174 = vector.shape_cast %173 : vector<1x128x32xbf16> to vector<128x32xbf16>
    %175 = arith.truncf %172 : vector<48x128xf32> to vector<48x128xbf16>
    %cst_73 = arith.constant dense<0.000000e+00> : vector<48x32xf32>
    %176 = tpu.matmul %175, %174, %cst_73 {dimension_numbers = #tpu.dot_dimension_numbers<[1], [0], [0], [1], [0, 0, 1, 1], [], []>} : vector<48x128xbf16>, vector<128x32xbf16>, vector<48x32xf32> -> vector<48x32xf32>
    %177 = arith.addf %123, %176 : vector<48x32xf32>
    %c0_74 = arith.constant 0 : index
    %c0_75 = arith.constant 0 : index
    %c0_76 = arith.constant 0 : index
    %178 = vector.load %arg15[%c0_74, %c0_75, %c0_76] : memref<2x1x32xf32, #tpu.memory_space<vmem>>, vector<1x1x32xf32>
    %179 = vector.shape_cast %178 : vector<1x1x32xf32> to vector<1x32xf32>
    %180 = vector.broadcast %179 : vector<1x32xf32> to vector<48x32xf32>
    %181 = arith.addf %177, %180 : vector<48x32xf32>
    %c1 = arith.constant 1 : index
    %c0_77 = arith.constant 0 : index
    %c0_78 = arith.constant 0 : index
    %182 = vector.load %arg4[%c1, %c0_77, %c0_78] : memref<2x1x32xf32, #tpu.memory_space<vmem>>, vector<1x1x32xf32>
    %183 = vector.shape_cast %182 : vector<1x1x32xf32> to vector<1x32xf32>
    %c1_79 = arith.constant 1 : index
    %c0_80 = arith.constant 0 : index
    %c0_81 = arith.constant 0 : index
    %184 = vector.load %arg5[%c1_79, %c0_80, %c0_81] : memref<2x1x32xf32, #tpu.memory_space<vmem>>, vector<1x1x32xf32>
    %185 = vector.shape_cast %184 : vector<1x1x32xf32> to vector<1x32xf32>
    %cst_82 = arith.constant dense<0.000000e+00> : vector<48xf32>
    %186 = vector.multi_reduction <add>, %181, %cst_82 [1] : vector<48x32xf32> to vector<48xf32>
    %187 = vector.shape_cast %186 : vector<48xf32> to vector<48x1xf32>
    %cst_83 = arith.constant 3.200000e+01 : f32
    %188 = vector.broadcast %cst_83 : f32 to vector<48x1xf32>
    %189 = arith.divf %187, %188 : vector<48x1xf32>
    %190 = vector.broadcast %189 : vector<48x1xf32> to vector<48x32xf32>
    %191 = arith.subf %181, %190 : vector<48x32xf32>
    %192 = vector.broadcast %189 : vector<48x1xf32> to vector<48x32xf32>
    %193 = arith.subf %181, %192 : vector<48x32xf32>
    %194 = arith.mulf %191, %193 : vector<48x32xf32>
    %cst_84 = arith.constant dense<0.000000e+00> : vector<48xf32>
    %195 = vector.multi_reduction <add>, %194, %cst_84 [1] : vector<48x32xf32> to vector<48xf32>
    %196 = vector.shape_cast %195 : vector<48xf32> to vector<48x1xf32>
    %cst_85 = arith.constant 3.200000e+01 : f32
    %197 = vector.broadcast %cst_85 : f32 to vector<48x1xf32>
    %198 = arith.divf %196, %197 : vector<48x1xf32>
    %199 = vector.broadcast %189 : vector<48x1xf32> to vector<48x32xf32>
    %200 = arith.subf %181, %199 : vector<48x32xf32>
    %cst_86 = arith.constant 9.99999996E-13 : f32
    %201 = vector.broadcast %cst_86 : f32 to vector<48x1xf32>
    %202 = arith.addf %198, %201 : vector<48x1xf32>
    %203 = math.rsqrt %202 : vector<48x1xf32>
    %204 = vector.broadcast %203 : vector<48x1xf32> to vector<48x32xf32>
    %205 = arith.mulf %200, %204 : vector<48x32xf32>
    %206 = vector.broadcast %183 : vector<1x32xf32> to vector<48x32xf32>
    %207 = arith.mulf %205, %206 : vector<48x32xf32>
    %208 = vector.broadcast %185 : vector<1x32xf32> to vector<48x32xf32>
    %209 = arith.addf %207, %208 : vector<48x32xf32>
    %c1_87 = arith.constant 1 : index
    %c0_88 = arith.constant 0 : index
    %c0_89 = arith.constant 0 : index
    %210 = vector.load %arg6[%c1_87, %c0_88, %c0_89] : memref<2x32x96xbf16, #tpu.memory_space<vmem>>, vector<1x32x96xbf16>
    %211 = vector.shape_cast %210 : vector<1x32x96xbf16> to vector<32x96xbf16>
    %212 = arith.truncf %209 : vector<48x32xf32> to vector<48x32xbf16>
    %cst_90 = arith.constant dense<0.000000e+00> : vector<48x96xf32>
    %213 = tpu.matmul %212, %211, %cst_90 {dimension_numbers = #tpu.dot_dimension_numbers<[1], [0], [0], [1], [0, 0, 1, 1], [], []>} : vector<48x32xbf16>, vector<32x96xbf16>, vector<48x96xf32> -> vector<48x96xf32>
    %c1_91 = arith.constant 1 : index
    %c0_92 = arith.constant 0 : index
    %c0_93 = arith.constant 0 : index
    %214 = vector.load %arg7[%c1_91, %c0_92, %c0_93] : memref<2x1x96xf32, #tpu.memory_space<vmem>>, vector<1x1x96xf32>
    %215 = vector.shape_cast %214 : vector<1x1x96xf32> to vector<1x96xf32>
    %216 = vector.broadcast %215 : vector<1x96xf32> to vector<48x96xf32>
    %217 = arith.addf %213, %216 : vector<48x96xf32>
    %218 = arith.truncf %217 : vector<48x96xf32> to vector<48x96xbf16>
    %219 = vector.extract_strided_slice %218 {offsets = [0, 0], sizes = [48, 8], strides = [1, 1]} : vector<48x96xbf16> to vector<48x8xbf16>
    %220 = vector.extract_strided_slice %218 {offsets = [0, 32], sizes = [48, 8], strides = [1, 1]} : vector<48x96xbf16> to vector<48x8xbf16>
    %221 = vector.extract_strided_slice %218 {offsets = [0, 64], sizes = [48, 8], strides = [1, 1]} : vector<48x96xbf16> to vector<48x8xbf16>
    %cst_94 = arith.constant dense<0.000000e+00> : vector<48x48xf32>
    %222 = tpu.matmul %219, %220, %cst_94 {dimension_numbers = #tpu.dot_dimension_numbers<[1], [1], [0], [0], [0, 0, 1, 0], [], []>} : vector<48x8xbf16>, vector<48x8xbf16>, vector<48x48xf32> -> vector<48x48xf32>
    %223 = arith.addf %222, %5 : vector<48x48xf32>
    %cst_95 = arith.constant dense<0xFF800000> : vector<48xf32>
    %224 = vector.multi_reduction <maximumf>, %223, %cst_95 [1] : vector<48x48xf32> to vector<48xf32>
    %225 = vector.shape_cast %224 : vector<48xf32> to vector<48x1xf32>
    %226 = vector.broadcast %225 : vector<48x1xf32> to vector<48x48xf32>
    %227 = arith.subf %223, %226 : vector<48x48xf32>
    %228 = math.exp %227 : vector<48x48xf32>
    %cst_96 = arith.constant dense<0.000000e+00> : vector<48xf32>
    %229 = vector.multi_reduction <add>, %228, %cst_96 [1] : vector<48x48xf32> to vector<48xf32>
    %230 = vector.shape_cast %229 : vector<48xf32> to vector<48x1xf32>
    %231 = tpu.reciprocal %230 {approx = true} : vector<48x1xf32> -> vector<48x1xf32>
    %232 = vector.broadcast %231 : vector<48x1xf32> to vector<48x48xf32>
    %233 = arith.mulf %228, %232 : vector<48x48xf32>
    %234 = arith.truncf %233 : vector<48x48xf32> to vector<48x48xbf16>
    %cst_97 = arith.constant dense<0.000000e+00> : vector<48x8xf32>
    %235 = tpu.matmul %234, %221, %cst_97 {dimension_numbers = #tpu.dot_dimension_numbers<[1], [0], [0], [1], [0, 0, 1, 1], [], []>} : vector<48x48xbf16>, vector<48x8xbf16>, vector<48x8xf32> -> vector<48x8xf32>
    %236 = arith.truncf %235 : vector<48x8xf32> to vector<48x8xbf16>
    %237 = vector.extract_strided_slice %218 {offsets = [0, 8], sizes = [48, 8], strides = [1, 1]} : vector<48x96xbf16> to vector<48x8xbf16>
    %238 = vector.extract_strided_slice %218 {offsets = [0, 40], sizes = [48, 8], strides = [1, 1]} : vector<48x96xbf16> to vector<48x8xbf16>
    %239 = vector.extract_strided_slice %218 {offsets = [0, 72], sizes = [48, 8], strides = [1, 1]} : vector<48x96xbf16> to vector<48x8xbf16>
    %cst_98 = arith.constant dense<0.000000e+00> : vector<48x48xf32>
    %240 = tpu.matmul %237, %238, %cst_98 {dimension_numbers = #tpu.dot_dimension_numbers<[1], [1], [0], [0], [0, 0, 1, 0], [], []>} : vector<48x8xbf16>, vector<48x8xbf16>, vector<48x48xf32> -> vector<48x48xf32>
    %241 = arith.addf %240, %5 : vector<48x48xf32>
    %cst_99 = arith.constant dense<0xFF800000> : vector<48xf32>
    %242 = vector.multi_reduction <maximumf>, %241, %cst_99 [1] : vector<48x48xf32> to vector<48xf32>
    %243 = vector.shape_cast %242 : vector<48xf32> to vector<48x1xf32>
    %244 = vector.broadcast %243 : vector<48x1xf32> to vector<48x48xf32>
    %245 = arith.subf %241, %244 : vector<48x48xf32>
    %246 = math.exp %245 : vector<48x48xf32>
    %cst_100 = arith.constant dense<0.000000e+00> : vector<48xf32>
    %247 = vector.multi_reduction <add>, %246, %cst_100 [1] : vector<48x48xf32> to vector<48xf32>
    %248 = vector.shape_cast %247 : vector<48xf32> to vector<48x1xf32>
    %249 = tpu.reciprocal %248 {approx = true} : vector<48x1xf32> -> vector<48x1xf32>
    %250 = vector.broadcast %249 : vector<48x1xf32> to vector<48x48xf32>
    %251 = arith.mulf %246, %250 : vector<48x48xf32>
    %252 = arith.truncf %251 : vector<48x48xf32> to vector<48x48xbf16>
    %cst_101 = arith.constant dense<0.000000e+00> : vector<48x8xf32>
    %253 = tpu.matmul %252, %239, %cst_101 {dimension_numbers = #tpu.dot_dimension_numbers<[1], [0], [0], [1], [0, 0, 1, 1], [], []>} : vector<48x48xbf16>, vector<48x8xbf16>, vector<48x8xf32> -> vector<48x8xf32>
    %254 = arith.truncf %253 : vector<48x8xf32> to vector<48x8xbf16>
    %255 = vector.extract_strided_slice %218 {offsets = [0, 16], sizes = [48, 8], strides = [1, 1]} : vector<48x96xbf16> to vector<48x8xbf16>
    %256 = vector.extract_strided_slice %218 {offsets = [0, 48], sizes = [48, 8], strides = [1, 1]} : vector<48x96xbf16> to vector<48x8xbf16>
    %257 = vector.extract_strided_slice %218 {offsets = [0, 80], sizes = [48, 8], strides = [1, 1]} : vector<48x96xbf16> to vector<48x8xbf16>
    %cst_102 = arith.constant dense<0.000000e+00> : vector<48x48xf32>
    %258 = tpu.matmul %255, %256, %cst_102 {dimension_numbers = #tpu.dot_dimension_numbers<[1], [1], [0], [0], [0, 0, 1, 0], [], []>} : vector<48x8xbf16>, vector<48x8xbf16>, vector<48x48xf32> -> vector<48x48xf32>
    %259 = arith.addf %258, %5 : vector<48x48xf32>
    %cst_103 = arith.constant dense<0xFF800000> : vector<48xf32>
    %260 = vector.multi_reduction <maximumf>, %259, %cst_103 [1] : vector<48x48xf32> to vector<48xf32>
    %261 = vector.shape_cast %260 : vector<48xf32> to vector<48x1xf32>
    %262 = vector.broadcast %261 : vector<48x1xf32> to vector<48x48xf32>
    %263 = arith.subf %259, %262 : vector<48x48xf32>
    %264 = math.exp %263 : vector<48x48xf32>
    %cst_104 = arith.constant dense<0.000000e+00> : vector<48xf32>
    %265 = vector.multi_reduction <add>, %264, %cst_104 [1] : vector<48x48xf32> to vector<48xf32>
    %266 = vector.shape_cast %265 : vector<48xf32> to vector<48x1xf32>
    %267 = tpu.reciprocal %266 {approx = true} : vector<48x1xf32> -> vector<48x1xf32>
    %268 = vector.broadcast %267 : vector<48x1xf32> to vector<48x48xf32>
    %269 = arith.mulf %264, %268 : vector<48x48xf32>
    %270 = arith.truncf %269 : vector<48x48xf32> to vector<48x48xbf16>
    %cst_105 = arith.constant dense<0.000000e+00> : vector<48x8xf32>
    %271 = tpu.matmul %270, %257, %cst_105 {dimension_numbers = #tpu.dot_dimension_numbers<[1], [0], [0], [1], [0, 0, 1, 1], [], []>} : vector<48x48xbf16>, vector<48x8xbf16>, vector<48x8xf32> -> vector<48x8xf32>
    %272 = arith.truncf %271 : vector<48x8xf32> to vector<48x8xbf16>
    %273 = vector.extract_strided_slice %218 {offsets = [0, 24], sizes = [48, 8], strides = [1, 1]} : vector<48x96xbf16> to vector<48x8xbf16>
    %274 = vector.extract_strided_slice %218 {offsets = [0, 56], sizes = [48, 8], strides = [1, 1]} : vector<48x96xbf16> to vector<48x8xbf16>
    %275 = vector.extract_strided_slice %218 {offsets = [0, 88], sizes = [48, 8], strides = [1, 1]} : vector<48x96xbf16> to vector<48x8xbf16>
    %cst_106 = arith.constant dense<0.000000e+00> : vector<48x48xf32>
    %276 = tpu.matmul %273, %274, %cst_106 {dimension_numbers = #tpu.dot_dimension_numbers<[1], [1], [0], [0], [0, 0, 1, 0], [], []>} : vector<48x8xbf16>, vector<48x8xbf16>, vector<48x48xf32> -> vector<48x48xf32>
    %277 = arith.addf %276, %5 : vector<48x48xf32>
    %cst_107 = arith.constant dense<0xFF800000> : vector<48xf32>
    %278 = vector.multi_reduction <maximumf>, %277, %cst_107 [1] : vector<48x48xf32> to vector<48xf32>
    %279 = vector.shape_cast %278 : vector<48xf32> to vector<48x1xf32>
    %280 = vector.broadcast %279 : vector<48x1xf32> to vector<48x48xf32>
    %281 = arith.subf %277, %280 : vector<48x48xf32>
    %282 = math.exp %281 : vector<48x48xf32>
    %cst_108 = arith.constant dense<0.000000e+00> : vector<48xf32>
    %283 = vector.multi_reduction <add>, %282, %cst_108 [1] : vector<48x48xf32> to vector<48xf32>
    %284 = vector.shape_cast %283 : vector<48xf32> to vector<48x1xf32>
    %285 = tpu.reciprocal %284 {approx = true} : vector<48x1xf32> -> vector<48x1xf32>
    %286 = vector.broadcast %285 : vector<48x1xf32> to vector<48x48xf32>
    %287 = arith.mulf %282, %286 : vector<48x48xf32>
    %288 = arith.truncf %287 : vector<48x48xf32> to vector<48x48xbf16>
    %cst_109 = arith.constant dense<0.000000e+00> : vector<48x8xf32>
    %289 = tpu.matmul %288, %275, %cst_109 {dimension_numbers = #tpu.dot_dimension_numbers<[1], [0], [0], [1], [0, 0, 1, 1], [], []>} : vector<48x48xbf16>, vector<48x8xbf16>, vector<48x8xf32> -> vector<48x8xf32>
    %290 = arith.truncf %289 : vector<48x8xf32> to vector<48x8xbf16>
    %291 = tpu.concatenate %236, %254, %272, %290 in 1 : vector<48x8xbf16>, vector<48x8xbf16>, vector<48x8xbf16>, vector<48x8xbf16> -> vector<48x32xbf16>
    %c1_110 = arith.constant 1 : index
    %c0_111 = arith.constant 0 : index
    %c0_112 = arith.constant 0 : index
    %292 = vector.load %arg8[%c1_110, %c0_111, %c0_112] : memref<2x32x32xbf16, #tpu.memory_space<vmem>>, vector<1x32x32xbf16>
    %293 = vector.shape_cast %292 : vector<1x32x32xbf16> to vector<32x32xbf16>
    %cst_113 = arith.constant dense<0.000000e+00> : vector<48x32xf32>
    %294 = tpu.matmul %291, %293, %cst_113 {dimension_numbers = #tpu.dot_dimension_numbers<[1], [0], [0], [1], [0, 0, 1, 1], [], []>} : vector<48x32xbf16>, vector<32x32xbf16>, vector<48x32xf32> -> vector<48x32xf32>
    %295 = arith.addf %181, %294 : vector<48x32xf32>
    %c1_114 = arith.constant 1 : index
    %c0_115 = arith.constant 0 : index
    %c0_116 = arith.constant 0 : index
    %296 = vector.load %arg9[%c1_114, %c0_115, %c0_116] : memref<2x1x32xf32, #tpu.memory_space<vmem>>, vector<1x1x32xf32>
    %297 = vector.shape_cast %296 : vector<1x1x32xf32> to vector<1x32xf32>
    %298 = vector.broadcast %297 : vector<1x32xf32> to vector<48x32xf32>
    %299 = arith.addf %295, %298 : vector<48x32xf32>
    %c1_117 = arith.constant 1 : index
    %c0_118 = arith.constant 0 : index
    %c0_119 = arith.constant 0 : index
    %300 = vector.load %arg10[%c1_117, %c0_118, %c0_119] : memref<2x1x32xf32, #tpu.memory_space<vmem>>, vector<1x1x32xf32>
    %301 = vector.shape_cast %300 : vector<1x1x32xf32> to vector<1x32xf32>
    %c1_120 = arith.constant 1 : index
    %c0_121 = arith.constant 0 : index
    %c0_122 = arith.constant 0 : index
    %302 = vector.load %arg11[%c1_120, %c0_121, %c0_122] : memref<2x1x32xf32, #tpu.memory_space<vmem>>, vector<1x1x32xf32>
    %303 = vector.shape_cast %302 : vector<1x1x32xf32> to vector<1x32xf32>
    %cst_123 = arith.constant dense<0.000000e+00> : vector<48xf32>
    %304 = vector.multi_reduction <add>, %299, %cst_123 [1] : vector<48x32xf32> to vector<48xf32>
    %305 = vector.shape_cast %304 : vector<48xf32> to vector<48x1xf32>
    %cst_124 = arith.constant 3.200000e+01 : f32
    %306 = vector.broadcast %cst_124 : f32 to vector<48x1xf32>
    %307 = arith.divf %305, %306 : vector<48x1xf32>
    %308 = vector.broadcast %307 : vector<48x1xf32> to vector<48x32xf32>
    %309 = arith.subf %299, %308 : vector<48x32xf32>
    %310 = vector.broadcast %307 : vector<48x1xf32> to vector<48x32xf32>
    %311 = arith.subf %299, %310 : vector<48x32xf32>
    %312 = arith.mulf %309, %311 : vector<48x32xf32>
    %cst_125 = arith.constant dense<0.000000e+00> : vector<48xf32>
    %313 = vector.multi_reduction <add>, %312, %cst_125 [1] : vector<48x32xf32> to vector<48xf32>
    %314 = vector.shape_cast %313 : vector<48xf32> to vector<48x1xf32>
    %cst_126 = arith.constant 3.200000e+01 : f32
    %315 = vector.broadcast %cst_126 : f32 to vector<48x1xf32>
    %316 = arith.divf %314, %315 : vector<48x1xf32>
    %317 = vector.broadcast %307 : vector<48x1xf32> to vector<48x32xf32>
    %318 = arith.subf %299, %317 : vector<48x32xf32>
    %cst_127 = arith.constant 9.99999996E-13 : f32
    %319 = vector.broadcast %cst_127 : f32 to vector<48x1xf32>
    %320 = arith.addf %316, %319 : vector<48x1xf32>
    %321 = math.rsqrt %320 : vector<48x1xf32>
    %322 = vector.broadcast %321 : vector<48x1xf32> to vector<48x32xf32>
    %323 = arith.mulf %318, %322 : vector<48x32xf32>
    %324 = vector.broadcast %301 : vector<1x32xf32> to vector<48x32xf32>
    %325 = arith.mulf %323, %324 : vector<48x32xf32>
    %326 = vector.broadcast %303 : vector<1x32xf32> to vector<48x32xf32>
    %327 = arith.addf %325, %326 : vector<48x32xf32>
    %c1_128 = arith.constant 1 : index
    %c0_129 = arith.constant 0 : index
    %c0_130 = arith.constant 0 : index
    %328 = vector.load %arg12[%c1_128, %c0_129, %c0_130] : memref<2x32x128xbf16, #tpu.memory_space<vmem>>, vector<1x32x128xbf16>
    %329 = vector.shape_cast %328 : vector<1x32x128xbf16> to vector<32x128xbf16>
    %330 = arith.truncf %327 : vector<48x32xf32> to vector<48x32xbf16>
    %cst_131 = arith.constant dense<0.000000e+00> : vector<48x128xf32>
    %331 = tpu.matmul %330, %329, %cst_131 {dimension_numbers = #tpu.dot_dimension_numbers<[1], [0], [0], [1], [0, 0, 1, 1], [], []>} : vector<48x32xbf16>, vector<32x128xbf16>, vector<48x128xf32> -> vector<48x128xf32>
    %c1_132 = arith.constant 1 : index
    %c0_133 = arith.constant 0 : index
    %c0_134 = arith.constant 0 : index
    %332 = vector.load %arg13[%c1_132, %c0_133, %c0_134] : memref<2x1x128xf32, #tpu.memory_space<vmem>>, vector<1x1x128xf32>
    %333 = vector.shape_cast %332 : vector<1x1x128xf32> to vector<1x128xf32>
    %334 = vector.broadcast %333 : vector<1x128xf32> to vector<48x128xf32>
    %335 = arith.addf %331, %334 : vector<48x128xf32>
    %336 = arith.mulf %335, %335 : vector<48x128xf32>
    %337 = arith.mulf %335, %336 : vector<48x128xf32>
    %cst_135 = arith.constant 4.471500e-02 : f32
    %338 = vector.broadcast %cst_135 : f32 to vector<48x128xf32>
    %339 = arith.mulf %338, %337 : vector<48x128xf32>
    %340 = arith.addf %335, %339 : vector<48x128xf32>
    %cst_136 = arith.constant 0.797884583 : f32
    %341 = vector.broadcast %cst_136 : f32 to vector<48x128xf32>
    %342 = arith.mulf %341, %340 : vector<48x128xf32>
    %343 = math.tanh %342 : vector<48x128xf32>
    %cst_137 = arith.constant 1.000000e+00 : f32
    %344 = vector.broadcast %cst_137 : f32 to vector<48x128xf32>
    %345 = arith.addf %344, %343 : vector<48x128xf32>
    %cst_138 = arith.constant 5.000000e-01 : f32
    %346 = vector.broadcast %cst_138 : f32 to vector<48x128xf32>
    %347 = arith.mulf %346, %345 : vector<48x128xf32>
    %348 = arith.mulf %335, %347 : vector<48x128xf32>
    %c1_139 = arith.constant 1 : index
    %c0_140 = arith.constant 0 : index
    %c0_141 = arith.constant 0 : index
    %349 = vector.load %arg14[%c1_139, %c0_140, %c0_141] : memref<2x128x32xbf16, #tpu.memory_space<vmem>>, vector<1x128x32xbf16>
    %350 = vector.shape_cast %349 : vector<1x128x32xbf16> to vector<128x32xbf16>
    %351 = arith.truncf %348 : vector<48x128xf32> to vector<48x128xbf16>
    %cst_142 = arith.constant dense<0.000000e+00> : vector<48x32xf32>
    %352 = tpu.matmul %351, %350, %cst_142 {dimension_numbers = #tpu.dot_dimension_numbers<[1], [0], [0], [1], [0, 0, 1, 1], [], []>} : vector<48x128xbf16>, vector<128x32xbf16>, vector<48x32xf32> -> vector<48x32xf32>
    %353 = arith.addf %299, %352 : vector<48x32xf32>
    %c1_143 = arith.constant 1 : index
    %c0_144 = arith.constant 0 : index
    %c0_145 = arith.constant 0 : index
    %354 = vector.load %arg15[%c1_143, %c0_144, %c0_145] : memref<2x1x32xf32, #tpu.memory_space<vmem>>, vector<1x1x32xf32>
    %355 = vector.shape_cast %354 : vector<1x1x32xf32> to vector<1x32xf32>
    %356 = vector.broadcast %355 : vector<1x32xf32> to vector<48x32xf32>
    %357 = arith.addf %353, %356 : vector<48x32xf32>
    %358 = vector.extract_strided_slice %357 {offsets = [0, 0], sizes = [1, 32], strides = [1, 1]} : vector<48x32xf32> to vector<1x32xf32>
    %359 = vector.extract_strided_slice %357 {offsets = [24, 0], sizes = [1, 32], strides = [1, 1]} : vector<48x32xf32> to vector<1x32xf32>
    %360 = tpu.concatenate %358, %359 in 0 : vector<1x32xf32>, vector<1x32xf32> -> vector<2x32xf32>
    %c0_146 = arith.constant 0 : index
    %c0_147 = arith.constant 0 : index
    %361 = vector.load %arg16[%c0_146, %c0_147] : memref<32x256xbf16, #tpu.memory_space<vmem>>, vector<32x256xbf16>
    %362 = arith.truncf %360 : vector<2x32xf32> to vector<2x32xbf16>
    %cst_148 = arith.constant dense<0.000000e+00> : vector<2x256xf32>
    %363 = tpu.matmul %362, %361, %cst_148 {dimension_numbers = #tpu.dot_dimension_numbers<[1], [0], [0], [1], [0, 0, 1, 1], [], []>} : vector<2x32xbf16>, vector<32x256xbf16>, vector<2x256xf32> -> vector<2x256xf32>
    %c0_149 = arith.constant 0 : index
    %c0_150 = arith.constant 0 : index
    %364 = vector.load %arg17[%c0_149, %c0_150] : memref<1x256xf32, #tpu.memory_space<vmem>>, vector<1x256xf32>
    %365 = vector.broadcast %364 : vector<1x256xf32> to vector<2x256xf32>
    %366 = arith.addf %363, %365 : vector<2x256xf32>
    %cst_151 = arith.constant 0.000000e+00 : f32
    %367 = vector.broadcast %cst_151 : f32 to vector<2x256xf32>
    %368 = arith.maximumf %366, %367 : vector<2x256xf32>
    %c0_152 = arith.constant 0 : index
    %c0_153 = arith.constant 0 : index
    %369 = vector.load %arg18[%c0_152, %c0_153] : memref<256x128xbf16, #tpu.memory_space<vmem>>, vector<256x128xbf16>
    %370 = arith.truncf %368 : vector<2x256xf32> to vector<2x256xbf16>
    %cst_154 = arith.constant dense<0.000000e+00> : vector<2x128xf32>
    %371 = tpu.matmul %370, %369, %cst_154 {dimension_numbers = #tpu.dot_dimension_numbers<[1], [0], [0], [1], [0, 0, 1, 1], [], []>} : vector<2x256xbf16>, vector<256x128xbf16>, vector<2x128xf32> -> vector<2x128xf32>
    %c0_155 = arith.constant 0 : index
    %c0_156 = arith.constant 0 : index
    %372 = vector.load %arg19[%c0_155, %c0_156] : memref<1x128xf32, #tpu.memory_space<vmem>>, vector<1x128xf32>
    %373 = vector.broadcast %372 : vector<1x128xf32> to vector<2x128xf32>
    %374 = arith.addf %371, %373 : vector<2x128xf32>
    %cst_157 = arith.constant 0.000000e+00 : f32
    %375 = vector.broadcast %cst_157 : f32 to vector<2x128xf32>
    %376 = arith.maximumf %374, %375 : vector<2x128xf32>
    %c0_158 = arith.constant 0 : index
    %c0_159 = arith.constant 0 : index
    %377 = vector.load %arg20[%c0_158, %c0_159] : memref<128x64xbf16, #tpu.memory_space<vmem>>, vector<128x64xbf16>
    %378 = arith.truncf %376 : vector<2x128xf32> to vector<2x128xbf16>
    %cst_160 = arith.constant dense<0.000000e+00> : vector<2x64xf32>
    %379 = tpu.matmul %378, %377, %cst_160 {dimension_numbers = #tpu.dot_dimension_numbers<[1], [0], [0], [1], [0, 0, 1, 1], [], []>} : vector<2x128xbf16>, vector<128x64xbf16>, vector<2x64xf32> -> vector<2x64xf32>
    %c0_161 = arith.constant 0 : index
    %c0_162 = arith.constant 0 : index
    %380 = vector.load %arg21[%c0_161, %c0_162] : memref<1x64xf32, #tpu.memory_space<vmem>>, vector<1x64xf32>
    %381 = vector.broadcast %380 : vector<1x64xf32> to vector<2x64xf32>
    %382 = arith.addf %379, %381 : vector<2x64xf32>
    %cst_163 = arith.constant 0.000000e+00 : f32
    %383 = vector.broadcast %cst_163 : f32 to vector<2x64xf32>
    %384 = arith.maximumf %382, %383 : vector<2x64xf32>
    %c0_164 = arith.constant 0 : index
    %c0_165 = arith.constant 0 : index
    %385 = vector.load %arg22[%c0_164, %c0_165] : memref<64x3xbf16, #tpu.memory_space<vmem>>, vector<64x3xbf16>
    %386 = arith.truncf %384 : vector<2x64xf32> to vector<2x64xbf16>
    %cst_166 = arith.constant dense<0.000000e+00> : vector<2x3xf32>
    %387 = tpu.matmul %386, %385, %cst_166 {dimension_numbers = #tpu.dot_dimension_numbers<[1], [0], [0], [1], [0, 0, 1, 1], [], []>} : vector<2x64xbf16>, vector<64x3xbf16>, vector<2x3xf32> -> vector<2x3xf32>
    %c0_167 = arith.constant 0 : index
    %c0_168 = arith.constant 0 : index
    %388 = vector.load %arg23[%c0_167, %c0_168] : memref<1x3xf32, #tpu.memory_space<vmem>>, vector<1x3xf32>
    %389 = vector.broadcast %388 : vector<1x3xf32> to vector<2x3xf32>
    %390 = arith.addf %387, %389 : vector<2x3xf32>
    %c0_169 = arith.constant 0 : index
    %c0_170 = arith.constant 0 : index
    %391 = vector.load %arg24[%c0_169, %c0_170] : memref<2x3xf32, #tpu.memory_space<vmem>>, vector<2x3xf32>
    tpu.vector_store %arg24[%c0_169, %c0_170], %390 {strides = array<i32>} : memref<2x3xf32, #tpu.memory_space<vmem>>, vector<2x3xf32>,
    return
  }
}

</mosaic_0001>

<llo_original>
// kernel: multi_model_forward.1
$region0: #{multi_model_forward.1}
  #allocation0 [shape = 'u32[]', space=smem, size = 0x4, offset = 0x4, fixed_abs, tag = 'smem constant byte address 0x4 - core index']
  #allocation1 [shape = 'u32[144,128]{1,0:T(1,128)}', space=vmem, size = 0x12000, scoped, tag = 'internal scratch']
  %s0 = inlined_call_operand.vmem [shape: bf16[48,192], index: 0, kind: input, shape index: {}]
  %s1 = inlined_call_operand.vmem [shape: f32[48,32], index: 1, kind: input, shape index: {}]
  %s2 = inlined_call_operand.vmem [shape: f32[48,48], index: 2, kind: input, shape index: {}]
  %s3 = inlined_call_operand.vmem [shape: bf16[192,32], index: 3, kind: input, shape index: {}]
  %s4 = inlined_call_operand.vmem [shape: f32[2,1,32], index: 4, kind: input, shape index: {}]
  %s5 = inlined_call_operand.vmem [shape: f32[2,1,32], index: 5, kind: input, shape index: {}]
  %s6 = inlined_call_operand.vmem [shape: bf16[2,32,96], index: 6, kind: input, shape index: {}]
  %s7 = inlined_call_operand.vmem [shape: f32[2,1,96], index: 7, kind: input, shape index: {}]
  %s8 = inlined_call_operand.vmem [shape: bf16[2,32,32], index: 8, kind: input, shape index: {}]
  %s9 = inlined_call_operand.vmem [shape: f32[2,1,32], index: 9, kind: input, shape index: {}]
  %s10 = inlined_call_operand.vmem [shape: f32[2,1,32], index: 10, kind: input, shape index: {}]
  %s11 = inlined_call_operand.vmem [shape: f32[2,1,32], index: 11, kind: input, shape index: {}]
  %s12 = inlined_call_operand.vmem [shape: bf16[2,32,128], index: 12, kind: input, shape index: {}]
  %s13 = inlined_call_operand.vmem [shape: f32[2,1,128], index: 13, kind: input, shape index: {}]
  %s14 = inlined_call_operand.vmem [shape: bf16[2,128,32], index: 14, kind: input, shape index: {}]
  %s15 = inlined_call_operand.vmem [shape: f32[2,1,32], index: 15, kind: input, shape index: {}]
  %s16 = inlined_call_operand.vmem [shape: bf16[32,256], index: 16, kind: input, shape index: {}]
  %s17 = inlined_call_operand.vmem [shape: f32[1,256], index: 17, kind: input, shape index: {}]
  %s18 = inlined_call_operand.vmem [shape: bf16[256,128], index: 18, kind: input, shape index: {}]
  %s19 = inlined_call_operand.vmem [shape: f32[1,128], index: 19, kind: input, shape index: {}]
  %s20 = inlined_call_operand.vmem [shape: bf16[128,64], index: 20, kind: input, shape index: {}]
  %s21 = inlined_call_operand.vmem [shape: f32[1,64], index: 21, kind: input, shape index: {}]
  %s22 = inlined_call_operand.vmem [shape: bf16[64,3], index: 22, kind: input, shape index: {}]
  %s23 = inlined_call_operand.vmem [shape: f32[1,3], index: 23, kind: input, shape index: {}]
  %s24 = inlined_call_operand.hbm [shape: f32[2,3], index: 24, kind: output, shape index: {}]
  %s25 = sld [smem:[#allocation0]]
  $region106: #{multi_model_forward.1} parent=0
    _
  %s27 = ssub.s32 1, %s25
  %s28 = scalar_select 0, %s27, %s25
  $region1: #{multi_model_forward.1} parent=0
    #allocation2 [shape = 'u8[1024]{0}', space=vmem, size = 0x400, scoped, tag = 'output window, operand 0, single buffered']
    #allocation3 [shape = 's32[1]{0}', space=sflag, size = 0x4, scoped, tag = 'scoped memory for multi_model_forward.1']
    %29 = vsyncpa [#allocation3], 0
    // Predicated region
    $region2: #{multi_model_forward.1} parent=1 // pred_check
      _
    $region3: #{multi_model_forward.1} parent=1 // pred_check_branch
      %31 = sbr.rel (0) target = $region5
    $region4: #{multi_model_forward.1} parent=1 // pred_region
      _
    $region5: #{multi_model_forward.1} parent=1 // pred_fallthru
      _
    // Predicated region
    $region6: #{multi_model_forward.1} parent=1 // pred_check
      _
    $region7: #{multi_model_forward.1} parent=1 // pred_check_branch
      %33 = sbr.rel (0) target = $region9
    $region8: #{multi_model_forward.1} parent=1 // pred_region
      _
    $region9: #{multi_model_forward.1} parent=1 // pred_fallthru
      _
    // Predicated region
    $region10: #{multi_model_forward.1} parent=1 // pred_check
      _
    $region11: #{multi_model_forward.1} parent=1 // pred_check_branch
      %35 = sbr.rel (0) target = $region13
    $region12: #{multi_model_forward.1} parent=1 // pred_region
      _
    $region13: #{multi_model_forward.1} parent=1 // pred_fallthru
      _
    // Predicated region
    $region14: #{multi_model_forward.1} parent=1 // pred_check
      _
    $region15: #{multi_model_forward.1} parent=1 // pred_check_branch
      %37 = sbr.rel (0) target = $region17
    $region16: #{multi_model_forward.1} parent=1 // pred_region
      _
    $region17: #{multi_model_forward.1} parent=1 // pred_fallthru
      _
    // Predicated region
    $region18: #{multi_model_forward.1} parent=1 // pred_check
      _
    $region19: #{multi_model_forward.1} parent=1 // pred_check_branch
      %39 = sbr.rel (0) target = $region21
    $region20: #{multi_model_forward.1} parent=1 // pred_region
      _
    $region21: #{multi_model_forward.1} parent=1 // pred_fallthru
      _
    // Predicated region
    $region22: #{multi_model_forward.1} parent=1 // pred_check
      _
    $region23: #{multi_model_forward.1} parent=1 // pred_check_branch
      %41 = sbr.rel (0) target = $region25
    $region24: #{multi_model_forward.1} parent=1 // pred_region
      _
    $region25: #{multi_model_forward.1} parent=1 // pred_fallthru
      _
    // Predicated region
    $region26: #{multi_model_forward.1} parent=1 // pred_check
      _
    $region27: #{multi_model_forward.1} parent=1 // pred_check_branch
      %43 = sbr.rel (0) target = $region29
    $region28: #{multi_model_forward.1} parent=1 // pred_region
      _
    $region29: #{multi_model_forward.1} parent=1 // pred_fallthru
      _
    // Predicated region
    $region30: #{multi_model_forward.1} parent=1 // pred_check
      _
    $region31: #{multi_model_forward.1} parent=1 // pred_check_branch
      %45 = sbr.rel (0) target = $region33
    $region32: #{multi_model_forward.1} parent=1 // pred_region
      _
    $region33: #{multi_model_forward.1} parent=1 // pred_fallthru
      _
    // Predicated region
    $region34: #{multi_model_forward.1} parent=1 // pred_check
      _
    $region35: #{multi_model_forward.1} parent=1 // pred_check_branch
      %47 = sbr.rel (0) target = $region37
    $region36: #{multi_model_forward.1} parent=1 // pred_region
      _
    $region37: #{multi_model_forward.1} parent=1 // pred_fallthru
      _
    // Predicated region
    $region38: #{multi_model_forward.1} parent=1 // pred_check
      _
    $region39: #{multi_model_forward.1} parent=1 // pred_check_branch
      %49 = sbr.rel (0) target = $region41
    $region40: #{multi_model_forward.1} parent=1 // pred_region
      _
    $region41: #{multi_model_forward.1} parent=1 // pred_fallthru
      _
    // Predicated region
    $region42: #{multi_model_forward.1} parent=1 // pred_check
      _
    $region43: #{multi_model_forward.1} parent=1 // pred_check_branch
      %51 = sbr.rel (0) target = $region45
    $region44: #{multi_model_forward.1} parent=1 // pred_region
      _
    $region45: #{multi_model_forward.1} parent=1 // pred_fallthru
      _
    // Predicated region
    $region46: #{multi_model_forward.1} parent=1 // pred_check
      _
    $region47: #{multi_model_forward.1} parent=1 // pred_check_branch
      %53 = sbr.rel (0) target = $region49
    $region48: #{multi_model_forward.1} parent=1 // pred_region
      _
    $region49: #{multi_model_forward.1} parent=1 // pred_fallthru
      _
    // Predicated region
    $region50: #{multi_model_forward.1} parent=1 // pred_check
      _
    $region51: #{multi_model_forward.1} parent=1 // pred_check_branch
      %55 = sbr.rel (0) target = $region53
    $region52: #{multi_model_forward.1} parent=1 // pred_region
      _
    $region53: #{multi_model_forward.1} parent=1 // pred_fallthru
      _
    // Predicated region
    $region54: #{multi_model_forward.1} parent=1 // pred_check
      _
    $region55: #{multi_model_forward.1} parent=1 // pred_check_branch
      %57 = sbr.rel (0) target = $region57
    $region56: #{multi_model_forward.1} parent=1 // pred_region
      _
    $region57: #{multi_model_forward.1} parent=1 // pred_fallthru
      _
    // Predicated region
    $region58: #{multi_model_forward.1} parent=1 // pred_check
      _
    $region59: #{multi_model_forward.1} parent=1 // pred_check_branch
      %59 = sbr.rel (0) target = $region61
    $region60: #{multi_model_forward.1} parent=1 // pred_region
      _
    $region61: #{multi_model_forward.1} parent=1 // pred_fallthru
      _
    // Predicated region
    $region62: #{multi_model_forward.1} parent=1 // pred_check
      _
    $region63: #{multi_model_forward.1} parent=1 // pred_check_branch
      %61 = sbr.rel (0) target = $region65
    $region64: #{multi_model_forward.1} parent=1 // pred_region
      _
    $region65: #{multi_model_forward.1} parent=1 // pred_fallthru
      _
    // Predicated region
    $region66: #{multi_model_forward.1} parent=1 // pred_check
      _
    $region67: #{multi_model_forward.1} parent=1 // pred_check_branch
      %63 = sbr.rel (0) target = $region69
    $region68: #{multi_model_forward.1} parent=1 // pred_region
      _
    $region69: #{multi_model_forward.1} parent=1 // pred_fallthru
      _
    // Predicated region
    $region70: #{multi_model_forward.1} parent=1 // pred_check
      _
    $region71: #{multi_model_forward.1} parent=1 // pred_check_branch
      %65 = sbr.rel (0) target = $region73
    $region72: #{multi_model_forward.1} parent=1 // pred_region
      _
    $region73: #{multi_model_forward.1} parent=1 // pred_fallthru
      _
    // Predicated region
    $region74: #{multi_model_forward.1} parent=1 // pred_check
      _
    $region75: #{multi_model_forward.1} parent=1 // pred_check_branch
      %67 = sbr.rel (0) target = $region77
    $region76: #{multi_model_forward.1} parent=1 // pred_region
      _
    $region77: #{multi_model_forward.1} parent=1 // pred_fallthru
      _
    // Predicated region
    $region78: #{multi_model_forward.1} parent=1 // pred_check
      _
    $region79: #{multi_model_forward.1} parent=1 // pred_check_branch
      %69 = sbr.rel (0) target = $region81
    $region80: #{multi_model_forward.1} parent=1 // pred_region
      _
    $region81: #{multi_model_forward.1} parent=1 // pred_fallthru
      _
    // Predicated region
    $region82: #{multi_model_forward.1} parent=1 // pred_check
      _
    $region83: #{multi_model_forward.1} parent=1 // pred_check_branch
      %71 = sbr.rel (0) target = $region85
    $region84: #{multi_model_forward.1} parent=1 // pred_region
      _
    $region85: #{multi_model_forward.1} parent=1 // pred_fallthru
      _
    // Predicated region
    $region86: #{multi_model_forward.1} parent=1 // pred_check
      _
    $region87: #{multi_model_forward.1} parent=1 // pred_check_branch
      %73 = sbr.rel (0) target = $region89
    $region88: #{multi_model_forward.1} parent=1 // pred_region
      _
    $region89: #{multi_model_forward.1} parent=1 // pred_fallthru
      _
    // Predicated region
    $region90: #{multi_model_forward.1} parent=1 // pred_check
      _
    $region91: #{multi_model_forward.1} parent=1 // pred_check_branch
      %75 = sbr.rel (0) target = $region93
    $region92: #{multi_model_forward.1} parent=1 // pred_region
      _
    $region93: #{multi_model_forward.1} parent=1 // pred_fallthru
      _
    // Predicated region
    $region94: #{multi_model_forward.1} parent=1 // pred_check
      _
    $region95: #{multi_model_forward.1} parent=1 // pred_check_branch
      %77 = sbr.rel (0) target = $region97
    $region96: #{multi_model_forward.1} parent=1 // pred_region
      _
    $region97: #{multi_model_forward.1} parent=1 // pred_fallthru
      _
    %v79 = vld [vmem:[%s0] sm:$0xff]
    %v80 = vld [vmem:[%s0 + $0x8] sm:$0xff]
    %v81 = vld [vmem:[%s0 + $0x10] sm:$0xff]
    %v82 = vld [vmem:[%s0 + $0x18] sm:$0xff]
    %v83 = vld [vmem:[%s0 + $0x20] sm:$0xff]
    %v84 = vld [vmem:[%s0 + $0x28] sm:$0xff]
    %v85 = vld [vmem:[%s3] sm:$0xf]
    %v86 = vld [vmem:[%s3 + $0x4] sm:$0xf]
    %v87 = vld [vmem:[%s3 + $0x8] sm:$0xf]
    %v88 = vld [vmem:[%s3 + $0xc] sm:$0xf]
    %v89 = vld [vmem:[%s3 + $0x10] sm:$0xf]
    %v90 = vld [vmem:[%s3 + $0x14] sm:$0xf]
    %v91 = vld [vmem:[%s3 + $0x18] sm:$0xf]
    %v92 = vld [vmem:[%s3 + $0x1c] sm:$0xf]
    %v93 = vld [vmem:[%s3 + $0x20] sm:$0xf]
    %v94 = vld [vmem:[%s3 + $0x24] sm:$0xf]
    %v95 = vld [vmem:[%s3 + $0x28] sm:$0xf]
    %v96 = vld [vmem:[%s3 + $0x2c] sm:$0xf]
    %v97 = vld [vmem:[%s3 + $0x30] sm:$0xf]
    %v98 = vld [vmem:[%s3 + $0x34] sm:$0xf]
    %v99 = vld [vmem:[%s3 + $0x38] sm:$0xf]
    %v100 = vld [vmem:[%s3 + $0x3c] sm:$0xf]
    %v101 = vld [vmem:[%s3 + $0x40] sm:$0xf]
    %v102 = vld [vmem:[%s3 + $0x44] sm:$0xf]
    %v103 = vld [vmem:[%s3 + $0x48] sm:$0xf]
    %v104 = vld [vmem:[%s3 + $0x4c] sm:$0xf]
    %v105 = vld [vmem:[%s3 + $0x50] sm:$0xf]
    %v106 = vld [vmem:[%s3 + $0x54] sm:$0xf]
    %v107 = vld [vmem:[%s3 + $0x58] sm:$0xf]
    %v108 = vld [vmem:[%s3 + $0x5c] sm:$0xf]
    %v109 = vld [vmem:[%s1] sm:$0xff]
    %v110 = vld [vmem:[%s1 + $0x8] sm:$0xff]
    %v111 = vld [vmem:[%s1 + $0x10] sm:$0xff]
    %v112 = vld [vmem:[%s1 + $0x18] sm:$0xff]
    %v113 = vld [vmem:[%s1 + $0x20] sm:$0xff]
    %v114 = vld [vmem:[%s1 + $0x28] sm:$0xff]
    %v121 = vunpack.c.l.b16 %v79
    %v122 = vunpack.c.h.b16 %v79
    %v123 = vunpack.c.l.b16 %v80
    %v124 = vunpack.c.h.b16 %v80
    %v125 = vunpack.c.l.b16 %v81
    %v126 = vunpack.c.h.b16 %v81
    %v127 = vunpack.c.l.b16 %v82
    %v128 = vunpack.c.h.b16 %v82
    %v129 = vunpack.c.l.b16 %v83
    %v130 = vunpack.c.h.b16 %v83
    %v131 = vunpack.c.l.b16 %v84
    %v132 = vunpack.c.h.b16 %v84
    %v133 = vpack.c.b16 %v123, %v121
    %v134 = vpack.c.b16 %v124, %v122
    %v135 = vpack.c.b16 %v127, %v125
    %v136 = vpack.c.b16 %v128, %v126
    %v137 = vpack.c.b16 %v131, %v129
    %v138 = vpack.c.b16 %v132, %v130
    %v166 = vunpack.c.l.b16 %v85
    %v167 = vunpack.c.l.b16 %v86
    %v168 = vunpack.c.l.b16 %v87
    %v169 = vunpack.c.l.b16 %v88
    %v170 = vunpack.c.l.b16 %v89
    %v171 = vunpack.c.l.b16 %v90
    %v172 = vunpack.c.l.b16 %v91
    %v173 = vunpack.c.l.b16 %v92
    %v174 = vunpack.c.l.b16 %v93
    %v175 = vunpack.c.l.b16 %v94
    %v176 = vunpack.c.l.b16 %v95
    %v177 = vunpack.c.l.b16 %v96
    %v178 = vunpack.c.l.b16 %v97
    %v179 = vunpack.c.l.b16 %v98
    %v180 = vunpack.c.l.b16 %v99
    %v181 = vunpack.c.l.b16 %v100
    %v182 = vunpack.c.l.b16 %v101
    %v183 = vunpack.c.l.b16 %v102
    %v184 = vunpack.c.l.b16 %v103
    %v185 = vunpack.c.l.b16 %v104
    %v186 = vunpack.c.l.b16 %v105
    %v187 = vunpack.c.l.b16 %v106
    %v188 = vunpack.c.l.b16 %v107
    %v189 = vunpack.c.l.b16 %v108
    %v190 = vpack.c.b16 %v167, %v166
    %v191 = vpack.c.b16 %v169, %v168
    %v192 = vpack.c.b16 %v171, %v170
    %v193 = vpack.c.b16 %v173, %v172
    %v194 = vpack.c.b16 %v175, %v174
    %v195 = vpack.c.b16 %v177, %v176
    %v196 = vpack.c.b16 %v179, %v178
    %v197 = vpack.c.b16 %v181, %v180
    %v198 = vpack.c.b16 %v183, %v182
    %v199 = vpack.c.b16 %v185, %v184
    %v200 = vpack.c.b16 %v187, %v186
    %v201 = vpack.c.b16 %v189, %v188
    %vm214 = vcmask 523264
    %v216 = vsel %vm214, %v134, 0
    %v219 = vsel %vm214, %v136, 0
    %v222 = vsel %vm214, %v138, 0
    %224 = vmatprep.subr.bf16.mxu0 0
    %225 = vmatpush1.bf16.msra.mxu0 %v190
    %226 = vmatprep.subr.bf16.mxu0 0
    %227 = vmatpush1.bf16.msra.mxu0 %v191
    %228 = vmatprep.subr.bf16.mxu0 0
    %229 = vmatpush1.bf16.msra.mxu0 %v192
    %230 = vmatprep.subr.bf16.mxu0 0
    %231 = vmatpush1.bf16.msra.mxu0 %v193
    %232 = vmatprep.subr.bf16.mxu0 0
    %233 = vmatpush1.bf16.msra.mxu0 %v194
    %234 = vmatprep.subr.bf16.mxu0 0
    %235 = vmatpush1.bf16.msra.mxu0 %v195
    %236 = vmatprep.subr.bf16.mxu0 0
    %237 = vmatpush1.bf16.msra.mxu0 %v196
    %238 = vmatprep.subr.bf16.mxu0 0
    %239 = vmatpush1.bf16.msra.mxu0 %v197
    %240 = vmatprep.subr.bf16.mxu0 0
    %241 = vmatpush1.bf16.msra.mxu0 %v198
    %242 = vmatprep.subr.bf16.mxu0 0
    %243 = vmatpush1.bf16.msra.mxu0 %v199
    %244 = vmatprep.subr.bf16.mxu0 0
    %245 = vmatpush1.bf16.msra.mxu0 %v200
    %246 = vmatprep.subr.bf16.mxu0 0
    %247 = vmatpush1.bf16.msra.mxu0 %v201
    %248 = vmatprep.subr.bf16.mxu0 0
    %249 = vmatpush1.bf16.msra.mxu0 0
    %250 = vmatprep.subr.bf16.mxu0 0
    %251 = vmatpush1.bf16.msra.mxu0 0
    %252 = vmatprep.subr.bf16.mxu0 0
    %253 = vmatpush1.bf16.msra.mxu0 0
    %254 = vmatprep.subr.bf16.mxu0 0
    %255 = vmatpush1.bf16.msra.mxu0 0
    %256 = vmatprep.mubr.bf16.mxu0 %v216
    %257 = vmatmul.mubr.bf16.gmra.mrb[0].mxu0 %v133
    %v258 = vpop.f32.mrb[0].mxu0
    %v259 = vadd.f32 %v109, %v258
    %v260 = vpop.f32.mrb[0].mxu0
    %v261 = vpop.f32.mrb[0].mxu0
    %v262 = vadd.f32 %v110, %v261
    %v263 = vpop.f32.mrb[0].mxu0
    %264 = vmatprep.mubr.bf16.mxu0 %v219
    %265 = vmatmul.mubr.bf16.gmra.mrb[0].mxu0 %v135
    %v266 = vpop.f32.mrb[0].mxu0
    %v267 = vadd.f32 %v111, %v266
    %v268 = vpop.f32.mrb[0].mxu0
    %v269 = vpop.f32.mrb[0].mxu0
    %v270 = vadd.f32 %v112, %v269
    %v271 = vpop.f32.mrb[0].mxu0
    %272 = vmatprep.mubr.bf16.mxu0 %v222
    %273 = vmatmul.mubr.bf16.gmra.mrb[0].mxu0 %v137
    %v274 = vpop.f32.mrb[0].mxu0
    %v275 = vadd.f32 %v113, %v274
    %v276 = vpop.f32.mrb[0].mxu0
    %v277 = vpop.f32.mrb[0].mxu0
    %v278 = vadd.f32 %v114, %v277
    %v279 = vpop.f32.mrb[0].mxu0
    %280 = vdwg.mxu0
    %v281 = vld [vmem:[%s2] sm:$0xff]
    %v282 = vld [vmem:[%s2 + $0x8] sm:$0xff]
    %v283 = vld [vmem:[%s2 + $0x10] sm:$0xff]
    %v284 = vld [vmem:[%s2 + $0x18] sm:$0xff]
    %v285 = vld [vmem:[%s2 + $0x20] sm:$0xff]
    %v286 = vld [vmem:[%s2 + $0x28] sm:$0xff]
    %v287 = vld [vmem:[%s4] sm:$0x1]
    %v288 = vld [vmem:[%s5] sm:$0x1]
    %vm289 = vcmask 261120
    %v290 = vsel %vm289, %v259, 0.0
    %291 = vadd.xlane.f32.xlu0 %v290
    %v292 = vpop.xlane.xlu0 %291
    %v293 = vsel %vm289, %v262, 0.0
    %294 = vadd.xlane.f32.xlu0 %v293
    %v295 = vpop.xlane.xlu0 %294
    %v296 = vsel %vm289, %v267, 0.0
    %297 = vadd.xlane.f32.xlu0 %v296
    %v298 = vpop.xlane.xlu0 %297
    %v299 = vsel %vm289, %v270, 0.0
    %300 = vadd.xlane.f32.xlu0 %v299
    %v301 = vpop.xlane.xlu0 %300
    %v302 = vsel %vm289, %v275, 0.0
    %303 = vadd.xlane.f32.xlu0 %v302
    %v304 = vpop.xlane.xlu0 %303
    %v305 = vsel %vm289, %v278, 0.0
    %306 = vadd.xlane.f32.xlu0 %v305
    %v307 = vpop.xlane.xlu0 %306
    %v308 = vrcp.pop 32.0
    %v309 = vmul.f32 %v292, %v308
    %v310 = vmul.f32 %v295, %v308
    %v311 = vmul.f32 %v298, %v308
    %v312 = vmul.f32 %v301, %v308
    %v313 = vmul.f32 %v304, %v308
    %v314 = vmul.f32 %v307, %v308
    %v315 = vsub.f32 %v259, %v309
    %v316 = vsub.f32 %v262, %v310
    %v317 = vsub.f32 %v267, %v311
    %v318 = vsub.f32 %v270, %v312
    %v319 = vsub.f32 %v275, %v313
    %v320 = vsub.f32 %v278, %v314
    %v321 = vmul.f32 %v315, %v315
    %v322 = vmul.f32 %v316, %v316
    %v323 = vmul.f32 %v317, %v317
    %v324 = vmul.f32 %v318, %v318
    %v325 = vmul.f32 %v319, %v319
    %v326 = vmul.f32 %v320, %v320
    %v327 = vsel %vm289, %v321, 0.0
    %328 = vadd.xlane.f32.xlu0 %v327
    %v329 = vpop.xlane.xlu0 %328
    %v330 = vsel %vm289, %v322, 0.0
    %331 = vadd.xlane.f32.xlu0 %v330
    %v332 = vpop.xlane.xlu0 %331
    %v333 = vsel %vm289, %v323, 0.0
    %334 = vadd.xlane.f32.xlu0 %v333
    %v335 = vpop.xlane.xlu0 %334
    %v336 = vsel %vm289, %v324, 0.0
    %337 = vadd.xlane.f32.xlu0 %v336
    %v338 = vpop.xlane.xlu0 %337
    %v339 = vsel %vm289, %v325, 0.0
    %340 = vadd.xlane.f32.xlu0 %v339
    %v341 = vpop.xlane.xlu0 %340
    %v342 = vsel %vm289, %v326, 0.0
    %343 = vadd.xlane.f32.xlu0 %v342
    %v344 = vpop.xlane.xlu0 %343
    %v345 = vmul.f32 %v329, %v308
    %v346 = vmul.f32 %v332, %v308
    %v347 = vmul.f32 %v335, %v308
    %v348 = vmul.f32 %v338, %v308
    %v349 = vmul.f32 %v341, %v308
    %v350 = vmul.f32 %v344, %v308
    %v351 = vadd.f32 %v345, 1e-12
    %v352 = vadd.f32 %v346, 1e-12
    %v353 = vadd.f32 %v347, 1e-12
    %v354 = vadd.f32 %v348, 1e-12
    %v355 = vadd.f32 %v349, 1e-12
    %v356 = vadd.f32 %v350, 1e-12
    %v357 = vrsqrt.pop %v351
    %v358 = vrsqrt.pop %v352
    %v359 = vrsqrt.pop %v353
    %v360 = vrsqrt.pop %v354
    %v361 = vrsqrt.pop %v355
    %v362 = vrsqrt.pop %v356
    %v363 = vmul.f32 %v315, %v357
    %v364 = vmul.f32 %v316, %v358
    %v365 = vmul.f32 %v317, %v359
    %v366 = vmul.f32 %v318, %v360
    %v367 = vmul.f32 %v319, %v361
    %v368 = vmul.f32 %v320, %v362
    %v370 = vlaneseq
    %v371 = vshrl.u32 %v370, 7
    %v372 = vsub.s32 0, %v371
    %v373 = vrot.slane %v287, %v372
    %v375 = vmul.f32 %v363, %v373
    %v376 = vmul.f32 %v364, %v373
    %v377 = vmul.f32 %v365, %v373
    %v378 = vmul.f32 %v366, %v373
    %v379 = vmul.f32 %v367, %v373
    %v380 = vmul.f32 %v368, %v373
    %v382 = vlaneseq
    %v383 = vshrl.u32 %v382, 7
    %v384 = vsub.s32 0, %v383
    %v385 = vrot.slane %v288, %v384
    %v387 = vadd.f32 %v375, %v385
    %v388 = vadd.f32 %v376, %v385
    %v389 = vadd.f32 %v377, %v385
    %v390 = vadd.f32 %v378, %v385
    %v391 = vadd.f32 %v379, %v385
    %v392 = vadd.f32 %v380, %v385
    %v393 = vld [vmem:[%s6] sm:$0xf]
    %v394 = vld [vmem:[%s6 + $0x4] sm:$0xf]
    %v395 = vld [vmem:[%s6 + $0x8] sm:$0xf]
    %v396 = vld [vmem:[%s6 + $0xc] sm:$0xf]
    %v397 = vpack.c.bf16 %v388, %v387
    %v398 = vpack.c.bf16 %v390, %v389
    %v399 = vpack.c.bf16 %v392, %v391
    %v400 = vld [vmem:[%s7] sm:$0x1]
    %v402 = vlaneseq
    %v403 = vshrl.u32 %v402, 7
    %v404 = vsub.s32 0, %v403
    %v405 = vrot.slane %v400, %v404
    %v411 = vunpack.c.l.b16 %v393
    %v412 = vunpack.c.l.b16 %v394
    %v413 = vunpack.c.l.b16 %v395
    %v414 = vunpack.c.l.b16 %v396
    %v415 = vpack.c.b16 %v412, %v411
    %v416 = vpack.c.b16 %v414, %v413
    %v420 = vsel %vm289, %v397, 0
    %v423 = vsel %vm289, %v398, 0
    %v426 = vsel %vm289, %v399, 0
    %428 = vmatprep.subr.bf16.mxu0 0
    %429 = vmatpush1.bf16.msra.mxu0 %v415
    %430 = vmatprep.subr.bf16.mxu0 0
    %431 = vmatpush1.bf16.msra.mxu0 %v416
    %432 = vmatprep.subr.bf16.mxu0 0
    %433 = vmatpush1.bf16.msra.mxu0 0
    %434 = vmatprep.subr.bf16.mxu0 0
    %435 = vmatpush1.bf16.msra.mxu0 0
    %436 = vmatprep.subr.bf16.mxu0 0
    %437 = vmatpush1.bf16.msra.mxu0 0
    %438 = vmatprep.subr.bf16.mxu0 0
    %439 = vmatpush1.bf16.msra.mxu0 0
    %440 = vmatprep.subr.bf16.mxu0 0
    %441 = vmatpush1.bf16.msra.mxu0 0
    %442 = vmatprep.subr.bf16.mxu0 0
    %443 = vmatpush1.bf16.msra.mxu0 0
    %444 = vmatprep.subr.bf16.mxu0 0
    %445 = vmatpush1.bf16.msra.mxu0 0
    %446 = vmatprep.subr.bf16.mxu0 0
    %447 = vmatpush1.bf16.msra.mxu0 0
    %448 = vmatprep.subr.bf16.mxu0 0
    %449 = vmatpush1.bf16.msra.mxu0 0
    %450 = vmatprep.subr.bf16.mxu0 0
    %451 = vmatpush1.bf16.msra.mxu0 0
    %452 = vmatprep.subr.bf16.mxu0 0
    %453 = vmatpush1.bf16.msra.mxu0 0
    %454 = vmatprep.subr.bf16.mxu0 0
    %455 = vmatpush1.bf16.msra.mxu0 0
    %456 = vmatprep.subr.bf16.mxu0 0
    %457 = vmatpush1.bf16.msra.mxu0 0
    %458 = vmatprep.subr.bf16.mxu0 0
    %459 = vmatpush1.bf16.msra.mxu0 0
    %460 = vmatprep.mubr.bf16.mxu0 0
    %461 = vmatmul.mubr.bf16.gmra.mrb[0].mxu0 %v420
    %v462 = vpop.f32.mrb[0].mxu0
    %v463 = vadd.f32 %v405, %v462
    %v464 = vpop.f32.mrb[0].mxu0
    %v465 = vpop.f32.mrb[0].mxu0
    %v466 = vadd.f32 %v405, %v465
    %v467 = vpop.f32.mrb[0].mxu0
    %468 = vmatprep.mubr.bf16.mxu0 0
    %469 = vmatmul.mubr.bf16.gmra.mrb[0].mxu0 %v423
    %v470 = vpop.f32.mrb[0].mxu0
    %v471 = vadd.f32 %v405, %v470
    %v472 = vpop.f32.mrb[0].mxu0
    %v473 = vpop.f32.mrb[0].mxu0
    %v474 = vadd.f32 %v405, %v473
    %v475 = vpop.f32.mrb[0].mxu0
    %476 = vmatprep.mubr.bf16.mxu0 0
    %477 = vmatmul.mubr.bf16.gmra.mrb[0].mxu0 %v426
    %v478 = vpop.f32.mrb[0].mxu0
    %v479 = vadd.f32 %v405, %v478
    %v480 = vpop.f32.mrb[0].mxu0
    %v481 = vpop.f32.mrb[0].mxu0
    %v482 = vadd.f32 %v405, %v481
    %v483 = vpop.f32.mrb[0].mxu0
    %484 = vdwg.mxu0
    %v485 = vpack.c.bf16 %v466, %v463
    %v486 = vpack.c.bf16 %v474, %v471
    %v487 = vpack.c.bf16 %v482, %v479
    %491 = vrot.lane.b32.xlu0 %v485, 96
    %v492 = vpop.permute.xlu0 %491
    %493 = vrot.lane.b32.xlu0 %v486, 96
    %v494 = vpop.permute.xlu0 %493
    %495 = vrot.lane.b32.xlu0 %v487, 96
    %v496 = vpop.permute.xlu0 %495
    %vm497 = vcmask 64512
    %v499 = vsel %vm497, %v485, 0
    %v502 = vsel %vm497, %v486, 0
    %v505 = vsel %vm497, %v487, 0
    %v508 = vsel %vm497, %v492, 0
    %v511 = vsel %vm497, %v494, 0
    %v514 = vsel %vm497, %v496, 0
    %516 = vmatprep.subr.bf16.mxu0 0
    %517 = vmatpush1.bf16.xpose.msra.mxu0 %v508
    %518 = vmatprep.subr.bf16.mxu0 0
    %519 = vmatpush1.bf16.xpose.msra.mxu0 %v511
    %520 = vmatprep.subr.bf16.mxu0 0
    %521 = vmatpush1.bf16.xpose.msra.mxu0 %v514
    %522 = vmatprep.subr.bf16.mxu0 0
    %523 = vmatpush1.bf16.xpose.msra.mxu0 0
    %524 = vmatprep.subr.bf16.mxu0 0
    %525 = vmatpush1.bf16.xpose.msra.mxu0 0
    %526 = vmatprep.subr.bf16.mxu0 0
    %527 = vmatpush1.bf16.xpose.msra.mxu0 0
    %528 = vmatprep.subr.bf16.mxu0 0
    %529 = vmatpush1.bf16.xpose.msra.mxu0 0
    %530 = vmatprep.subr.bf16.mxu0 0
    %531 = vmatpush1.bf16.xpose.msra.mxu0 0
    %532 = vmatprep.subr.bf16.mxu0 0
    %533 = vmatpush1.bf16.xpose.msra.mxu0 0
    %534 = vmatprep.subr.bf16.mxu0 0
    %535 = vmatpush1.bf16.xpose.msra.mxu0 0
    %536 = vmatprep.subr.bf16.mxu0 0
    %537 = vmatpush1.bf16.xpose.msra.mxu0 0
    %538 = vmatprep.subr.bf16.mxu0 0
    %539 = vmatpush1.bf16.xpose.msra.mxu0 0
    %540 = vmatprep.subr.bf16.mxu0 0
    %541 = vmatpush1.bf16.xpose.msra.mxu0 0
    %542 = vmatprep.subr.bf16.mxu0 0
    %543 = vmatpush1.bf16.xpose.msra.mxu0 0
    %544 = vmatprep.subr.bf16.mxu0 0
    %545 = vmatpush1.bf16.xpose.msra.mxu0 0
    %546 = vmatprep.subr.bf16.mxu0 0
    %547 = vmatpush1.bf16.xpose.msra.mxu0 0
    %548 = vmatprep.mubr.bf16.mxu0 0
    %549 = vmatmul.mubr.bf16.gmra.mrb[0].mxu0 %v499
    %v550 = vpop.f32.mrb[0].mxu0
    %v551 = vadd.f32 %v281, %v550
    %v552 = vpop.f32.mrb[0].mxu0
    %v553 = vpop.f32.mrb[0].mxu0
    %v554 = vadd.f32 %v282, %v553
    %v555 = vpop.f32.mrb[0].mxu0
    %556 = vmatprep.mubr.bf16.mxu0 0
    %557 = vmatmul.mubr.bf16.gmra.mrb[0].mxu0 %v502
    %v558 = vpop.f32.mrb[0].mxu0
    %v559 = vadd.f32 %v283, %v558
    %v560 = vpop.f32.mrb[0].mxu0
    %v561 = vpop.f32.mrb[0].mxu0
    %v562 = vadd.f32 %v284, %v561
    %v563 = vpop.f32.mrb[0].mxu0
    %564 = vmatprep.mubr.bf16.mxu0 0
    %565 = vmatmul.mubr.bf16.gmra.mrb[0].mxu0 %v505
    %v566 = vpop.f32.mrb[0].mxu0
    %v567 = vadd.f32 %v285, %v566
    %v568 = vpop.f32.mrb[0].mxu0
    %v569 = vpop.f32.mrb[0].mxu0
    %v570 = vadd.f32 %v286, %v569
    %v571 = vpop.f32.mrb[0].mxu0
    %572 = vdwg.mxu0
    %vm573 = vcmask 392192
    %v574 = vsel %vm573, %v551, -inf
    %575 = vmax.xlane.f32.xlu0 %v574
    %v576 = vpop.xlane.xlu0 %575
    %v577 = vsel %vm573, %v554, -inf
    %578 = vmax.xlane.f32.xlu0 %v577
    %v579 = vpop.xlane.xlu0 %578
    %v580 = vsel %vm573, %v559, -inf
    %581 = vmax.xlane.f32.xlu0 %v580
    %v582 = vpop.xlane.xlu0 %581
    %v583 = vsel %vm573, %v562, -inf
    %584 = vmax.xlane.f32.xlu0 %v583
    %v585 = vpop.xlane.xlu0 %584
    %v586 = vsel %vm573, %v567, -inf
    %587 = vmax.xlane.f32.xlu0 %v586
    %v588 = vpop.xlane.xlu0 %587
    %v589 = vsel %vm573, %v570, -inf
    %590 = vmax.xlane.f32.xlu0 %v589
    %v591 = vpop.xlane.xlu0 %590
    %v592 = vsub.f32 %v551, %v576
    %v593 = vsub.f32 %v554, %v579
    %v594 = vsub.f32 %v559, %v582
    %v595 = vsub.f32 %v562, %v585
    %v596 = vsub.f32 %v567, %v588
    %v597 = vsub.f32 %v570, %v591
    %v598 = vmul.f32 %v592, 1.442695
    %v599 = vpow.pop %v598
    %v600 = vmul.f32 %v593, 1.442695
    %v601 = vpow.pop %v600
    %v602 = vmul.f32 %v594, 1.442695
    %v603 = vpow.pop %v602
    %v604 = vmul.f32 %v595, 1.442695
    %v605 = vpow.pop %v604
    %v606 = vmul.f32 %v596, 1.442695
    %v607 = vpow.pop %v606
    %v608 = vmul.f32 %v597, 1.442695
    %v609 = vpow.pop %v608
    %v610 = vsel %vm573, %v599, 0.0
    %611 = vadd.xlane.f32.xlu0 %v610
    %v612 = vpop.xlane.xlu0 %611
    %v613 = vsel %vm573, %v601, 0.0
    %614 = vadd.xlane.f32.xlu0 %v613
    %v615 = vpop.xlane.xlu0 %614
    %v616 = vsel %vm573, %v603, 0.0
    %617 = vadd.xlane.f32.xlu0 %v616
    %v618 = vpop.xlane.xlu0 %617
    %v619 = vsel %vm573, %v605, 0.0
    %620 = vadd.xlane.f32.xlu0 %v619
    %v621 = vpop.xlane.xlu0 %620
    %v622 = vsel %vm573, %v607, 0.0
    %623 = vadd.xlane.f32.xlu0 %v622
    %v624 = vpop.xlane.xlu0 %623
    %v625 = vsel %vm573, %v609, 0.0
    %626 = vadd.xlane.f32.xlu0 %v625
    %v627 = vpop.xlane.xlu0 %626
    %v628 = vrcp.pop %v612
    %v629 = vrcp.pop %v615
    %v630 = vrcp.pop %v618
    %v631 = vrcp.pop %v621
    %v632 = vrcp.pop %v624
    %v633 = vrcp.pop %v627
    %v634 = vmul.f32 %v599, %v628
    %v635 = vmul.f32 %v601, %v629
    %v636 = vmul.f32 %v603, %v630
    %v637 = vmul.f32 %v605, %v631
    %v638 = vmul.f32 %v607, %v632
    %v639 = vmul.f32 %v609, %v633
    %v640 = vpack.c.bf16 %v635, %v634
    %v641 = vpack.c.bf16 %v637, %v636
    %v642 = vpack.c.bf16 %v639, %v638
    %643 = vrot.lane.b32.xlu0 %v485, 64
    %v644 = vpop.permute.xlu0 %643
    %645 = vrot.lane.b32.xlu0 %v486, 64
    %v646 = vpop.permute.xlu0 %645
    %647 = vrot.lane.b32.xlu0 %v487, 64
    %v648 = vpop.permute.xlu0 %647
    %v653 = vsel %vm573, %v640, 0
    %v656 = vsel %vm573, %v641, 0
    %v659 = vsel %vm573, %v642, 0
    %661 = vmatprep.subr.bf16.mxu0 0
    %662 = vmatpush1.bf16.msra.mxu0 %v644
    %663 = vmatprep.subr.bf16.mxu0 0
    %664 = vmatpush1.bf16.msra.mxu0 %v646
    %665 = vmatprep.subr.bf16.mxu0 0
    %666 = vmatpush1.bf16.msra.mxu0 %v648
    %667 = vmatprep.subr.bf16.mxu0 0
    %668 = vmatpush1.bf16.msra.mxu0 0
    %669 = vmatprep.subr.bf16.mxu0 0
    %670 = vmatpush1.bf16.msra.mxu0 0
    %671 = vmatprep.subr.bf16.mxu0 0
    %672 = vmatpush1.bf16.msra.mxu0 0
    %673 = vmatprep.subr.bf16.mxu0 0
    %674 = vmatpush1.bf16.msra.mxu0 0
    %675 = vmatprep.subr.bf16.mxu0 0
    %676 = vmatpush1.bf16.msra.mxu0 0
    %677 = vmatprep.subr.bf16.mxu0 0
    %678 = vmatpush1.bf16.msra.mxu0 0
    %679 = vmatprep.subr.bf16.mxu0 0
    %680 = vmatpush1.bf16.msra.mxu0 0
    %681 = vmatprep.subr.bf16.mxu0 0
    %682 = vmatpush1.bf16.msra.mxu0 0
    %683 = vmatprep.subr.bf16.mxu0 0
    %684 = vmatpush1.bf16.msra.mxu0 0
    %685 = vmatprep.subr.bf16.mxu0 0
    %686 = vmatpush1.bf16.msra.mxu0 0
    %687 = vmatprep.subr.bf16.mxu0 0
    %688 = vmatpush1.bf16.msra.mxu0 0
    %689 = vmatprep.subr.bf16.mxu0 0
    %690 = vmatpush1.bf16.msra.mxu0 0
    %691 = vmatprep.subr.bf16.mxu0 0
    %692 = vmatpush1.bf16.msra.mxu0 0
    %693 = vmatprep.mubr.bf16.mxu0 0
    %694 = vmatmul.mubr.bf16.gmra.mrb[0].mxu0 %v653
    %v695 = vpop.f32.mrb[0].mxu0
    %v696 = vadd.f32 0.0, %v695
    %v697 = vpop.f32.mrb[0].mxu0
    %v698 = vpop.f32.mrb[0].mxu0
    %v699 = vadd.f32 0.0, %v698
    %v700 = vpop.f32.mrb[0].mxu0
    %701 = vmatprep.mubr.bf16.mxu0 0
    %702 = vmatmul.mubr.bf16.gmra.mrb[0].mxu0 %v656
    %v703 = vpop.f32.mrb[0].mxu0
    %v704 = vadd.f32 0.0, %v703
    %v705 = vpop.f32.mrb[0].mxu0
    %v706 = vpop.f32.mrb[0].mxu0
    %v707 = vadd.f32 0.0, %v706
    %v708 = vpop.f32.mrb[0].mxu0
    %709 = vmatprep.mubr.bf16.mxu0 0
    %710 = vmatmul.mubr.bf16.gmra.mrb[0].mxu0 %v659
    %v711 = vpop.f32.mrb[0].mxu0
    %v712 = vadd.f32 0.0, %v711
    %v713 = vpop.f32.mrb[0].mxu0
    %v714 = vpop.f32.mrb[0].mxu0
    %v715 = vadd.f32 0.0, %v714
    %v716 = vpop.f32.mrb[0].mxu0
    %717 = vdwg.mxu0
    %v718 = vpack.c.bf16 %v699, %v696
    %v719 = vpack.c.bf16 %v707, %v704
    %v720 = vpack.c.bf16 %v715, %v712
    %721 = vrot.lane.b32.xlu0 %v485, 120
    %v722 = vpop.permute.xlu0 %721
    %723 = vrot.lane.b32.xlu0 %v486, 120
    %v724 = vpop.permute.xlu0 %723
    %725 = vrot.lane.b32.xlu0 %v487, 120
    %v726 = vpop.permute.xlu0 %725
    %727 = vrot.lane.b32.xlu0 %v485, 88
    %v728 = vpop.permute.xlu0 %727
    %729 = vrot.lane.b32.xlu0 %v486, 88
    %v730 = vpop.permute.xlu0 %729
    %731 = vrot.lane.b32.xlu0 %v487, 88
    %v732 = vpop.permute.xlu0 %731
    %v734 = vsel %vm497, %v722, 0
    %v737 = vsel %vm497, %v724, 0
    %v740 = vsel %vm497, %v726, 0
    %v743 = vsel %vm497, %v728, 0
    %v746 = vsel %vm497, %v730, 0
    %v749 = vsel %vm497, %v732, 0
    %751 = vmatprep.subr.bf16.mxu0 0
    %752 = vmatpush1.bf16.xpose.msra.mxu0 %v743
    %753 = vmatprep.subr.bf16.mxu0 0
    %754 = vmatpush1.bf16.xpose.msra.mxu0 %v746
    %755 = vmatprep.subr.bf16.mxu0 0
    %756 = vmatpush1.bf16.xpose.msra.mxu0 %v749
    %757 = vmatprep.subr.bf16.mxu0 0
    %758 = vmatpush1.bf16.xpose.msra.mxu0 0
    %759 = vmatprep.subr.bf16.mxu0 0
    %760 = vmatpush1.bf16.xpose.msra.mxu0 0
    %761 = vmatprep.subr.bf16.mxu0 0
    %762 = vmatpush1.bf16.xpose.msra.mxu0 0
    %763 = vmatprep.subr.bf16.mxu0 0
    %764 = vmatpush1.bf16.xpose.msra.mxu0 0
    %765 = vmatprep.subr.bf16.mxu0 0
    %766 = vmatpush1.bf16.xpose.msra.mxu0 0
    %767 = vmatprep.subr.bf16.mxu0 0
    %768 = vmatpush1.bf16.xpose.msra.mxu0 0
    %769 = vmatprep.subr.bf16.mxu0 0
    %770 = vmatpush1.bf16.xpose.msra.mxu0 0
    %771 = vmatprep.subr.bf16.mxu0 0
    %772 = vmatpush1.bf16.xpose.msra.mxu0 0
    %773 = vmatprep.subr.bf16.mxu0 0
    %774 = vmatpush1.bf16.xpose.msra.mxu0 0
    %775 = vmatprep.subr.bf16.mxu0 0
    %776 = vmatpush1.bf16.xpose.msra.mxu0 0
    %777 = vmatprep.subr.bf16.mxu0 0
    %778 = vmatpush1.bf16.xpose.msra.mxu0 0
    %779 = vmatprep.subr.bf16.mxu0 0
    %780 = vmatpush1.bf16.xpose.msra.mxu0 0
    %781 = vmatprep.subr.bf16.mxu0 0
    %782 = vmatpush1.bf16.xpose.msra.mxu0 0
    %783 = vmatprep.mubr.bf16.mxu0 0
    %784 = vmatmul.mubr.bf16.gmra.mrb[0].mxu0 %v734
    %v785 = vpop.f32.mrb[0].mxu0
    %v786 = vadd.f32 %v281, %v785
    %v787 = vpop.f32.mrb[0].mxu0
    %v788 = vpop.f32.mrb[0].mxu0
    %v789 = vadd.f32 %v282, %v788
    %v790 = vpop.f32.mrb[0].mxu0
    %791 = vmatprep.mubr.bf16.mxu0 0
    %792 = vmatmul.mubr.bf16.gmra.mrb[0].mxu0 %v737
    %v793 = vpop.f32.mrb[0].mxu0
    %v794 = vadd.f32 %v283, %v793
    %v795 = vpop.f32.mrb[0].mxu0
    %v796 = vpop.f32.mrb[0].mxu0
    %v797 = vadd.f32 %v284, %v796
    %v798 = vpop.f32.mrb[0].mxu0
    %799 = vmatprep.mubr.bf16.mxu0 0
    %800 = vmatmul.mubr.bf16.gmra.mrb[0].mxu0 %v740
    %v801 = vpop.f32.mrb[0].mxu0
    %v802 = vadd.f32 %v285, %v801
    %v803 = vpop.f32.mrb[0].mxu0
    %v804 = vpop.f32.mrb[0].mxu0
    %v805 = vadd.f32 %v286, %v804
    %v806 = vpop.f32.mrb[0].mxu0
    %807 = vdwg.mxu0
    %v808 = vsel %vm573, %v786, -inf
    %809 = vmax.xlane.f32.xlu0 %v808
    %v810 = vpop.xlane.xlu0 %809
    %v811 = vsel %vm573, %v789, -inf
    %812 = vmax.xlane.f32.xlu0 %v811
    %v813 = vpop.xlane.xlu0 %812
    %v814 = vsel %vm573, %v794, -inf
    %815 = vmax.xlane.f32.xlu0 %v814
    %v816 = vpop.xlane.xlu0 %815
    %v817 = vsel %vm573, %v797, -inf
    %818 = vmax.xlane.f32.xlu0 %v817
    %v819 = vpop.xlane.xlu0 %818
    %v820 = vsel %vm573, %v802, -inf
    %821 = vmax.xlane.f32.xlu0 %v820
    %v822 = vpop.xlane.xlu0 %821
    %v823 = vsel %vm573, %v805, -inf
    %824 = vmax.xlane.f32.xlu0 %v823
    %v825 = vpop.xlane.xlu0 %824
    %v826 = vsub.f32 %v786, %v810
    %v827 = vsub.f32 %v789, %v813
    %v828 = vsub.f32 %v794, %v816
    %v829 = vsub.f32 %v797, %v819
    %v830 = vsub.f32 %v802, %v822
    %v831 = vsub.f32 %v805, %v825
    %v832 = vmul.f32 %v826, 1.442695
    %v833 = vpow.pop %v832
    %v834 = vmul.f32 %v827, 1.442695
    %v835 = vpow.pop %v834
    %v836 = vmul.f32 %v828, 1.442695
    %v837 = vpow.pop %v836
    %v838 = vmul.f32 %v829, 1.442695
    %v839 = vpow.pop %v838
    %v840 = vmul.f32 %v830, 1.442695
    %v841 = vpow.pop %v840
    %v842 = vmul.f32 %v831, 1.442695
    %v843 = vpow.pop %v842
    %v844 = vsel %vm573, %v833, 0.0
    %845 = vadd.xlane.f32.xlu0 %v844
    %v846 = vpop.xlane.xlu0 %845
    %v847 = vsel %vm573, %v835, 0.0
    %848 = vadd.xlane.f32.xlu0 %v847
    %v849 = vpop.xlane.xlu0 %848
    %v850 = vsel %vm573, %v837, 0.0
    %851 = vadd.xlane.f32.xlu0 %v850
    %v852 = vpop.xlane.xlu0 %851
    %v853 = vsel %vm573, %v839, 0.0
    %854 = vadd.xlane.f32.xlu0 %v853
    %v855 = vpop.xlane.xlu0 %854
    %v856 = vsel %vm573, %v841, 0.0
    %857 = vadd.xlane.f32.xlu0 %v856
    %v858 = vpop.xlane.xlu0 %857
    %v859 = vsel %vm573, %v843, 0.0
    %860 = vadd.xlane.f32.xlu0 %v859
    %v861 = vpop.xlane.xlu0 %860
    %v862 = vrcp.pop %v846
    %v863 = vrcp.pop %v849
    %v864 = vrcp.pop %v852
    %v865 = vrcp.pop %v855
    %v866 = vrcp.pop %v858
    %v867 = vrcp.pop %v861
    %v868 = vmul.f32 %v833, %v862
    %v869 = vmul.f32 %v835, %v863
    %v870 = vmul.f32 %v837, %v864
    %v871 = vmul.f32 %v839, %v865
    %v872 = vmul.f32 %v841, %v866
    %v873 = vmul.f32 %v843, %v867
    %v874 = vpack.c.bf16 %v869, %v868
    %v875 = vpack.c.bf16 %v871, %v870
    %v876 = vpack.c.bf16 %v873, %v872
    %877 = vrot.lane.b32.xlu0 %v485, 56
    %v878 = vpop.permute.xlu0 %877
    %879 = vrot.lane.b32.xlu0 %v486, 56
    %v880 = vpop.permute.xlu0 %879
    %881 = vrot.lane.b32.xlu0 %v487, 56
    %v882 = vpop.permute.xlu0 %881
    %v887 = vsel %vm573, %v874, 0
    %v890 = vsel %vm573, %v875, 0
    %v893 = vsel %vm573, %v876, 0
    %895 = vmatprep.subr.bf16.mxu0 0
    %896 = vmatpush1.bf16.msra.mxu0 %v878
    %897 = vmatprep.subr.bf16.mxu0 0
    %898 = vmatpush1.bf16.msra.mxu0 %v880
    %899 = vmatprep.subr.bf16.mxu0 0
    %900 = vmatpush1.bf16.msra.mxu0 %v882
    %901 = vmatprep.subr.bf16.mxu0 0
    %902 = vmatpush1.bf16.msra.mxu0 0
    %903 = vmatprep.subr.bf16.mxu0 0
    %904 = vmatpush1.bf16.msra.mxu0 0
    %905 = vmatprep.subr.bf16.mxu0 0
    %906 = vmatpush1.bf16.msra.mxu0 0
    %907 = vmatprep.subr.bf16.mxu0 0
    %908 = vmatpush1.bf16.msra.mxu0 0
    %909 = vmatprep.subr.bf16.mxu0 0
    %910 = vmatpush1.bf16.msra.mxu0 0
    %911 = vmatprep.subr.bf16.mxu0 0
    %912 = vmatpush1.bf16.msra.mxu0 0
    %913 = vmatprep.subr.bf16.mxu0 0
    %914 = vmatpush1.bf16.msra.mxu0 0
    %915 = vmatprep.subr.bf16.mxu0 0
    %916 = vmatpush1.bf16.msra.mxu0 0
    %917 = vmatprep.subr.bf16.mxu0 0
    %918 = vmatpush1.bf16.msra.mxu0 0
    %919 = vmatprep.subr.bf16.mxu0 0
    %920 = vmatpush1.bf16.msra.mxu0 0
    %921 = vmatprep.subr.bf16.mxu0 0
    %922 = vmatpush1.bf16.msra.mxu0 0
    %923 = vmatprep.subr.bf16.mxu0 0
    %924 = vmatpush1.bf16.msra.mxu0 0
    %925 = vmatprep.subr.bf16.mxu0 0
    %926 = vmatpush1.bf16.msra.mxu0 0
    %927 = vmatprep.mubr.bf16.mxu0 0
    %928 = vmatmul.mubr.bf16.gmra.mrb[0].mxu0 %v887
    %v929 = vpop.f32.mrb[0].mxu0
    %v930 = vadd.f32 0.0, %v929
    %v931 = vpop.f32.mrb[0].mxu0
    %v932 = vpop.f32.mrb[0].mxu0
    %v933 = vadd.f32 0.0, %v932
    %v934 = vpop.f32.mrb[0].mxu0
    %935 = vmatprep.mubr.bf16.mxu0 0
    %936 = vmatmul.mubr.bf16.gmra.mrb[0].mxu0 %v890
    %v937 = vpop.f32.mrb[0].mxu0
    %v938 = vadd.f32 0.0, %v937
    %v939 = vpop.f32.mrb[0].mxu0
    %v940 = vpop.f32.mrb[0].mxu0
    %v941 = vadd.f32 0.0, %v940
    %v942 = vpop.f32.mrb[0].mxu0
    %943 = vmatprep.mubr.bf16.mxu0 0
    %944 = vmatmul.mubr.bf16.gmra.mrb[0].mxu0 %v893
    %v945 = vpop.f32.mrb[0].mxu0
    %v946 = vadd.f32 0.0, %v945
    %v947 = vpop.f32.mrb[0].mxu0
    %v948 = vpop.f32.mrb[0].mxu0
    %v949 = vadd.f32 0.0, %v948
    %v950 = vpop.f32.mrb[0].mxu0
    %951 = vdwg.mxu0
    %v952 = vpack.c.bf16 %v933, %v930
    %v953 = vpack.c.bf16 %v941, %v938
    %v954 = vpack.c.bf16 %v949, %v946
    %955 = vrot.lane.b32.xlu0 %v485, 112
    %v956 = vpop.permute.xlu0 %955
    %957 = vrot.lane.b32.xlu0 %v486, 112
    %v958 = vpop.permute.xlu0 %957
    %959 = vrot.lane.b32.xlu0 %v487, 112
    %v960 = vpop.permute.xlu0 %959
    %961 = vrot.lane.b32.xlu0 %v485, 80
    %v962 = vpop.permute.xlu0 %961
    %963 = vrot.lane.b32.xlu0 %v486, 80
    %v964 = vpop.permute.xlu0 %963
    %965 = vrot.lane.b32.xlu0 %v487, 80
    %v966 = vpop.permute.xlu0 %965
    %v968 = vsel %vm497, %v956, 0
    %v971 = vsel %vm497, %v958, 0
    %v974 = vsel %vm497, %v960, 0
    %v977 = vsel %vm497, %v962, 0
    %v980 = vsel %vm497, %v964, 0
    %v983 = vsel %vm497, %v966, 0
    %985 = vmatprep.subr.bf16.mxu0 0
    %986 = vmatpush1.bf16.xpose.msra.mxu0 %v977
    %987 = vmatprep.subr.bf16.mxu0 0
    %988 = vmatpush1.bf16.xpose.msra.mxu0 %v980
    %989 = vmatprep.subr.bf16.mxu0 0
    %990 = vmatpush1.bf16.xpose.msra.mxu0 %v983
    %991 = vmatprep.subr.bf16.mxu0 0
    %992 = vmatpush1.bf16.xpose.msra.mxu0 0
    %993 = vmatprep.subr.bf16.mxu0 0
    %994 = vmatpush1.bf16.xpose.msra.mxu0 0
    %995 = vmatprep.subr.bf16.mxu0 0
    %996 = vmatpush1.bf16.xpose.msra.mxu0 0
    %997 = vmatprep.subr.bf16.mxu0 0
    %998 = vmatpush1.bf16.xpose.msra.mxu0 0
    %999 = vmatprep.subr.bf16.mxu0 0
    %1000 = vmatpush1.bf16.xpose.msra.mxu0 0
    %1001 = vmatprep.subr.bf16.mxu0 0
    %1002 = vmatpush1.bf16.xpose.msra.mxu0 0
    %1003 = vmatprep.subr.bf16.mxu0 0
    %1004 = vmatpush1.bf16.xpose.msra.mxu0 0
    %1005 = vmatprep.subr.bf16.mxu0 0
    %1006 = vmatpush1.bf16.xpose.msra.mxu0 0
    %1007 = vmatprep.subr.bf16.mxu0 0
    %1008 = vmatpush1.bf16.xpose.msra.mxu0 0
    %1009 = vmatprep.subr.bf16.mxu0 0
    %1010 = vmatpush1.bf16.xpose.msra.mxu0 0
    %1011 = vmatprep.subr.bf16.mxu0 0
    %1012 = vmatpush1.bf16.xpose.msra.mxu0 0
    %1013 = vmatprep.subr.bf16.mxu0 0
    %1014 = vmatpush1.bf16.xpose.msra.mxu0 0
    %1015 = vmatprep.subr.bf16.mxu0 0
    %1016 = vmatpush1.bf16.xpose.msra.mxu0 0
    %1017 = vmatprep.mubr.bf16.mxu0 0
    %1018 = vmatmul.mubr.bf16.gmra.mrb[0].mxu0 %v968
    %v1019 = vpop.f32.mrb[0].mxu0
    %v1020 = vadd.f32 %v281, %v1019
    %v1021 = vpop.f32.mrb[0].mxu0
    %v1022 = vpop.f32.mrb[0].mxu0
    %v1023 = vadd.f32 %v282, %v1022
    %v1024 = vpop.f32.mrb[0].mxu0
    %1025 = vmatprep.mubr.bf16.mxu0 0
    %1026 = vmatmul.mubr.bf16.gmra.mrb[0].mxu0 %v971
    %v1027 = vpop.f32.mrb[0].mxu0
    %v1028 = vadd.f32 %v283, %v1027
    %v1029 = vpop.f32.mrb[0].mxu0
    %v1030 = vpop.f32.mrb[0].mxu0
    %v1031 = vadd.f32 %v284, %v1030
    %v1032 = vpop.f32.mrb[0].mxu0
    %1033 = vmatprep.mubr.bf16.mxu0 0
    %1034 = vmatmul.mubr.bf16.gmra.mrb[0].mxu0 %v974
    %v1035 = vpop.f32.mrb[0].mxu0
    %v1036 = vadd.f32 %v285, %v1035
    %v1037 = vpop.f32.mrb[0].mxu0
    %v1038 = vpop.f32.mrb[0].mxu0
    %v1039 = vadd.f32 %v286, %v1038
    %v1040 = vpop.f32.mrb[0].mxu0
    %1041 = vdwg.mxu0
    %v1042 = vsel %vm573, %v1020, -inf
    %1043 = vmax.xlane.f32.xlu0 %v1042
    %v1044 = vpop.xlane.xlu0 %1043
    %v1045 = vsel %vm573, %v1023, -inf
    %1046 = vmax.xlane.f32.xlu0 %v1045
    %v1047 = vpop.xlane.xlu0 %1046
    %v1048 = vsel %vm573, %v1028, -inf
    %1049 = vmax.xlane.f32.xlu0 %v1048
    %v1050 = vpop.xlane.xlu0 %1049
    %v1051 = vsel %vm573, %v1031, -inf
    %1052 = vmax.xlane.f32.xlu0 %v1051
    %v1053 = vpop.xlane.xlu0 %1052
    %v1054 = vsel %vm573, %v1036, -inf
    %1055 = vmax.xlane.f32.xlu0 %v1054
    %v1056 = vpop.xlane.xlu0 %1055
    %v1057 = vsel %vm573, %v1039, -inf
    %1058 = vmax.xlane.f32.xlu0 %v1057
    %v1059 = vpop.xlane.xlu0 %1058
    %v1060 = vsub.f32 %v1020, %v1044
    %v1061 = vsub.f32 %v1023, %v1047
    %v1062 = vsub.f32 %v1028, %v1050
    %v1063 = vsub.f32 %v1031, %v1053
    %v1064 = vsub.f32 %v1036, %v1056
    %v1065 = vsub.f32 %v1039, %v1059
    %v1066 = vmul.f32 %v1060, 1.442695
    %v1067 = vpow.pop %v1066
    %v1068 = vmul.f32 %v1061, 1.442695
    %v1069 = vpow.pop %v1068
    %v1070 = vmul.f32 %v1062, 1.442695
    %v1071 = vpow.pop %v1070
    %v1072 = vmul.f32 %v1063, 1.442695
    %v1073 = vpow.pop %v1072
    %v1074 = vmul.f32 %v1064, 1.442695
    %v1075 = vpow.pop %v1074
    %v1076 = vmul.f32 %v1065, 1.442695
    %v1077 = vpow.pop %v1076
    %v1078 = vsel %vm573, %v1067, 0.0
    %1079 = vadd.xlane.f32.xlu0 %v1078
    %v1080 = vpop.xlane.xlu0 %1079
    %v1081 = vsel %vm573, %v1069, 0.0
    %1082 = vadd.xlane.f32.xlu0 %v1081
    %v1083 = vpop.xlane.xlu0 %1082
    %v1084 = vsel %vm573, %v1071, 0.0
    %1085 = vadd.xlane.f32.xlu0 %v1084
    %v1086 = vpop.xlane.xlu0 %1085
    %v1087 = vsel %vm573, %v1073, 0.0
    %1088 = vadd.xlane.f32.xlu0 %v1087
    %v1089 = vpop.xlane.xlu0 %1088
    %v1090 = vsel %vm573, %v1075, 0.0
    %1091 = vadd.xlane.f32.xlu0 %v1090
    %v1092 = vpop.xlane.xlu0 %1091
    %v1093 = vsel %vm573, %v1077, 0.0
    %1094 = vadd.xlane.f32.xlu0 %v1093
    %v1095 = vpop.xlane.xlu0 %1094
    %v1096 = vrcp.pop %v1080
    %v1097 = vrcp.pop %v1083
    %v1098 = vrcp.pop %v1086
    %v1099 = vrcp.pop %v1089
    %v1100 = vrcp.pop %v1092
    %v1101 = vrcp.pop %v1095
    %v1102 = vmul.f32 %v1067, %v1096
    %v1103 = vmul.f32 %v1069, %v1097
    %v1104 = vmul.f32 %v1071, %v1098
    %v1105 = vmul.f32 %v1073, %v1099
    %v1106 = vmul.f32 %v1075, %v1100
    %v1107 = vmul.f32 %v1077, %v1101
    %v1108 = vpack.c.bf16 %v1103, %v1102
    %v1109 = vpack.c.bf16 %v1105, %v1104
    %v1110 = vpack.c.bf16 %v1107, %v1106
    %1111 = vrot.lane.b32.xlu0 %v485, 48
    %v1112 = vpop.permute.xlu0 %1111
    %1113 = vrot.lane.b32.xlu0 %v486, 48
    %v1114 = vpop.permute.xlu0 %1113
    %1115 = vrot.lane.b32.xlu0 %v487, 48
    %v1116 = vpop.permute.xlu0 %1115
    %v1121 = vsel %vm573, %v1108, 0
    %v1124 = vsel %vm573, %v1109, 0
    %v1127 = vsel %vm573, %v1110, 0
    %1129 = vmatprep.subr.bf16.mxu0 0
    %1130 = vmatpush1.bf16.msra.mxu0 %v1112
    %1131 = vmatprep.subr.bf16.mxu0 0
    %1132 = vmatpush1.bf16.msra.mxu0 %v1114
    %1133 = vmatprep.subr.bf16.mxu0 0
    %1134 = vmatpush1.bf16.msra.mxu0 %v1116
    %1135 = vmatprep.subr.bf16.mxu0 0
    %1136 = vmatpush1.bf16.msra.mxu0 0
    %1137 = vmatprep.subr.bf16.mxu0 0
    %1138 = vmatpush1.bf16.msra.mxu0 0
    %1139 = vmatprep.subr.bf16.mxu0 0
    %1140 = vmatpush1.bf16.msra.mxu0 0
    %1141 = vmatprep.subr.bf16.mxu0 0
    %1142 = vmatpush1.bf16.msra.mxu0 0
    %1143 = vmatprep.subr.bf16.mxu0 0
    %1144 = vmatpush1.bf16.msra.mxu0 0
    %1145 = vmatprep.subr.bf16.mxu0 0
    %1146 = vmatpush1.bf16.msra.mxu0 0
    %1147 = vmatprep.subr.bf16.mxu0 0
    %1148 = vmatpush1.bf16.msra.mxu0 0
    %1149 = vmatprep.subr.bf16.mxu0 0
    %1150 = vmatpush1.bf16.msra.mxu0 0
    %1151 = vmatprep.subr.bf16.mxu0 0
    %1152 = vmatpush1.bf16.msra.mxu0 0
    %1153 = vmatprep.subr.bf16.mxu0 0
    %1154 = vmatpush1.bf16.msra.mxu0 0
    %1155 = vmatprep.subr.bf16.mxu0 0
    %1156 = vmatpush1.bf16.msra.mxu0 0
    %1157 = vmatprep.subr.bf16.mxu0 0
    %1158 = vmatpush1.bf16.msra.mxu0 0
    %1159 = vmatprep.subr.bf16.mxu0 0
    %1160 = vmatpush1.bf16.msra.mxu0 0
    %1161 = vmatprep.mubr.bf16.mxu0 0
    %1162 = vmatmul.mubr.bf16.gmra.mrb[0].mxu0 %v1121
    %v1163 = vpop.f32.mrb[0].mxu0
    %v1164 = vadd.f32 0.0, %v1163
    %v1165 = vpop.f32.mrb[0].mxu0
    %v1166 = vpop.f32.mrb[0].mxu0
    %v1167 = vadd.f32 0.0, %v1166
    %v1168 = vpop.f32.mrb[0].mxu0
    %1169 = vmatprep.mubr.bf16.mxu0 0
    %1170 = vmatmul.mubr.bf16.gmra.mrb[0].mxu0 %v1124
    %v1171 = vpop.f32.mrb[0].mxu0
    %v1172 = vadd.f32 0.0, %v1171
    %v1173 = vpop.f32.mrb[0].mxu0
    %v1174 = vpop.f32.mrb[0].mxu0
    %v1175 = vadd.f32 0.0, %v1174
    %v1176 = vpop.f32.mrb[0].mxu0
    %1177 = vmatprep.mubr.bf16.mxu0 0
    %1178 = vmatmul.mubr.bf16.gmra.mrb[0].mxu0 %v1127
    %v1179 = vpop.f32.mrb[0].mxu0
    %v1180 = vadd.f32 0.0, %v1179
    %v1181 = vpop.f32.mrb[0].mxu0
    %v1182 = vpop.f32.mrb[0].mxu0
    %v1183 = vadd.f32 0.0, %v1182
    %v1184 = vpop.f32.mrb[0].mxu0
    %1185 = vdwg.mxu0
    %v1186 = vpack.c.bf16 %v1167, %v1164
    %v1187 = vpack.c.bf16 %v1175, %v1172
    %v1188 = vpack.c.bf16 %v1183, %v1180
    %1189 = vrot.lane.b32.xlu0 %v485, 104
    %v1190 = vpop.permute.xlu0 %1189
    %1191 = vrot.lane.b32.xlu0 %v486, 104
    %v1192 = vpop.permute.xlu0 %1191
    %1193 = vrot.lane.b32.xlu0 %v487, 104
    %v1194 = vpop.permute.xlu0 %1193
    %1195 = vrot.lane.b32.xlu0 %v485, 72
    %v1196 = vpop.permute.xlu0 %1195
    %1197 = vrot.lane.b32.xlu0 %v486, 72
    %v1198 = vpop.permute.xlu0 %1197
    %1199 = vrot.lane.b32.xlu0 %v487, 72
    %v1200 = vpop.permute.xlu0 %1199
    %v1202 = vsel %vm497, %v1190, 0
    %v1205 = vsel %vm497, %v1192, 0
    %v1208 = vsel %vm497, %v1194, 0
    %v1211 = vsel %vm497, %v1196, 0
    %v1214 = vsel %vm497, %v1198, 0
    %v1217 = vsel %vm497, %v1200, 0
    %1219 = vmatprep.subr.bf16.mxu0 0
    %1220 = vmatpush1.bf16.xpose.msra.mxu0 %v1211
    %1221 = vmatprep.subr.bf16.mxu0 0
    %1222 = vmatpush1.bf16.xpose.msra.mxu0 %v1214
    %1223 = vmatprep.subr.bf16.mxu0 0
    %1224 = vmatpush1.bf16.xpose.msra.mxu0 %v1217
    %1225 = vmatprep.subr.bf16.mxu0 0
    %1226 = vmatpush1.bf16.xpose.msra.mxu0 0
    %1227 = vmatprep.subr.bf16.mxu0 0
    %1228 = vmatpush1.bf16.xpose.msra.mxu0 0
    %1229 = vmatprep.subr.bf16.mxu0 0
    %1230 = vmatpush1.bf16.xpose.msra.mxu0 0
    %1231 = vmatprep.subr.bf16.mxu0 0
    %1232 = vmatpush1.bf16.xpose.msra.mxu0 0
    %1233 = vmatprep.subr.bf16.mxu0 0
    %1234 = vmatpush1.bf16.xpose.msra.mxu0 0
    %1235 = vmatprep.subr.bf16.mxu0 0
    %1236 = vmatpush1.bf16.xpose.msra.mxu0 0
    %1237 = vmatprep.subr.bf16.mxu0 0
    %1238 = vmatpush1.bf16.xpose.msra.mxu0 0
    %1239 = vmatprep.subr.bf16.mxu0 0
    %1240 = vmatpush1.bf16.xpose.msra.mxu0 0
    %1241 = vmatprep.subr.bf16.mxu0 0
    %1242 = vmatpush1.bf16.xpose.msra.mxu0 0
    %1243 = vmatprep.subr.bf16.mxu0 0
    %1244 = vmatpush1.bf16.xpose.msra.mxu0 0
    %1245 = vmatprep.subr.bf16.mxu0 0
    %1246 = vmatpush1.bf16.xpose.msra.mxu0 0
    %1247 = vmatprep.subr.bf16.mxu0 0
    %1248 = vmatpush1.bf16.xpose.msra.mxu0 0
    %1249 = vmatprep.subr.bf16.mxu0 0
    %1250 = vmatpush1.bf16.xpose.msra.mxu0 0
    %1251 = vmatprep.mubr.bf16.mxu0 0
    %1252 = vmatmul.mubr.bf16.gmra.mrb[0].mxu0 %v1202
    %v1253 = vpop.f32.mrb[0].mxu0
    %v1254 = vadd.f32 %v281, %v1253
    %v1255 = vpop.f32.mrb[0].mxu0
    %v1256 = vpop.f32.mrb[0].mxu0
    %v1257 = vadd.f32 %v282, %v1256
    %v1258 = vpop.f32.mrb[0].mxu0
    %1259 = vmatprep.mubr.bf16.mxu0 0
    %1260 = vmatmul.mubr.bf16.gmra.mrb[0].mxu0 %v1205
    %v1261 = vpop.f32.mrb[0].mxu0
    %v1262 = vadd.f32 %v283, %v1261
    %v1263 = vpop.f32.mrb[0].mxu0
    %v1264 = vpop.f32.mrb[0].mxu0
    %v1265 = vadd.f32 %v284, %v1264
    %v1266 = vpop.f32.mrb[0].mxu0
    %1267 = vmatprep.mubr.bf16.mxu0 0
    %1268 = vmatmul.mubr.bf16.gmra.mrb[0].mxu0 %v1208
    %v1269 = vpop.f32.mrb[0].mxu0
    %v1270 = vadd.f32 %v285, %v1269
    %v1271 = vpop.f32.mrb[0].mxu0
    %v1272 = vpop.f32.mrb[0].mxu0
    %v1273 = vadd.f32 %v286, %v1272
    %v1274 = vpop.f32.mrb[0].mxu0
    %1275 = vdwg.mxu0
    %v1276 = vsel %vm573, %v1254, -inf
    %1277 = vmax.xlane.f32.xlu0 %v1276
    %v1278 = vpop.xlane.xlu0 %1277
    %v1279 = vsel %vm573, %v1257, -inf
    %1280 = vmax.xlane.f32.xlu0 %v1279
    %v1281 = vpop.xlane.xlu0 %1280
    %v1282 = vsel %vm573, %v1262, -inf
    %1283 = vmax.xlane.f32.xlu0 %v1282
    %v1284 = vpop.xlane.xlu0 %1283
    %v1285 = vsel %vm573, %v1265, -inf
    %1286 = vmax.xlane.f32.xlu0 %v1285
    %v1287 = vpop.xlane.xlu0 %1286
    %v1288 = vsel %vm573, %v1270, -inf
    %1289 = vmax.xlane.f32.xlu0 %v1288
    %v1290 = vpop.xlane.xlu0 %1289
    %v1291 = vsel %vm573, %v1273, -inf
    %1292 = vmax.xlane.f32.xlu0 %v1291
    %v1293 = vpop.xlane.xlu0 %1292
    %v1294 = vsub.f32 %v1254, %v1278
    %v1295 = vsub.f32 %v1257, %v1281
    %v1296 = vsub.f32 %v1262, %v1284
    %v1297 = vsub.f32 %v1265, %v1287
    %v1298 = vsub.f32 %v1270, %v1290
    %v1299 = vsub.f32 %v1273, %v1293
    %v1300 = vmul.f32 %v1294, 1.442695
    %v1301 = vpow.pop %v1300
    %v1302 = vmul.f32 %v1295, 1.442695
    %v1303 = vpow.pop %v1302
    %v1304 = vmul.f32 %v1296, 1.442695
    %v1305 = vpow.pop %v1304
    %v1306 = vmul.f32 %v1297, 1.442695
    %v1307 = vpow.pop %v1306
    %v1308 = vmul.f32 %v1298, 1.442695
    %v1309 = vpow.pop %v1308
    %v1310 = vmul.f32 %v1299, 1.442695
    %v1311 = vpow.pop %v1310
    %v1312 = vsel %vm573, %v1301, 0.0
    %1313 = vadd.xlane.f32.xlu0 %v1312
    %v1314 = vpop.xlane.xlu0 %1313
    %v1315 = vsel %vm573, %v1303, 0.0
    %1316 = vadd.xlane.f32.xlu0 %v1315
    %v1317 = vpop.xlane.xlu0 %1316
    %v1318 = vsel %vm573, %v1305, 0.0
    %1319 = vadd.xlane.f32.xlu0 %v1318
    %v1320 = vpop.xlane.xlu0 %1319
    %v1321 = vsel %vm573, %v1307, 0.0
    %1322 = vadd.xlane.f32.xlu0 %v1321
    %v1323 = vpop.xlane.xlu0 %1322
    %v1324 = vsel %vm573, %v1309, 0.0
    %1325 = vadd.xlane.f32.xlu0 %v1324
    %v1326 = vpop.xlane.xlu0 %1325
    %v1327 = vsel %vm573, %v1311, 0.0
    %1328 = vadd.xlane.f32.xlu0 %v1327
    %v1329 = vpop.xlane.xlu0 %1328
    %v1330 = vrcp.pop %v1314
    %v1331 = vrcp.pop %v1317
    %v1332 = vrcp.pop %v1320
    %v1333 = vrcp.pop %v1323
    %v1334 = vrcp.pop %v1326
    %v1335 = vrcp.pop %v1329
    %v1336 = vmul.f32 %v1301, %v1330
    %v1337 = vmul.f32 %v1303, %v1331
    %v1338 = vmul.f32 %v1305, %v1332
    %v1339 = vmul.f32 %v1307, %v1333
    %v1340 = vmul.f32 %v1309, %v1334
    %v1341 = vmul.f32 %v1311, %v1335
    %v1342 = vpack.c.bf16 %v1337, %v1336
    %v1343 = vpack.c.bf16 %v1339, %v1338
    %v1344 = vpack.c.bf16 %v1341, %v1340
    %1345 = vrot.lane.b32.xlu0 %v485, 40
    %v1346 = vpop.permute.xlu0 %1345
    %1347 = vrot.lane.b32.xlu0 %v486, 40
    %v1348 = vpop.permute.xlu0 %1347
    %1349 = vrot.lane.b32.xlu0 %v487, 40
    %v1350 = vpop.permute.xlu0 %1349
    %v1355 = vsel %vm573, %v1342, 0
    %v1358 = vsel %vm573, %v1343, 0
    %v1361 = vsel %vm573, %v1344, 0
    %1363 = vmatprep.subr.bf16.mxu0 0
    %1364 = vmatpush1.bf16.msra.mxu0 %v1346
    %1365 = vmatprep.subr.bf16.mxu0 0
    %1366 = vmatpush1.bf16.msra.mxu0 %v1348
    %1367 = vmatprep.subr.bf16.mxu0 0
    %1368 = vmatpush1.bf16.msra.mxu0 %v1350
    %1369 = vmatprep.subr.bf16.mxu0 0
    %1370 = vmatpush1.bf16.msra.mxu0 0
    %1371 = vmatprep.subr.bf16.mxu0 0
    %1372 = vmatpush1.bf16.msra.mxu0 0
    %1373 = vmatprep.subr.bf16.mxu0 0
    %1374 = vmatpush1.bf16.msra.mxu0 0
    %1375 = vmatprep.subr.bf16.mxu0 0
    %1376 = vmatpush1.bf16.msra.mxu0 0
    %1377 = vmatprep.subr.bf16.mxu0 0
    %1378 = vmatpush1.bf16.msra.mxu0 0
    %1379 = vmatprep.subr.bf16.mxu0 0
    %1380 = vmatpush1.bf16.msra.mxu0 0
    %1381 = vmatprep.subr.bf16.mxu0 0
    %1382 = vmatpush1.bf16.msra.mxu0 0
    %1383 = vmatprep.subr.bf16.mxu0 0
    %1384 = vmatpush1.bf16.msra.mxu0 0
    %1385 = vmatprep.subr.bf16.mxu0 0
    %1386 = vmatpush1.bf16.msra.mxu0 0
    %1387 = vmatprep.subr.bf16.mxu0 0
    %1388 = vmatpush1.bf16.msra.mxu0 0
    %1389 = vmatprep.subr.bf16.mxu0 0
    %1390 = vmatpush1.bf16.msra.mxu0 0
    %1391 = vmatprep.subr.bf16.mxu0 0
    %1392 = vmatpush1.bf16.msra.mxu0 0
    %1393 = vmatprep.subr.bf16.mxu0 0
    %1394 = vmatpush1.bf16.msra.mxu0 0
    %1395 = vmatprep.mubr.bf16.mxu0 0
    %1396 = vmatmul.mubr.bf16.gmra.mrb[0].mxu0 %v1355
    %v1397 = vpop.f32.mrb[0].mxu0
    %v1398 = vadd.f32 0.0, %v1397
    %v1399 = vpop.f32.mrb[0].mxu0
    %v1400 = vpop.f32.mrb[0].mxu0
    %v1401 = vadd.f32 0.0, %v1400
    %v1402 = vpop.f32.mrb[0].mxu0
    %1403 = vmatprep.mubr.bf16.mxu0 0
    %1404 = vmatmul.mubr.bf16.gmra.mrb[0].mxu0 %v1358
    %v1405 = vpop.f32.mrb[0].mxu0
    %v1406 = vadd.f32 0.0, %v1405
    %v1407 = vpop.f32.mrb[0].mxu0
    %v1408 = vpop.f32.mrb[0].mxu0
    %v1409 = vadd.f32 0.0, %v1408
    %v1410 = vpop.f32.mrb[0].mxu0
    %1411 = vmatprep.mubr.bf16.mxu0 0
    %1412 = vmatmul.mubr.bf16.gmra.mrb[0].mxu0 %v1361
    %v1413 = vpop.f32.mrb[0].mxu0
    %v1414 = vadd.f32 0.0, %v1413
    %v1415 = vpop.f32.mrb[0].mxu0
    %v1416 = vpop.f32.mrb[0].mxu0
    %v1417 = vadd.f32 0.0, %v1416
    %v1418 = vpop.f32.mrb[0].mxu0
    %1419 = vdwg.mxu0
    %v1420 = vpack.c.bf16 %v1401, %v1398
    %v1421 = vpack.c.bf16 %v1409, %v1406
    %v1422 = vpack.c.bf16 %v1417, %v1414
    %1426 = vrot.lane.b32.xlu0 %v952, 8
    %v1427 = vpop.permute.xlu0 %1426
    %1428 = vrot.lane.b32.xlu0 %v953, 8
    %v1429 = vpop.permute.xlu0 %1428
    %1430 = vrot.lane.b32.xlu0 %v954, 8
    %v1431 = vpop.permute.xlu0 %1430
    %1435 = vrot.lane.b32.xlu0 %v1186, 16
    %v1436 = vpop.permute.xlu0 %1435
    %1437 = vrot.lane.b32.xlu0 %v1187, 16
    %v1438 = vpop.permute.xlu0 %1437
    %1439 = vrot.lane.b32.xlu0 %v1188, 16
    %v1440 = vpop.permute.xlu0 %1439
    %1444 = vrot.lane.b32.xlu0 %v1420, 24
    %v1445 = vpop.permute.xlu0 %1444
    %1446 = vrot.lane.b32.xlu0 %v1421, 24
    %v1447 = vpop.permute.xlu0 %1446
    %1448 = vrot.lane.b32.xlu0 %v1422, 24
    %v1449 = vpop.permute.xlu0 %1448
    %v1452 = vsel %vm497, %v718, %v1427
    %v1455 = vsel %vm497, %v719, %v1429
    %v1458 = vsel %vm497, %v720, %v1431
    %vm1459 = vcmask 130048
    %v1461 = vsel %vm1459, %v1452, %v1436
    %v1463 = vsel %vm1459, %v1455, %v1438
    %v1465 = vsel %vm1459, %v1458, %v1440
    %vm1466 = vcmask 195584
    %v1468 = vsel %vm1466, %v1461, %v1445
    %v1470 = vsel %vm1466, %v1463, %v1447
    %v1472 = vsel %vm1466, %v1465, %v1449
    %v1473 = vld [vmem:[%s8] sm:$0xf]
    %v1474 = vld [vmem:[%s8 + $0x4] sm:$0xf]
    %v1475 = vld [vmem:[%s8 + $0x8] sm:$0xf]
    %v1476 = vld [vmem:[%s8 + $0xc] sm:$0xf]
    %v1481 = vunpack.c.l.b16 %v1473
    %v1482 = vunpack.c.l.b16 %v1474
    %v1483 = vunpack.c.l.b16 %v1475
    %v1484 = vunpack.c.l.b16 %v1476
    %v1485 = vpack.c.b16 %v1482, %v1481
    %v1486 = vpack.c.b16 %v1484, %v1483
    %v1489 = vsel %vm289, %v1468, 0
    %v1491 = vsel %vm289, %v1470, 0
    %v1493 = vsel %vm289, %v1472, 0
    %1495 = vmatprep.subr.bf16.mxu0 0
    %1496 = vmatpush1.bf16.msra.mxu0 %v1485
    %1497 = vmatprep.subr.bf16.mxu0 0
    %1498 = vmatpush1.bf16.msra.mxu0 %v1486
    %1499 = vmatprep.subr.bf16.mxu0 0
    %1500 = vmatpush1.bf16.msra.mxu0 0
    %1501 = vmatprep.subr.bf16.mxu0 0
    %1502 = vmatpush1.bf16.msra.mxu0 0
    %1503 = vmatprep.subr.bf16.mxu0 0
    %1504 = vmatpush1.bf16.msra.mxu0 0
    %1505 = vmatprep.subr.bf16.mxu0 0
    %1506 = vmatpush1.bf16.msra.mxu0 0
    %1507 = vmatprep.subr.bf16.mxu0 0
    %1508 = vmatpush1.bf16.msra.mxu0 0
    %1509 = vmatprep.subr.bf16.mxu0 0
    %1510 = vmatpush1.bf16.msra.mxu0 0
    %1511 = vmatprep.subr.bf16.mxu0 0
    %1512 = vmatpush1.bf16.msra.mxu0 0
    %1513 = vmatprep.subr.bf16.mxu0 0
    %1514 = vmatpush1.bf16.msra.mxu0 0
    %1515 = vmatprep.subr.bf16.mxu0 0
    %1516 = vmatpush1.bf16.msra.mxu0 0
    %1517 = vmatprep.subr.bf16.mxu0 0
    %1518 = vmatpush1.bf16.msra.mxu0 0
    %1519 = vmatprep.subr.bf16.mxu0 0
    %1520 = vmatpush1.bf16.msra.mxu0 0
    %1521 = vmatprep.subr.bf16.mxu0 0
    %1522 = vmatpush1.bf16.msra.mxu0 0
    %1523 = vmatprep.subr.bf16.mxu0 0
    %1524 = vmatpush1.bf16.msra.mxu0 0
    %1525 = vmatprep.subr.bf16.mxu0 0
    %1526 = vmatpush1.bf16.msra.mxu0 0
    %1527 = vmatprep.mubr.bf16.mxu0 0
    %1528 = vmatmul.mubr.bf16.gmra.mrb[0].mxu0 %v1489
    %v1529 = vpop.f32.mrb[0].mxu0
    %v1530 = vadd.f32 0.0, %v1529
    %v1531 = vpop.f32.mrb[0].mxu0
    %v1532 = vpop.f32.mrb[0].mxu0
    %v1533 = vadd.f32 0.0, %v1532
    %v1534 = vpop.f32.mrb[0].mxu0
    %1535 = vmatprep.mubr.bf16.mxu0 0
    %1536 = vmatmul.mubr.bf16.gmra.mrb[0].mxu0 %v1491
    %v1537 = vpop.f32.mrb[0].mxu0
    %v1538 = vadd.f32 0.0, %v1537
    %v1539 = vpop.f32.mrb[0].mxu0
    %v1540 = vpop.f32.mrb[0].mxu0
    %v1541 = vadd.f32 0.0, %v1540
    %v1542 = vpop.f32.mrb[0].mxu0
    %1543 = vmatprep.mubr.bf16.mxu0 0
    %1544 = vmatmul.mubr.bf16.gmra.mrb[0].mxu0 %v1493
    %v1545 = vpop.f32.mrb[0].mxu0
    %v1546 = vadd.f32 0.0, %v1545
    %v1547 = vpop.f32.mrb[0].mxu0
    %v1548 = vpop.f32.mrb[0].mxu0
    %v1549 = vadd.f32 0.0, %v1548
    %v1550 = vpop.f32.mrb[0].mxu0
    %1551 = vdwg.mxu0
    %v1552 = vadd.f32 %v259, %v1530
    %v1553 = vadd.f32 %v262, %v1533
    %v1554 = vadd.f32 %v267, %v1538
    %v1555 = vadd.f32 %v270, %v1541
    %v1556 = vadd.f32 %v275, %v1546
    %v1557 = vadd.f32 %v278, %v1549
    %v1558 = vld [vmem:[%s9] sm:$0x1]
    %v1560 = vlaneseq
    %v1561 = vshrl.u32 %v1560, 7
    %v1562 = vsub.s32 0, %v1561
    %v1563 = vrot.slane %v1558, %v1562
    %v1565 = vadd.f32 %v1552, %v1563
    %v1566 = vadd.f32 %v1553, %v1563
    %v1567 = vadd.f32 %v1554, %v1563
    %v1568 = vadd.f32 %v1555, %v1563
    %v1569 = vadd.f32 %v1556, %v1563
    %v1570 = vadd.f32 %v1557, %v1563
    %v1571 = vld [vmem:[%s10] sm:$0x1]
    %v1572 = vld [vmem:[%s11] sm:$0x1]
    %v1573 = vsel %vm289, %v1565, 0.0
    %1574 = vadd.xlane.f32.xlu0 %v1573
    %v1575 = vpop.xlane.xlu0 %1574
    %v1576 = vsel %vm289, %v1566, 0.0
    %1577 = vadd.xlane.f32.xlu0 %v1576
    %v1578 = vpop.xlane.xlu0 %1577
    %v1579 = vsel %vm289, %v1567, 0.0
    %1580 = vadd.xlane.f32.xlu0 %v1579
    %v1581 = vpop.xlane.xlu0 %1580
    %v1582 = vsel %vm289, %v1568, 0.0
    %1583 = vadd.xlane.f32.xlu0 %v1582
    %v1584 = vpop.xlane.xlu0 %1583
    %v1585 = vsel %vm289, %v1569, 0.0
    %1586 = vadd.xlane.f32.xlu0 %v1585
    %v1587 = vpop.xlane.xlu0 %1586
    %v1588 = vsel %vm289, %v1570, 0.0
    %1589 = vadd.xlane.f32.xlu0 %v1588
    %v1590 = vpop.xlane.xlu0 %1589
    %v1591 = vmul.f32 %v1575, %v308
    %v1592 = vmul.f32 %v1578, %v308
    %v1593 = vmul.f32 %v1581, %v308
    %v1594 = vmul.f32 %v1584, %v308
    %v1595 = vmul.f32 %v1587, %v308
    %v1596 = vmul.f32 %v1590, %v308
    %v1597 = vsub.f32 %v1565, %v1591
    %v1598 = vsub.f32 %v1566, %v1592
    %v1599 = vsub.f32 %v1567, %v1593
    %v1600 = vsub.f32 %v1568, %v1594
    %v1601 = vsub.f32 %v1569, %v1595
    %v1602 = vsub.f32 %v1570, %v1596
    %v1603 = vmul.f32 %v1597, %v1597
    %v1604 = vmul.f32 %v1598, %v1598
    %v1605 = vmul.f32 %v1599, %v1599
    %v1606 = vmul.f32 %v1600, %v1600
    %v1607 = vmul.f32 %v1601, %v1601
    %v1608 = vmul.f32 %v1602, %v1602
    %v1609 = vsel %vm289, %v1603, 0.0
    %1610 = vadd.xlane.f32.xlu0 %v1609
    %v1611 = vpop.xlane.xlu0 %1610
    %v1612 = vsel %vm289, %v1604, 0.0
    %1613 = vadd.xlane.f32.xlu0 %v1612
    %v1614 = vpop.xlane.xlu0 %1613
    %v1615 = vsel %vm289, %v1605, 0.0
    %1616 = vadd.xlane.f32.xlu0 %v1615
    %v1617 = vpop.xlane.xlu0 %1616
    %v1618 = vsel %vm289, %v1606, 0.0
    %1619 = vadd.xlane.f32.xlu0 %v1618
    %v1620 = vpop.xlane.xlu0 %1619
    %v1621 = vsel %vm289, %v1607, 0.0
    %1622 = vadd.xlane.f32.xlu0 %v1621
    %v1623 = vpop.xlane.xlu0 %1622
    %v1624 = vsel %vm289, %v1608, 0.0
    %1625 = vadd.xlane.f32.xlu0 %v1624
    %v1626 = vpop.xlane.xlu0 %1625
    %v1627 = vmul.f32 %v1611, %v308
    %v1628 = vmul.f32 %v1614, %v308
    %v1629 = vmul.f32 %v1617, %v308
    %v1630 = vmul.f32 %v1620, %v308
    %v1631 = vmul.f32 %v1623, %v308
    %v1632 = vmul.f32 %v1626, %v308
    %v1633 = vadd.f32 %v1627, 1e-12
    %v1634 = vadd.f32 %v1628, 1e-12
    %v1635 = vadd.f32 %v1629, 1e-12
    %v1636 = vadd.f32 %v1630, 1e-12
    %v1637 = vadd.f32 %v1631, 1e-12
    %v1638 = vadd.f32 %v1632, 1e-12
    %v1639 = vrsqrt.pop %v1633
    %v1640 = vrsqrt.pop %v1634
    %v1641 = vrsqrt.pop %v1635
    %v1642 = vrsqrt.pop %v1636
    %v1643 = vrsqrt.pop %v1637
    %v1644 = vrsqrt.pop %v1638
    %v1645 = vmul.f32 %v1597, %v1639
    %v1646 = vmul.f32 %v1598, %v1640
    %v1647 = vmul.f32 %v1599, %v1641
    %v1648 = vmul.f32 %v1600, %v1642
    %v1649 = vmul.f32 %v1601, %v1643
    %v1650 = vmul.f32 %v1602, %v1644
    %v1652 = vlaneseq
    %v1653 = vshrl.u32 %v1652, 7
    %v1654 = vsub.s32 0, %v1653
    %v1655 = vrot.slane %v1571, %v1654
    %v1657 = vmul.f32 %v1645, %v1655
    %v1658 = vmul.f32 %v1646, %v1655
    %v1659 = vmul.f32 %v1647, %v1655
    %v1660 = vmul.f32 %v1648, %v1655
    %v1661 = vmul.f32 %v1649, %v1655
    %v1662 = vmul.f32 %v1650, %v1655
    %v1664 = vlaneseq
    %v1665 = vshrl.u32 %v1664, 7
    %v1666 = vsub.s32 0, %v1665
    %v1667 = vrot.slane %v1572, %v1666
    %v1669 = vadd.f32 %v1657, %v1667
    %v1670 = vadd.f32 %v1658, %v1667
    %v1671 = vadd.f32 %v1659, %v1667
    %v1672 = vadd.f32 %v1660, %v1667
    %v1673 = vadd.f32 %v1661, %v1667
    %v1674 = vadd.f32 %v1662, %v1667
    %v1675 = vld [vmem:[%s12] sm:$0xf]
    %v1676 = vld [vmem:[%s12 + $0x4] sm:$0xf]
    %v1677 = vld [vmem:[%s12 + $0x8] sm:$0xf]
    %v1678 = vld [vmem:[%s12 + $0xc] sm:$0xf]
    %v1679 = vpack.c.bf16 %v1670, %v1669
    %v1680 = vpack.c.bf16 %v1672, %v1671
    %v1681 = vpack.c.bf16 %v1674, %v1673
    %v1682 = vld [vmem:[%s13] sm:$0x1]
    %v1684 = vlaneseq
    %v1685 = vshrl.u32 %v1684, 7
    %v1686 = vsub.s32 0, %v1685
    %v1687 = vrot.slane %v1682, %v1686
    %v1693 = vunpack.c.l.b16 %v1675
    %v1694 = vunpack.c.l.b16 %v1676
    %v1695 = vunpack.c.l.b16 %v1677
    %v1696 = vunpack.c.l.b16 %v1678
    %v1697 = vpack.c.b16 %v1694, %v1693
    %v1698 = vpack.c.b16 %v1696, %v1695
    %v1702 = vsel %vm289, %v1679, 0
    %v1705 = vsel %vm289, %v1680, 0
    %v1708 = vsel %vm289, %v1681, 0
    %1710 = vmatprep.subr.bf16.mxu0 0
    %1711 = vmatpush1.bf16.msra.mxu0 %v1697
    %1712 = vmatprep.subr.bf16.mxu0 0
    %1713 = vmatpush1.bf16.msra.mxu0 %v1698
    %1714 = vmatprep.subr.bf16.mxu0 0
    %1715 = vmatpush1.bf16.msra.mxu0 0
    %1716 = vmatprep.subr.bf16.mxu0 0
    %1717 = vmatpush1.bf16.msra.mxu0 0
    %1718 = vmatprep.subr.bf16.mxu0 0
    %1719 = vmatpush1.bf16.msra.mxu0 0
    %1720 = vmatprep.subr.bf16.mxu0 0
    %1721 = vmatpush1.bf16.msra.mxu0 0
    %1722 = vmatprep.subr.bf16.mxu0 0
    %1723 = vmatpush1.bf16.msra.mxu0 0
    %1724 = vmatprep.subr.bf16.mxu0 0
    %1725 = vmatpush1.bf16.msra.mxu0 0
    %1726 = vmatprep.subr.bf16.mxu0 0
    %1727 = vmatpush1.bf16.msra.mxu0 0
    %1728 = vmatprep.subr.bf16.mxu0 0
    %1729 = vmatpush1.bf16.msra.mxu0 0
    %1730 = vmatprep.subr.bf16.mxu0 0
    %1731 = vmatpush1.bf16.msra.mxu0 0
    %1732 = vmatprep.subr.bf16.mxu0 0
    %1733 = vmatpush1.bf16.msra.mxu0 0
    %1734 = vmatprep.subr.bf16.mxu0 0
    %1735 = vmatpush1.bf16.msra.mxu0 0
    %1736 = vmatprep.subr.bf16.mxu0 0
    %1737 = vmatpush1.bf16.msra.mxu0 0
    %1738 = vmatprep.subr.bf16.mxu0 0
    %1739 = vmatpush1.bf16.msra.mxu0 0
    %1740 = vmatprep.subr.bf16.mxu0 0
    %1741 = vmatpush1.bf16.msra.mxu0 0
    %1742 = vmatprep.mubr.bf16.mxu0 0
    %1743 = vmatmul.mubr.bf16.gmra.mrb[0].mxu0 %v1702
    %v1744 = vpop.f32.mrb[0].mxu0
    %v1745 = vadd.f32 %v1687, %v1744
    %v1746 = vpop.f32.mrb[0].mxu0
    %v1747 = vpop.f32.mrb[0].mxu0
    %v1748 = vadd.f32 %v1687, %v1747
    %v1749 = vpop.f32.mrb[0].mxu0
    %1750 = vmatprep.mubr.bf16.mxu0 0
    %1751 = vmatmul.mubr.bf16.gmra.mrb[0].mxu0 %v1705
    %v1752 = vpop.f32.mrb[0].mxu0
    %v1753 = vadd.f32 %v1687, %v1752
    %v1754 = vpop.f32.mrb[0].mxu0
    %v1755 = vpop.f32.mrb[0].mxu0
    %v1756 = vadd.f32 %v1687, %v1755
    %v1757 = vpop.f32.mrb[0].mxu0
    %1758 = vmatprep.mubr.bf16.mxu0 0
    %1759 = vmatmul.mubr.bf16.gmra.mrb[0].mxu0 %v1708
    %v1760 = vpop.f32.mrb[0].mxu0
    %v1761 = vadd.f32 %v1687, %v1760
    %v1762 = vpop.f32.mrb[0].mxu0
    %v1763 = vpop.f32.mrb[0].mxu0
    %v1764 = vadd.f32 %v1687, %v1763
    %v1765 = vpop.f32.mrb[0].mxu0
    %1766 = vdwg.mxu0
    %v1767 = vmul.f32 %v1745, %v1745
    %v1768 = vmul.f32 %v1748, %v1748
    %v1769 = vmul.f32 %v1753, %v1753
    %v1770 = vmul.f32 %v1756, %v1756
    %v1771 = vmul.f32 %v1761, %v1761
    %v1772 = vmul.f32 %v1764, %v1764
    %v1773 = vmul.f32 %v1745, %v1767
    %v1774 = vmul.f32 %v1748, %v1768
    %v1775 = vmul.f32 %v1753, %v1769
    %v1776 = vmul.f32 %v1756, %v1770
    %v1777 = vmul.f32 %v1761, %v1771
    %v1778 = vmul.f32 %v1764, %v1772
    %v1779 = vmul.f32 %v1773, 0.044715
    %v1780 = vmul.f32 %v1774, 0.044715
    %v1781 = vmul.f32 %v1775, 0.044715
    %v1782 = vmul.f32 %v1776, 0.044715
    %v1783 = vmul.f32 %v1777, 0.044715
    %v1784 = vmul.f32 %v1778, 0.044715
    %v1785 = vadd.f32 %v1745, %v1779
    %v1786 = vadd.f32 %v1748, %v1780
    %v1787 = vadd.f32 %v1753, %v1781
    %v1788 = vadd.f32 %v1756, %v1782
    %v1789 = vadd.f32 %v1761, %v1783
    %v1790 = vadd.f32 %v1764, %v1784
    %v1791 = vmul.f32 %v1785, 0.7978846
    %v1792 = vmul.f32 %v1786, 0.7978846
    %v1793 = vmul.f32 %v1787, 0.7978846
    %v1794 = vmul.f32 %v1788, 0.7978846
    %v1795 = vmul.f32 %v1789, 0.7978846
    %v1796 = vmul.f32 %v1790, 0.7978846
    %v1797 = vtanh.pop %v1791
    %v1798 = vtanh.pop %v1792
    %v1799 = vtanh.pop %v1793
    %v1800 = vtanh.pop %v1794
    %v1801 = vtanh.pop %v1795
    %v1802 = vtanh.pop %v1796
    %v1803 = vadd.f32 %v1797, 1.0
    %v1804 = vadd.f32 %v1798, 1.0
    %v1805 = vadd.f32 %v1799, 1.0
    %v1806 = vadd.f32 %v1800, 1.0
    %v1807 = vadd.f32 %v1801, 1.0
    %v1808 = vadd.f32 %v1802, 1.0
    %v1809 = vmul.f32 %v1803, 0.5
    %v1810 = vmul.f32 %v1804, 0.5
    %v1811 = vmul.f32 %v1805, 0.5
    %v1812 = vmul.f32 %v1806, 0.5
    %v1813 = vmul.f32 %v1807, 0.5
    %v1814 = vmul.f32 %v1808, 0.5
    %v1815 = vmul.f32 %v1745, %v1809
    %v1816 = vmul.f32 %v1748, %v1810
    %v1817 = vmul.f32 %v1753, %v1811
    %v1818 = vmul.f32 %v1756, %v1812
    %v1819 = vmul.f32 %v1761, %v1813
    %v1820 = vmul.f32 %v1764, %v1814
    %v1821 = vld [vmem:[%s14] sm:$0xf]
    %v1822 = vld [vmem:[%s14 + $0x4] sm:$0xf]
    %v1823 = vld [vmem:[%s14 + $0x8] sm:$0xf]
    %v1824 = vld [vmem:[%s14 + $0xc] sm:$0xf]
    %v1825 = vld [vmem:[%s14 + $0x10] sm:$0xf]
    %v1826 = vld [vmem:[%s14 + $0x14] sm:$0xf]
    %v1827 = vld [vmem:[%s14 + $0x18] sm:$0xf]
    %v1828 = vld [vmem:[%s14 + $0x1c] sm:$0xf]
    %v1829 = vld [vmem:[%s14 + $0x20] sm:$0xf]
    %v1830 = vld [vmem:[%s14 + $0x24] sm:$0xf]
    %v1831 = vld [vmem:[%s14 + $0x28] sm:$0xf]
    %v1832 = vld [vmem:[%s14 + $0x2c] sm:$0xf]
    %v1833 = vld [vmem:[%s14 + $0x30] sm:$0xf]
    %v1834 = vld [vmem:[%s14 + $0x34] sm:$0xf]
    %v1835 = vld [vmem:[%s14 + $0x38] sm:$0xf]
    %v1836 = vld [vmem:[%s14 + $0x3c] sm:$0xf]
    %v1837 = vpack.c.bf16 %v1816, %v1815
    %v1838 = vpack.c.bf16 %v1818, %v1817
    %v1839 = vpack.c.bf16 %v1820, %v1819
    %v1856 = vunpack.c.l.b16 %v1821
    %v1857 = vunpack.c.l.b16 %v1822
    %v1858 = vunpack.c.l.b16 %v1823
    %v1859 = vunpack.c.l.b16 %v1824
    %v1860 = vunpack.c.l.b16 %v1825
    %v1861 = vunpack.c.l.b16 %v1826
    %v1862 = vunpack.c.l.b16 %v1827
    %v1863 = vunpack.c.l.b16 %v1828
    %v1864 = vunpack.c.l.b16 %v1829
    %v1865 = vunpack.c.l.b16 %v1830
    %v1866 = vunpack.c.l.b16 %v1831
    %v1867 = vunpack.c.l.b16 %v1832
    %v1868 = vunpack.c.l.b16 %v1833
    %v1869 = vunpack.c.l.b16 %v1834
    %v1870 = vunpack.c.l.b16 %v1835
    %v1871 = vunpack.c.l.b16 %v1836
    %v1872 = vpack.c.b16 %v1857, %v1856
    %v1873 = vpack.c.b16 %v1859, %v1858
    %v1874 = vpack.c.b16 %v1861, %v1860
    %v1875 = vpack.c.b16 %v1863, %v1862
    %v1876 = vpack.c.b16 %v1865, %v1864
    %v1877 = vpack.c.b16 %v1867, %v1866
    %v1878 = vpack.c.b16 %v1869, %v1868
    %v1879 = vpack.c.b16 %v1871, %v1870
    %1888 = vmatprep.subr.bf16.mxu0 0
    %1889 = vmatpush1.bf16.msra.mxu0 %v1872
    %1890 = vmatprep.subr.bf16.mxu0 0
    %1891 = vmatpush1.bf16.msra.mxu0 %v1873
    %1892 = vmatprep.subr.bf16.mxu0 0
    %1893 = vmatpush1.bf16.msra.mxu0 %v1874
    %1894 = vmatprep.subr.bf16.mxu0 0
    %1895 = vmatpush1.bf16.msra.mxu0 %v1875
    %1896 = vmatprep.subr.bf16.mxu0 0
    %1897 = vmatpush1.bf16.msra.mxu0 %v1876
    %1898 = vmatprep.subr.bf16.mxu0 0
    %1899 = vmatpush1.bf16.msra.mxu0 %v1877
    %1900 = vmatprep.subr.bf16.mxu0 0
    %1901 = vmatpush1.bf16.msra.mxu0 %v1878
    %1902 = vmatprep.subr.bf16.mxu0 0
    %1903 = vmatpush1.bf16.msra.mxu0 %v1879
    %1904 = vmatprep.subr.bf16.mxu0 0
    %1905 = vmatpush1.bf16.msra.mxu0 0
    %1906 = vmatprep.subr.bf16.mxu0 0
    %1907 = vmatpush1.bf16.msra.mxu0 0
    %1908 = vmatprep.subr.bf16.mxu0 0
    %1909 = vmatpush1.bf16.msra.mxu0 0
    %1910 = vmatprep.subr.bf16.mxu0 0
    %1911 = vmatpush1.bf16.msra.mxu0 0
    %1912 = vmatprep.subr.bf16.mxu0 0
    %1913 = vmatpush1.bf16.msra.mxu0 0
    %1914 = vmatprep.subr.bf16.mxu0 0
    %1915 = vmatpush1.bf16.msra.mxu0 0
    %1916 = vmatprep.subr.bf16.mxu0 0
    %1917 = vmatpush1.bf16.msra.mxu0 0
    %1918 = vmatprep.subr.bf16.mxu0 0
    %1919 = vmatpush1.bf16.msra.mxu0 0
    %1920 = vmatprep.mubr.bf16.mxu0 0
    %1921 = vmatmul.mubr.bf16.gmra.mrb[0].mxu0 %v1837
    %v1922 = vpop.f32.mrb[0].mxu0
    %v1923 = vadd.f32 0.0, %v1922
    %v1924 = vpop.f32.mrb[0].mxu0
    %v1925 = vpop.f32.mrb[0].mxu0
    %v1926 = vadd.f32 0.0, %v1925
    %v1927 = vpop.f32.mrb[0].mxu0
    %1928 = vmatprep.mubr.bf16.mxu0 0
    %1929 = vmatmul.mubr.bf16.gmra.mrb[0].mxu0 %v1838
    %v1930 = vpop.f32.mrb[0].mxu0
    %v1931 = vadd.f32 0.0, %v1930
    %v1932 = vpop.f32.mrb[0].mxu0
    %v1933 = vpop.f32.mrb[0].mxu0
    %v1934 = vadd.f32 0.0, %v1933
    %v1935 = vpop.f32.mrb[0].mxu0
    %1936 = vmatprep.mubr.bf16.mxu0 0
    %1937 = vmatmul.mubr.bf16.gmra.mrb[0].mxu0 %v1839
    %v1938 = vpop.f32.mrb[0].mxu0
    %v1939 = vadd.f32 0.0, %v1938
    %v1940 = vpop.f32.mrb[0].mxu0
    %v1941 = vpop.f32.mrb[0].mxu0
    %v1942 = vadd.f32 0.0, %v1941
    %v1943 = vpop.f32.mrb[0].mxu0
    %1944 = vdwg.mxu0
    %v1945 = vadd.f32 %v1565, %v1923
    %v1946 = vadd.f32 %v1566, %v1926
    %v1947 = vadd.f32 %v1567, %v1931
    %v1948 = vadd.f32 %v1568, %v1934
    %v1949 = vadd.f32 %v1569, %v1939
    %v1950 = vadd.f32 %v1570, %v1942
    %v1951 = vld [vmem:[%s15] sm:$0x1]
    %v1953 = vlaneseq
    %v1954 = vshrl.u32 %v1953, 7
    %v1955 = vsub.s32 0, %v1954
    %v1956 = vrot.slane %v1951, %v1955
    %v1958 = vadd.f32 %v1945, %v1956
    %v1959 = vadd.f32 %v1946, %v1956
    %v1960 = vadd.f32 %v1947, %v1956
    %v1961 = vadd.f32 %v1948, %v1956
    %v1962 = vadd.f32 %v1949, %v1956
    %v1963 = vadd.f32 %v1950, %v1956
    %s1964 = scalar_lea.vmem %s4, 1
    %v1965 = vld [vmem:[%s1964] sm:$0x1]
    %s1966 = scalar_lea.vmem %s5, 1
    %v1967 = vld [vmem:[%s1966] sm:$0x1]
    %v1968 = vsel %vm289, %v1958, 0.0
    %1969 = vadd.xlane.f32.xlu0 %v1968
    %v1970 = vpop.xlane.xlu0 %1969
    %v1971 = vsel %vm289, %v1959, 0.0
    %1972 = vadd.xlane.f32.xlu0 %v1971
    %v1973 = vpop.xlane.xlu0 %1972
    %v1974 = vsel %vm289, %v1960, 0.0
    %1975 = vadd.xlane.f32.xlu0 %v1974
    %v1976 = vpop.xlane.xlu0 %1975
    %v1977 = vsel %vm289, %v1961, 0.0
    %1978 = vadd.xlane.f32.xlu0 %v1977
    %v1979 = vpop.xlane.xlu0 %1978
    %v1980 = vsel %vm289, %v1962, 0.0
    %1981 = vadd.xlane.f32.xlu0 %v1980
    %v1982 = vpop.xlane.xlu0 %1981
    %v1983 = vsel %vm289, %v1963, 0.0
    %1984 = vadd.xlane.f32.xlu0 %v1983
    %v1985 = vpop.xlane.xlu0 %1984
    %v1986 = vmul.f32 %v1970, %v308
    %v1987 = vmul.f32 %v1973, %v308
    %v1988 = vmul.f32 %v1976, %v308
    %v1989 = vmul.f32 %v1979, %v308
    %v1990 = vmul.f32 %v1982, %v308
    %v1991 = vmul.f32 %v1985, %v308
    %v1992 = vsub.f32 %v1958, %v1986
    %v1993 = vsub.f32 %v1959, %v1987
    %v1994 = vsub.f32 %v1960, %v1988
    %v1995 = vsub.f32 %v1961, %v1989
    %v1996 = vsub.f32 %v1962, %v1990
    %v1997 = vsub.f32 %v1963, %v1991
    %v1998 = vmul.f32 %v1992, %v1992
    %v1999 = vmul.f32 %v1993, %v1993
    %v2000 = vmul.f32 %v1994, %v1994
    %v2001 = vmul.f32 %v1995, %v1995
    %v2002 = vmul.f32 %v1996, %v1996
    %v2003 = vmul.f32 %v1997, %v1997
    %v2004 = vsel %vm289, %v1998, 0.0
    %2005 = vadd.xlane.f32.xlu0 %v2004
    %v2006 = vpop.xlane.xlu0 %2005
    %v2007 = vsel %vm289, %v1999, 0.0
    %2008 = vadd.xlane.f32.xlu0 %v2007
    %v2009 = vpop.xlane.xlu0 %2008
    %v2010 = vsel %vm289, %v2000, 0.0
    %2011 = vadd.xlane.f32.xlu0 %v2010
    %v2012 = vpop.xlane.xlu0 %2011
    %v2013 = vsel %vm289, %v2001, 0.0
    %2014 = vadd.xlane.f32.xlu0 %v2013
    %v2015 = vpop.xlane.xlu0 %2014
    %v2016 = vsel %vm289, %v2002, 0.0
    %2017 = vadd.xlane.f32.xlu0 %v2016
    %v2018 = vpop.xlane.xlu0 %2017
    %v2019 = vsel %vm289, %v2003, 0.0
    %2020 = vadd.xlane.f32.xlu0 %v2019
    %v2021 = vpop.xlane.xlu0 %2020
    %v2022 = vmul.f32 %v2006, %v308
    %v2023 = vmul.f32 %v2009, %v308
    %v2024 = vmul.f32 %v2012, %v308
    %v2025 = vmul.f32 %v2015, %v308
    %v2026 = vmul.f32 %v2018, %v308
    %v2027 = vmul.f32 %v2021, %v308
    %v2028 = vadd.f32 %v2022, 1e-12
    %v2029 = vadd.f32 %v2023, 1e-12
    %v2030 = vadd.f32 %v2024, 1e-12
    %v2031 = vadd.f32 %v2025, 1e-12
    %v2032 = vadd.f32 %v2026, 1e-12
    %v2033 = vadd.f32 %v2027, 1e-12
    %v2034 = vrsqrt.pop %v2028
    %v2035 = vrsqrt.pop %v2029
    %v2036 = vrsqrt.pop %v2030
    %v2037 = vrsqrt.pop %v2031
    %v2038 = vrsqrt.pop %v2032
    %v2039 = vrsqrt.pop %v2033
    %v2040 = vmul.f32 %v1992, %v2034
    %v2041 = vmul.f32 %v1993, %v2035
    %v2042 = vmul.f32 %v1994, %v2036
    %v2043 = vmul.f32 %v1995, %v2037
    %v2044 = vmul.f32 %v1996, %v2038
    %v2045 = vmul.f32 %v1997, %v2039
    %v2047 = vlaneseq
    %v2048 = vshrl.u32 %v2047, 7
    %v2049 = vsub.s32 0, %v2048
    %v2050 = vrot.slane %v1965, %v2049
    %v2052 = vmul.f32 %v2040, %v2050
    %v2053 = vmul.f32 %v2041, %v2050
    %v2054 = vmul.f32 %v2042, %v2050
    %v2055 = vmul.f32 %v2043, %v2050
    %v2056 = vmul.f32 %v2044, %v2050
    %v2057 = vmul.f32 %v2045, %v2050
    %v2059 = vlaneseq
    %v2060 = vshrl.u32 %v2059, 7
    %v2061 = vsub.s32 0, %v2060
    %v2062 = vrot.slane %v1967, %v2061
    %v2064 = vadd.f32 %v2052, %v2062
    %v2065 = vadd.f32 %v2053, %v2062
    %v2066 = vadd.f32 %v2054, %v2062
    %v2067 = vadd.f32 %v2055, %v2062
    %v2068 = vadd.f32 %v2056, %v2062
    %v2069 = vadd.f32 %v2057, %v2062
    %s2070 = scalar_lea.vmem %s6, 16
    %v2071 = vld [vmem:[%s2070] sm:$0xf]
    %v2072 = vld [vmem:[%s2070 + $0x4] sm:$0xf]
    %v2073 = vld [vmem:[%s2070 + $0x8] sm:$0xf]
    %v2074 = vld [vmem:[%s2070 + $0xc] sm:$0xf]
    %v2075 = vpack.c.bf16 %v2065, %v2064
    %v2076 = vpack.c.bf16 %v2067, %v2066
    %v2077 = vpack.c.bf16 %v2069, %v2068
    %s2078 = scalar_lea.vmem %s7, 1
    %v2079 = vld [vmem:[%s2078] sm:$0x1]
    %v2081 = vlaneseq
    %v2082 = vshrl.u32 %v2081, 7
    %v2083 = vsub.s32 0, %v2082
    %v2084 = vrot.slane %v2079, %v2083
    %v2090 = vunpack.c.l.b16 %v2071
    %v2091 = vunpack.c.l.b16 %v2072
    %v2092 = vunpack.c.l.b16 %v2073
    %v2093 = vunpack.c.l.b16 %v2074
    %v2094 = vpack.c.b16 %v2091, %v2090
    %v2095 = vpack.c.b16 %v2093, %v2092
    %v2099 = vsel %vm289, %v2075, 0
    %v2102 = vsel %vm289, %v2076, 0
    %v2105 = vsel %vm289, %v2077, 0
    %2107 = vmatprep.subr.bf16.mxu0 0
    %2108 = vmatpush1.bf16.msra.mxu0 %v2094
    %2109 = vmatprep.subr.bf16.mxu0 0
    %2110 = vmatpush1.bf16.msra.mxu0 %v2095
    %2111 = vmatprep.subr.bf16.mxu0 0
    %2112 = vmatpush1.bf16.msra.mxu0 0
    %2113 = vmatprep.subr.bf16.mxu0 0
    %2114 = vmatpush1.bf16.msra.mxu0 0
    %2115 = vmatprep.subr.bf16.mxu0 0
    %2116 = vmatpush1.bf16.msra.mxu0 0
    %2117 = vmatprep.subr.bf16.mxu0 0
    %2118 = vmatpush1.bf16.msra.mxu0 0
    %2119 = vmatprep.subr.bf16.mxu0 0
    %2120 = vmatpush1.bf16.msra.mxu0 0
    %2121 = vmatprep.subr.bf16.mxu0 0
    %2122 = vmatpush1.bf16.msra.mxu0 0
    %2123 = vmatprep.subr.bf16.mxu0 0
    %2124 = vmatpush1.bf16.msra.mxu0 0
    %2125 = vmatprep.subr.bf16.mxu0 0
    %2126 = vmatpush1.bf16.msra.mxu0 0
    %2127 = vmatprep.subr.bf16.mxu0 0
    %2128 = vmatpush1.bf16.msra.mxu0 0
    %2129 = vmatprep.subr.bf16.mxu0 0
    %2130 = vmatpush1.bf16.msra.mxu0 0
    %2131 = vmatprep.subr.bf16.mxu0 0
    %2132 = vmatpush1.bf16.msra.mxu0 0
    %2133 = vmatprep.subr.bf16.mxu0 0
    %2134 = vmatpush1.bf16.msra.mxu0 0
    %2135 = vmatprep.subr.bf16.mxu0 0
    %2136 = vmatpush1.bf16.msra.mxu0 0
    %2137 = vmatprep.subr.bf16.mxu0 0
    %2138 = vmatpush1.bf16.msra.mxu0 0
    %2139 = vmatprep.mubr.bf16.mxu0 0
    %2140 = vmatmul.mubr.bf16.gmra.mrb[0].mxu0 %v2099
    %v2141 = vpop.f32.mrb[0].mxu0
    %v2142 = vadd.f32 %v2084, %v2141
    %v2143 = vpop.f32.mrb[0].mxu0
    %v2144 = vpop.f32.mrb[0].mxu0
    %v2145 = vadd.f32 %v2084, %v2144
    %v2146 = vpop.f32.mrb[0].mxu0
    %2147 = vmatprep.mubr.bf16.mxu0 0
    %2148 = vmatmul.mubr.bf16.gmra.mrb[0].mxu0 %v2102
    %v2149 = vpop.f32.mrb[0].mxu0
    %v2150 = vadd.f32 %v2084, %v2149
    %v2151 = vpop.f32.mrb[0].mxu0
    %v2152 = vpop.f32.mrb[0].mxu0
    %v2153 = vadd.f32 %v2084, %v2152
    %v2154 = vpop.f32.mrb[0].mxu0
    %2155 = vmatprep.mubr.bf16.mxu0 0
    %2156 = vmatmul.mubr.bf16.gmra.mrb[0].mxu0 %v2105
    %v2157 = vpop.f32.mrb[0].mxu0
    %v2158 = vadd.f32 %v2084, %v2157
    %v2159 = vpop.f32.mrb[0].mxu0
    %v2160 = vpop.f32.mrb[0].mxu0
    %v2161 = vadd.f32 %v2084, %v2160
    %v2162 = vpop.f32.mrb[0].mxu0
    %2163 = vdwg.mxu0
    %v2164 = vpack.c.bf16 %v2145, %v2142
    %v2165 = vpack.c.bf16 %v2153, %v2150
    %v2166 = vpack.c.bf16 %v2161, %v2158
    %2170 = vrot.lane.b32.xlu0 %v2164, 96
    %v2171 = vpop.permute.xlu0 %2170
    %2172 = vrot.lane.b32.xlu0 %v2165, 96
    %v2173 = vpop.permute.xlu0 %2172
    %2174 = vrot.lane.b32.xlu0 %v2166, 96
    %v2175 = vpop.permute.xlu0 %2174
    %v2177 = vsel %vm497, %v2164, 0
    %v2180 = vsel %vm497, %v2165, 0
    %v2183 = vsel %vm497, %v2166, 0
    %v2186 = vsel %vm497, %v2171, 0
    %v2189 = vsel %vm497, %v2173, 0
    %v2192 = vsel %vm497, %v2175, 0
    %2194 = vmatprep.subr.bf16.mxu0 0
    %2195 = vmatpush1.bf16.xpose.msra.mxu0 %v2186
    %2196 = vmatprep.subr.bf16.mxu0 0
    %2197 = vmatpush1.bf16.xpose.msra.mxu0 %v2189
    %2198 = vmatprep.subr.bf16.mxu0 0
    %2199 = vmatpush1.bf16.xpose.msra.mxu0 %v2192
    %2200 = vmatprep.subr.bf16.mxu0 0
    %2201 = vmatpush1.bf16.xpose.msra.mxu0 0
    %2202 = vmatprep.subr.bf16.mxu0 0
    %2203 = vmatpush1.bf16.xpose.msra.mxu0 0
    %2204 = vmatprep.subr.bf16.mxu0 0
    %2205 = vmatpush1.bf16.xpose.msra.mxu0 0
    %2206 = vmatprep.subr.bf16.mxu0 0
    %2207 = vmatpush1.bf16.xpose.msra.mxu0 0
    %2208 = vmatprep.subr.bf16.mxu0 0
    %2209 = vmatpush1.bf16.xpose.msra.mxu0 0
    %2210 = vmatprep.subr.bf16.mxu0 0
    %2211 = vmatpush1.bf16.xpose.msra.mxu0 0
    %2212 = vmatprep.subr.bf16.mxu0 0
    %2213 = vmatpush1.bf16.xpose.msra.mxu0 0
    %2214 = vmatprep.subr.bf16.mxu0 0
    %2215 = vmatpush1.bf16.xpose.msra.mxu0 0
    %2216 = vmatprep.subr.bf16.mxu0 0
    %2217 = vmatpush1.bf16.xpose.msra.mxu0 0
    %2218 = vmatprep.subr.bf16.mxu0 0
    %2219 = vmatpush1.bf16.xpose.msra.mxu0 0
    %2220 = vmatprep.subr.bf16.mxu0 0
    %2221 = vmatpush1.bf16.xpose.msra.mxu0 0
    %2222 = vmatprep.subr.bf16.mxu0 0
    %2223 = vmatpush1.bf16.xpose.msra.mxu0 0
    %2224 = vmatprep.subr.bf16.mxu0 0
    %2225 = vmatpush1.bf16.xpose.msra.mxu0 0
    %2226 = vmatprep.mubr.bf16.mxu0 0
    %2227 = vmatmul.mubr.bf16.gmra.mrb[0].mxu0 %v2177
    %v2228 = vpop.f32.mrb[0].mxu0
    %v2229 = vadd.f32 %v281, %v2228
    %v2230 = vpop.f32.mrb[0].mxu0
    %v2231 = vpop.f32.mrb[0].mxu0
    %v2232 = vadd.f32 %v282, %v2231
    %v2233 = vpop.f32.mrb[0].mxu0
    %2234 = vmatprep.mubr.bf16.mxu0 0
    %2235 = vmatmul.mubr.bf16.gmra.mrb[0].mxu0 %v2180
    %v2236 = vpop.f32.mrb[0].mxu0
    %v2237 = vadd.f32 %v283, %v2236
    %v2238 = vpop.f32.mrb[0].mxu0
    %v2239 = vpop.f32.mrb[0].mxu0
    %v2240 = vadd.f32 %v284, %v2239
    %v2241 = vpop.f32.mrb[0].mxu0
    %2242 = vmatprep.mubr.bf16.mxu0 0
    %2243 = vmatmul.mubr.bf16.gmra.mrb[0].mxu0 %v2183
    %v2244 = vpop.f32.mrb[0].mxu0
    %v2245 = vadd.f32 %v285, %v2244
    %v2246 = vpop.f32.mrb[0].mxu0
    %v2247 = vpop.f32.mrb[0].mxu0
    %v2248 = vadd.f32 %v286, %v2247
    %v2249 = vpop.f32.mrb[0].mxu0
    %2250 = vdwg.mxu0
    %v2251 = vsel %vm573, %v2229, -inf
    %2252 = vmax.xlane.f32.xlu0 %v2251
    %v2253 = vpop.xlane.xlu0 %2252
    %v2254 = vsel %vm573, %v2232, -inf
    %2255 = vmax.xlane.f32.xlu0 %v2254
    %v2256 = vpop.xlane.xlu0 %2255
    %v2257 = vsel %vm573, %v2237, -inf
    %2258 = vmax.xlane.f32.xlu0 %v2257
    %v2259 = vpop.xlane.xlu0 %2258
    %v2260 = vsel %vm573, %v2240, -inf
    %2261 = vmax.xlane.f32.xlu0 %v2260
    %v2262 = vpop.xlane.xlu0 %2261
    %v2263 = vsel %vm573, %v2245, -inf
    %2264 = vmax.xlane.f32.xlu0 %v2263
    %v2265 = vpop.xlane.xlu0 %2264
    %v2266 = vsel %vm573, %v2248, -inf
    %2267 = vmax.xlane.f32.xlu0 %v2266
    %v2268 = vpop.xlane.xlu0 %2267
    %v2269 = vsub.f32 %v2229, %v2253
    %v2270 = vsub.f32 %v2232, %v2256
    %v2271 = vsub.f32 %v2237, %v2259
    %v2272 = vsub.f32 %v2240, %v2262
    %v2273 = vsub.f32 %v2245, %v2265
    %v2274 = vsub.f32 %v2248, %v2268
    %v2275 = vmul.f32 %v2269, 1.442695
    %v2276 = vpow.pop %v2275
    %v2277 = vmul.f32 %v2270, 1.442695
    %v2278 = vpow.pop %v2277
    %v2279 = vmul.f32 %v2271, 1.442695
    %v2280 = vpow.pop %v2279
    %v2281 = vmul.f32 %v2272, 1.442695
    %v2282 = vpow.pop %v2281
    %v2283 = vmul.f32 %v2273, 1.442695
    %v2284 = vpow.pop %v2283
    %v2285 = vmul.f32 %v2274, 1.442695
    %v2286 = vpow.pop %v2285
    %v2287 = vsel %vm573, %v2276, 0.0
    %2288 = vadd.xlane.f32.xlu0 %v2287
    %v2289 = vpop.xlane.xlu0 %2288
    %v2290 = vsel %vm573, %v2278, 0.0
    %2291 = vadd.xlane.f32.xlu0 %v2290
    %v2292 = vpop.xlane.xlu0 %2291
    %v2293 = vsel %vm573, %v2280, 0.0
    %2294 = vadd.xlane.f32.xlu0 %v2293
    %v2295 = vpop.xlane.xlu0 %2294
    %v2296 = vsel %vm573, %v2282, 0.0
    %2297 = vadd.xlane.f32.xlu0 %v2296
    %v2298 = vpop.xlane.xlu0 %2297
    %v2299 = vsel %vm573, %v2284, 0.0
    %2300 = vadd.xlane.f32.xlu0 %v2299
    %v2301 = vpop.xlane.xlu0 %2300
    %v2302 = vsel %vm573, %v2286, 0.0
    %2303 = vadd.xlane.f32.xlu0 %v2302
    %v2304 = vpop.xlane.xlu0 %2303
    %v2305 = vrcp.pop %v2289
    %v2306 = vrcp.pop %v2292
    %v2307 = vrcp.pop %v2295
    %v2308 = vrcp.pop %v2298
    %v2309 = vrcp.pop %v2301
    %v2310 = vrcp.pop %v2304
    %v2311 = vmul.f32 %v2276, %v2305
    %v2312 = vmul.f32 %v2278, %v2306
    %v2313 = vmul.f32 %v2280, %v2307
    %v2314 = vmul.f32 %v2282, %v2308
    %v2315 = vmul.f32 %v2284, %v2309
    %v2316 = vmul.f32 %v2286, %v2310
    %v2317 = vpack.c.bf16 %v2312, %v2311
    %v2318 = vpack.c.bf16 %v2314, %v2313
    %v2319 = vpack.c.bf16 %v2316, %v2315
    %2320 = vrot.lane.b32.xlu0 %v2164, 64
    %v2321 = vpop.permute.xlu0 %2320
    %2322 = vrot.lane.b32.xlu0 %v2165, 64
    %v2323 = vpop.permute.xlu0 %2322
    %2324 = vrot.lane.b32.xlu0 %v2166, 64
    %v2325 = vpop.permute.xlu0 %2324
    %v2330 = vsel %vm573, %v2317, 0
    %v2333 = vsel %vm573, %v2318, 0
    %v2336 = vsel %vm573, %v2319, 0
    %2338 = vmatprep.subr.bf16.mxu0 0
    %2339 = vmatpush1.bf16.msra.mxu0 %v2321
    %2340 = vmatprep.subr.bf16.mxu0 0
    %2341 = vmatpush1.bf16.msra.mxu0 %v2323
    %2342 = vmatprep.subr.bf16.mxu0 0
    %2343 = vmatpush1.bf16.msra.mxu0 %v2325
    %2344 = vmatprep.subr.bf16.mxu0 0
    %2345 = vmatpush1.bf16.msra.mxu0 0
    %2346 = vmatprep.subr.bf16.mxu0 0
    %2347 = vmatpush1.bf16.msra.mxu0 0
    %2348 = vmatprep.subr.bf16.mxu0 0
    %2349 = vmatpush1.bf16.msra.mxu0 0
    %2350 = vmatprep.subr.bf16.mxu0 0
    %2351 = vmatpush1.bf16.msra.mxu0 0
    %2352 = vmatprep.subr.bf16.mxu0 0
    %2353 = vmatpush1.bf16.msra.mxu0 0
    %2354 = vmatprep.subr.bf16.mxu0 0
    %2355 = vmatpush1.bf16.msra.mxu0 0
    %2356 = vmatprep.subr.bf16.mxu0 0
    %2357 = vmatpush1.bf16.msra.mxu0 0
    %2358 = vmatprep.subr.bf16.mxu0 0
    %2359 = vmatpush1.bf16.msra.mxu0 0
    %2360 = vmatprep.subr.bf16.mxu0 0
    %2361 = vmatpush1.bf16.msra.mxu0 0
    %2362 = vmatprep.subr.bf16.mxu0 0
    %2363 = vmatpush1.bf16.msra.mxu0 0
    %2364 = vmatprep.subr.bf16.mxu0 0
    %2365 = vmatpush1.bf16.msra.mxu0 0
    %2366 = vmatprep.subr.bf16.mxu0 0
    %2367 = vmatpush1.bf16.msra.mxu0 0
    %2368 = vmatprep.subr.bf16.mxu0 0
    %2369 = vmatpush1.bf16.msra.mxu0 0
    %2370 = vmatprep.mubr.bf16.mxu0 0
    %2371 = vmatmul.mubr.bf16.gmra.mrb[0].mxu0 %v2330
    %v2372 = vpop.f32.mrb[0].mxu0
    %v2373 = vadd.f32 0.0, %v2372
    %v2374 = vpop.f32.mrb[0].mxu0
    %v2375 = vpop.f32.mrb[0].mxu0
    %v2376 = vadd.f32 0.0, %v2375
    %v2377 = vpop.f32.mrb[0].mxu0
    %2378 = vmatprep.mubr.bf16.mxu0 0
    %2379 = vmatmul.mubr.bf16.gmra.mrb[0].mxu0 %v2333
    %v2380 = vpop.f32.mrb[0].mxu0
    %v2381 = vadd.f32 0.0, %v2380
    %v2382 = vpop.f32.mrb[0].mxu0
    %v2383 = vpop.f32.mrb[0].mxu0
    %v2384 = vadd.f32 0.0, %v2383
    %v2385 = vpop.f32.mrb[0].mxu0
    %2386 = vmatprep.mubr.bf16.mxu0 0
    %2387 = vmatmul.mubr.bf16.gmra.mrb[0].mxu0 %v2336
    %v2388 = vpop.f32.mrb[0].mxu0
    %v2389 = vadd.f32 0.0, %v2388
    %v2390 = vpop.f32.mrb[0].mxu0
    %v2391 = vpop.f32.mrb[0].mxu0
    %v2392 = vadd.f32 0.0, %v2391
    %v2393 = vpop.f32.mrb[0].mxu0
    %2394 = vdwg.mxu0
    %v2395 = vpack.c.bf16 %v2376, %v2373
    %v2396 = vpack.c.bf16 %v2384, %v2381
    %v2397 = vpack.c.bf16 %v2392, %v2389
    %2398 = vrot.lane.b32.xlu0 %v2164, 120
    %v2399 = vpop.permute.xlu0 %2398
    %2400 = vrot.lane.b32.xlu0 %v2165, 120
    %v2401 = vpop.permute.xlu0 %2400
    %2402 = vrot.lane.b32.xlu0 %v2166, 120
    %v2403 = vpop.permute.xlu0 %2402
    %2404 = vrot.lane.b32.xlu0 %v2164, 88
    %v2405 = vpop.permute.xlu0 %2404
    %2406 = vrot.lane.b32.xlu0 %v2165, 88
    %v2407 = vpop.permute.xlu0 %2406
    %2408 = vrot.lane.b32.xlu0 %v2166, 88
    %v2409 = vpop.permute.xlu0 %2408
    %v2411 = vsel %vm497, %v2399, 0
    %v2414 = vsel %vm497, %v2401, 0
    %v2417 = vsel %vm497, %v2403, 0
    %v2420 = vsel %vm497, %v2405, 0
    %v2423 = vsel %vm497, %v2407, 0
    %v2426 = vsel %vm497, %v2409, 0
    %2428 = vmatprep.subr.bf16.mxu0 0
    %2429 = vmatpush1.bf16.xpose.msra.mxu0 %v2420
    %2430 = vmatprep.subr.bf16.mxu0 0
    %2431 = vmatpush1.bf16.xpose.msra.mxu0 %v2423
    %2432 = vmatprep.subr.bf16.mxu0 0
    %2433 = vmatpush1.bf16.xpose.msra.mxu0 %v2426
    %2434 = vmatprep.subr.bf16.mxu0 0
    %2435 = vmatpush1.bf16.xpose.msra.mxu0 0
    %2436 = vmatprep.subr.bf16.mxu0 0
    %2437 = vmatpush1.bf16.xpose.msra.mxu0 0
    %2438 = vmatprep.subr.bf16.mxu0 0
    %2439 = vmatpush1.bf16.xpose.msra.mxu0 0
    %2440 = vmatprep.subr.bf16.mxu0 0
    %2441 = vmatpush1.bf16.xpose.msra.mxu0 0
    %2442 = vmatprep.subr.bf16.mxu0 0
    %2443 = vmatpush1.bf16.xpose.msra.mxu0 0
    %2444 = vmatprep.subr.bf16.mxu0 0
    %2445 = vmatpush1.bf16.xpose.msra.mxu0 0
    %2446 = vmatprep.subr.bf16.mxu0 0
    %2447 = vmatpush1.bf16.xpose.msra.mxu0 0
    %2448 = vmatprep.subr.bf16.mxu0 0
    %2449 = vmatpush1.bf16.xpose.msra.mxu0 0
    %2450 = vmatprep.subr.bf16.mxu0 0
    %2451 = vmatpush1.bf16.xpose.msra.mxu0 0
    %2452 = vmatprep.subr.bf16.mxu0 0
    %2453 = vmatpush1.bf16.xpose.msra.mxu0 0
    %2454 = vmatprep.subr.bf16.mxu0 0
    %2455 = vmatpush1.bf16.xpose.msra.mxu0 0
    %2456 = vmatprep.subr.bf16.mxu0 0
    %2457 = vmatpush1.bf16.xpose.msra.mxu0 0
    %2458 = vmatprep.subr.bf16.mxu0 0
    %2459 = vmatpush1.bf16.xpose.msra.mxu0 0
    %2460 = vmatprep.mubr.bf16.mxu0 0
    %2461 = vmatmul.mubr.bf16.gmra.mrb[0].mxu0 %v2411
    %v2462 = vpop.f32.mrb[0].mxu0
    %v2463 = vadd.f32 %v281, %v2462
    %v2464 = vpop.f32.mrb[0].mxu0
    %v2465 = vpop.f32.mrb[0].mxu0
    %v2466 = vadd.f32 %v282, %v2465
    %v2467 = vpop.f32.mrb[0].mxu0
    %2468 = vmatprep.mubr.bf16.mxu0 0
    %2469 = vmatmul.mubr.bf16.gmra.mrb[0].mxu0 %v2414
    %v2470 = vpop.f32.mrb[0].mxu0
    %v2471 = vadd.f32 %v283, %v2470
    %v2472 = vpop.f32.mrb[0].mxu0
    %v2473 = vpop.f32.mrb[0].mxu0
    %v2474 = vadd.f32 %v284, %v2473
    %v2475 = vpop.f32.mrb[0].mxu0
    %2476 = vmatprep.mubr.bf16.mxu0 0
    %2477 = vmatmul.mubr.bf16.gmra.mrb[0].mxu0 %v2417
    %v2478 = vpop.f32.mrb[0].mxu0
    %v2479 = vadd.f32 %v285, %v2478
    %v2480 = vpop.f32.mrb[0].mxu0
    %v2481 = vpop.f32.mrb[0].mxu0
    %v2482 = vadd.f32 %v286, %v2481
    %v2483 = vpop.f32.mrb[0].mxu0
    %2484 = vdwg.mxu0
    %v2485 = vsel %vm573, %v2463, -inf
    %2486 = vmax.xlane.f32.xlu0 %v2485
    %v2487 = vpop.xlane.xlu0 %2486
    %v2488 = vsel %vm573, %v2466, -inf
    %2489 = vmax.xlane.f32.xlu0 %v2488
    %v2490 = vpop.xlane.xlu0 %2489
    %v2491 = vsel %vm573, %v2471, -inf
    %2492 = vmax.xlane.f32.xlu0 %v2491
    %v2493 = vpop.xlane.xlu0 %2492
    %v2494 = vsel %vm573, %v2474, -inf
    %2495 = vmax.xlane.f32.xlu0 %v2494
    %v2496 = vpop.xlane.xlu0 %2495
    %v2497 = vsel %vm573, %v2479, -inf
    %2498 = vmax.xlane.f32.xlu0 %v2497
    %v2499 = vpop.xlane.xlu0 %2498
    %v2500 = vsel %vm573, %v2482, -inf
    %2501 = vmax.xlane.f32.xlu0 %v2500
    %v2502 = vpop.xlane.xlu0 %2501
    %v2503 = vsub.f32 %v2463, %v2487
    %v2504 = vsub.f32 %v2466, %v2490
    %v2505 = vsub.f32 %v2471, %v2493
    %v2506 = vsub.f32 %v2474, %v2496
    %v2507 = vsub.f32 %v2479, %v2499
    %v2508 = vsub.f32 %v2482, %v2502
    %v2509 = vmul.f32 %v2503, 1.442695
    %v2510 = vpow.pop %v2509
    %v2511 = vmul.f32 %v2504, 1.442695
    %v2512 = vpow.pop %v2511
    %v2513 = vmul.f32 %v2505, 1.442695
    %v2514 = vpow.pop %v2513
    %v2515 = vmul.f32 %v2506, 1.442695
    %v2516 = vpow.pop %v2515
    %v2517 = vmul.f32 %v2507, 1.442695
    %v2518 = vpow.pop %v2517
    %v2519 = vmul.f32 %v2508, 1.442695
    %v2520 = vpow.pop %v2519
    %v2521 = vsel %vm573, %v2510, 0.0
    %2522 = vadd.xlane.f32.xlu0 %v2521
    %v2523 = vpop.xlane.xlu0 %2522
    %v2524 = vsel %vm573, %v2512, 0.0
    %2525 = vadd.xlane.f32.xlu0 %v2524
    %v2526 = vpop.xlane.xlu0 %2525
    %v2527 = vsel %vm573, %v2514, 0.0
    %2528 = vadd.xlane.f32.xlu0 %v2527
    %v2529 = vpop.xlane.xlu0 %2528
    %v2530 = vsel %vm573, %v2516, 0.0
    %2531 = vadd.xlane.f32.xlu0 %v2530
    %v2532 = vpop.xlane.xlu0 %2531
    %v2533 = vsel %vm573, %v2518, 0.0
    %2534 = vadd.xlane.f32.xlu0 %v2533
    %v2535 = vpop.xlane.xlu0 %2534
    %v2536 = vsel %vm573, %v2520, 0.0
    %2537 = vadd.xlane.f32.xlu0 %v2536
    %v2538 = vpop.xlane.xlu0 %2537
    %v2539 = vrcp.pop %v2523
    %v2540 = vrcp.pop %v2526
    %v2541 = vrcp.pop %v2529
    %v2542 = vrcp.pop %v2532
    %v2543 = vrcp.pop %v2535
    %v2544 = vrcp.pop %v2538
    %v2545 = vmul.f32 %v2510, %v2539
    %v2546 = vmul.f32 %v2512, %v2540
    %v2547 = vmul.f32 %v2514, %v2541
    %v2548 = vmul.f32 %v2516, %v2542
    %v2549 = vmul.f32 %v2518, %v2543
    %v2550 = vmul.f32 %v2520, %v2544
    %v2551 = vpack.c.bf16 %v2546, %v2545
    %v2552 = vpack.c.bf16 %v2548, %v2547
    %v2553 = vpack.c.bf16 %v2550, %v2549
    %2554 = vrot.lane.b32.xlu0 %v2164, 56
    %v2555 = vpop.permute.xlu0 %2554
    %2556 = vrot.lane.b32.xlu0 %v2165, 56
    %v2557 = vpop.permute.xlu0 %2556
    %2558 = vrot.lane.b32.xlu0 %v2166, 56
    %v2559 = vpop.permute.xlu0 %2558
    %v2564 = vsel %vm573, %v2551, 0
    %v2567 = vsel %vm573, %v2552, 0
    %v2570 = vsel %vm573, %v2553, 0
    %2572 = vmatprep.subr.bf16.mxu0 0
    %2573 = vmatpush1.bf16.msra.mxu0 %v2555
    %2574 = vmatprep.subr.bf16.mxu0 0
    %2575 = vmatpush1.bf16.msra.mxu0 %v2557
    %2576 = vmatprep.subr.bf16.mxu0 0
    %2577 = vmatpush1.bf16.msra.mxu0 %v2559
    %2578 = vmatprep.subr.bf16.mxu0 0
    %2579 = vmatpush1.bf16.msra.mxu0 0
    %2580 = vmatprep.subr.bf16.mxu0 0
    %2581 = vmatpush1.bf16.msra.mxu0 0
    %2582 = vmatprep.subr.bf16.mxu0 0
    %2583 = vmatpush1.bf16.msra.mxu0 0
    %2584 = vmatprep.subr.bf16.mxu0 0
    %2585 = vmatpush1.bf16.msra.mxu0 0
    %2586 = vmatprep.subr.bf16.mxu0 0
    %2587 = vmatpush1.bf16.msra.mxu0 0
    %2588 = vmatprep.subr.bf16.mxu0 0
    %2589 = vmatpush1.bf16.msra.mxu0 0
    %2590 = vmatprep.subr.bf16.mxu0 0
    %2591 = vmatpush1.bf16.msra.mxu0 0
    %2592 = vmatprep.subr.bf16.mxu0 0
    %2593 = vmatpush1.bf16.msra.mxu0 0
    %2594 = vmatprep.subr.bf16.mxu0 0
    %2595 = vmatpush1.bf16.msra.mxu0 0
    %2596 = vmatprep.subr.bf16.mxu0 0
    %2597 = vmatpush1.bf16.msra.mxu0 0
    %2598 = vmatprep.subr.bf16.mxu0 0
    %2599 = vmatpush1.bf16.msra.mxu0 0
    %2600 = vmatprep.subr.bf16.mxu0 0
    %2601 = vmatpush1.bf16.msra.mxu0 0
    %2602 = vmatprep.subr.bf16.mxu0 0
    %2603 = vmatpush1.bf16.msra.mxu0 0
    %2604 = vmatprep.mubr.bf16.mxu0 0
    %2605 = vmatmul.mubr.bf16.gmra.mrb[0].mxu0 %v2564
    %v2606 = vpop.f32.mrb[0].mxu0
    %v2607 = vadd.f32 0.0, %v2606
    %v2608 = vpop.f32.mrb[0].mxu0
    %v2609 = vpop.f32.mrb[0].mxu0
    %v2610 = vadd.f32 0.0, %v2609
    %v2611 = vpop.f32.mrb[0].mxu0
    %2612 = vmatprep.mubr.bf16.mxu0 0
    %2613 = vmatmul.mubr.bf16.gmra.mrb[0].mxu0 %v2567
    %v2614 = vpop.f32.mrb[0].mxu0
    %v2615 = vadd.f32 0.0, %v2614
    %v2616 = vpop.f32.mrb[0].mxu0
    %v2617 = vpop.f32.mrb[0].mxu0
    %v2618 = vadd.f32 0.0, %v2617
    %v2619 = vpop.f32.mrb[0].mxu0
    %2620 = vmatprep.mubr.bf16.mxu0 0
    %2621 = vmatmul.mubr.bf16.gmra.mrb[0].mxu0 %v2570
    %v2622 = vpop.f32.mrb[0].mxu0
    %v2623 = vadd.f32 0.0, %v2622
    %v2624 = vpop.f32.mrb[0].mxu0
    %v2625 = vpop.f32.mrb[0].mxu0
    %v2626 = vadd.f32 0.0, %v2625
    %v2627 = vpop.f32.mrb[0].mxu0
    %2628 = vdwg.mxu0
    %v2629 = vpack.c.bf16 %v2610, %v2607
    %v2630 = vpack.c.bf16 %v2618, %v2615
    %v2631 = vpack.c.bf16 %v2626, %v2623
    %2632 = vrot.lane.b32.xlu0 %v2164, 112
    %v2633 = vpop.permute.xlu0 %2632
    %2634 = vrot.lane.b32.xlu0 %v2165, 112
    %v2635 = vpop.permute.xlu0 %2634
    %2636 = vrot.lane.b32.xlu0 %v2166, 112
    %v2637 = vpop.permute.xlu0 %2636
    %2638 = vrot.lane.b32.xlu0 %v2164, 80
    %v2639 = vpop.permute.xlu0 %2638
    %2640 = vrot.lane.b32.xlu0 %v2165, 80
    %v2641 = vpop.permute.xlu0 %2640
    %2642 = vrot.lane.b32.xlu0 %v2166, 80
    %v2643 = vpop.permute.xlu0 %2642
    %v2645 = vsel %vm497, %v2633, 0
    %v2648 = vsel %vm497, %v2635, 0
    %v2651 = vsel %vm497, %v2637, 0
    %v2654 = vsel %vm497, %v2639, 0
    %v2657 = vsel %vm497, %v2641, 0
    %v2660 = vsel %vm497, %v2643, 0
    %2662 = vmatprep.subr.bf16.mxu0 0
    %2663 = vmatpush1.bf16.xpose.msra.mxu0 %v2654
    %2664 = vmatprep.subr.bf16.mxu0 0
    %2665 = vmatpush1.bf16.xpose.msra.mxu0 %v2657
    %2666 = vmatprep.subr.bf16.mxu0 0
    %2667 = vmatpush1.bf16.xpose.msra.mxu0 %v2660
    %2668 = vmatprep.subr.bf16.mxu0 0
    %2669 = vmatpush1.bf16.xpose.msra.mxu0 0
    %2670 = vmatprep.subr.bf16.mxu0 0
    %2671 = vmatpush1.bf16.xpose.msra.mxu0 0
    %2672 = vmatprep.subr.bf16.mxu0 0
    %2673 = vmatpush1.bf16.xpose.msra.mxu0 0
    %2674 = vmatprep.subr.bf16.mxu0 0
    %2675 = vmatpush1.bf16.xpose.msra.mxu0 0
    %2676 = vmatprep.subr.bf16.mxu0 0
    %2677 = vmatpush1.bf16.xpose.msra.mxu0 0
    %2678 = vmatprep.subr.bf16.mxu0 0
    %2679 = vmatpush1.bf16.xpose.msra.mxu0 0
    %2680 = vmatprep.subr.bf16.mxu0 0
    %2681 = vmatpush1.bf16.xpose.msra.mxu0 0
    %2682 = vmatprep.subr.bf16.mxu0 0
    %2683 = vmatpush1.bf16.xpose.msra.mxu0 0
    %2684 = vmatprep.subr.bf16.mxu0 0
    %2685 = vmatpush1.bf16.xpose.msra.mxu0 0
    %2686 = vmatprep.subr.bf16.mxu0 0
    %2687 = vmatpush1.bf16.xpose.msra.mxu0 0
    %2688 = vmatprep.subr.bf16.mxu0 0
    %2689 = vmatpush1.bf16.xpose.msra.mxu0 0
    %2690 = vmatprep.subr.bf16.mxu0 0
    %2691 = vmatpush1.bf16.xpose.msra.mxu0 0
    %2692 = vmatprep.subr.bf16.mxu0 0
    %2693 = vmatpush1.bf16.xpose.msra.mxu0 0
    %2694 = vmatprep.mubr.bf16.mxu0 0
    %2695 = vmatmul.mubr.bf16.gmra.mrb[0].mxu0 %v2645
    %v2696 = vpop.f32.mrb[0].mxu0
    %v2697 = vadd.f32 %v281, %v2696
    %v2698 = vpop.f32.mrb[0].mxu0
    %v2699 = vpop.f32.mrb[0].mxu0
    %v2700 = vadd.f32 %v282, %v2699
    %v2701 = vpop.f32.mrb[0].mxu0
    %2702 = vmatprep.mubr.bf16.mxu0 0
    %2703 = vmatmul.mubr.bf16.gmra.mrb[0].mxu0 %v2648
    %v2704 = vpop.f32.mrb[0].mxu0
    %v2705 = vadd.f32 %v283, %v2704
    %v2706 = vpop.f32.mrb[0].mxu0
    %v2707 = vpop.f32.mrb[0].mxu0
    %v2708 = vadd.f32 %v284, %v2707
    %v2709 = vpop.f32.mrb[0].mxu0
    %2710 = vmatprep.mubr.bf16.mxu0 0
    %2711 = vmatmul.mubr.bf16.gmra.mrb[0].mxu0 %v2651
    %v2712 = vpop.f32.mrb[0].mxu0
    %v2713 = vadd.f32 %v285, %v2712
    %v2714 = vpop.f32.mrb[0].mxu0
    %v2715 = vpop.f32.mrb[0].mxu0
    %v2716 = vadd.f32 %v286, %v2715
    %v2717 = vpop.f32.mrb[0].mxu0
    %2718 = vdwg.mxu0
    %v2719 = vsel %vm573, %v2697, -inf
    %2720 = vmax.xlane.f32.xlu0 %v2719
    %v2721 = vpop.xlane.xlu0 %2720
    %v2722 = vsel %vm573, %v2700, -inf
    %2723 = vmax.xlane.f32.xlu0 %v2722
    %v2724 = vpop.xlane.xlu0 %2723
    %v2725 = vsel %vm573, %v2705, -inf
    %2726 = vmax.xlane.f32.xlu0 %v2725
    %v2727 = vpop.xlane.xlu0 %2726
    %v2728 = vsel %vm573, %v2708, -inf
    %2729 = vmax.xlane.f32.xlu0 %v2728
    %v2730 = vpop.xlane.xlu0 %2729
    %v2731 = vsel %vm573, %v2713, -inf
    %2732 = vmax.xlane.f32.xlu0 %v2731
    %v2733 = vpop.xlane.xlu0 %2732
    %v2734 = vsel %vm573, %v2716, -inf
    %2735 = vmax.xlane.f32.xlu0 %v2734
    %v2736 = vpop.xlane.xlu0 %2735
    %v2737 = vsub.f32 %v2697, %v2721
    %v2738 = vsub.f32 %v2700, %v2724
    %v2739 = vsub.f32 %v2705, %v2727
    %v2740 = vsub.f32 %v2708, %v2730
    %v2741 = vsub.f32 %v2713, %v2733
    %v2742 = vsub.f32 %v2716, %v2736
    %v2743 = vmul.f32 %v2737, 1.442695
    %v2744 = vpow.pop %v2743
    %v2745 = vmul.f32 %v2738, 1.442695
    %v2746 = vpow.pop %v2745
    %v2747 = vmul.f32 %v2739, 1.442695
    %v2748 = vpow.pop %v2747
    %v2749 = vmul.f32 %v2740, 1.442695
    %v2750 = vpow.pop %v2749
    %v2751 = vmul.f32 %v2741, 1.442695
    %v2752 = vpow.pop %v2751
    %v2753 = vmul.f32 %v2742, 1.442695
    %v2754 = vpow.pop %v2753
    %v2755 = vsel %vm573, %v2744, 0.0
    %2756 = vadd.xlane.f32.xlu0 %v2755
    %v2757 = vpop.xlane.xlu0 %2756
    %v2758 = vsel %vm573, %v2746, 0.0
    %2759 = vadd.xlane.f32.xlu0 %v2758
    %v2760 = vpop.xlane.xlu0 %2759
    %v2761 = vsel %vm573, %v2748, 0.0
    %2762 = vadd.xlane.f32.xlu0 %v2761
    %v2763 = vpop.xlane.xlu0 %2762
    %v2764 = vsel %vm573, %v2750, 0.0
    %2765 = vadd.xlane.f32.xlu0 %v2764
    %v2766 = vpop.xlane.xlu0 %2765
    %v2767 = vsel %vm573, %v2752, 0.0
    %2768 = vadd.xlane.f32.xlu0 %v2767
    %v2769 = vpop.xlane.xlu0 %2768
    %v2770 = vsel %vm573, %v2754, 0.0
    %2771 = vadd.xlane.f32.xlu0 %v2770
    %v2772 = vpop.xlane.xlu0 %2771
    %v2773 = vrcp.pop %v2757
    %v2774 = vrcp.pop %v2760
    %v2775 = vrcp.pop %v2763
    %v2776 = vrcp.pop %v2766
    %v2777 = vrcp.pop %v2769
    %v2778 = vrcp.pop %v2772
    %v2779 = vmul.f32 %v2744, %v2773
    %v2780 = vmul.f32 %v2746, %v2774
    %v2781 = vmul.f32 %v2748, %v2775
    %v2782 = vmul.f32 %v2750, %v2776
    %v2783 = vmul.f32 %v2752, %v2777
    %v2784 = vmul.f32 %v2754, %v2778
    %v2785 = vpack.c.bf16 %v2780, %v2779
    %v2786 = vpack.c.bf16 %v2782, %v2781
    %v2787 = vpack.c.bf16 %v2784, %v2783
    %2788 = vrot.lane.b32.xlu0 %v2164, 48
    %v2789 = vpop.permute.xlu0 %2788
    %2790 = vrot.lane.b32.xlu0 %v2165, 48
    %v2791 = vpop.permute.xlu0 %2790
    %2792 = vrot.lane.b32.xlu0 %v2166, 48
    %v2793 = vpop.permute.xlu0 %2792
    %v2798 = vsel %vm573, %v2785, 0
    %v2801 = vsel %vm573, %v2786, 0
    %v2804 = vsel %vm573, %v2787, 0
    %2806 = vmatprep.subr.bf16.mxu0 0
    %2807 = vmatpush1.bf16.msra.mxu0 %v2789
    %2808 = vmatprep.subr.bf16.mxu0 0
    %2809 = vmatpush1.bf16.msra.mxu0 %v2791
    %2810 = vmatprep.subr.bf16.mxu0 0
    %2811 = vmatpush1.bf16.msra.mxu0 %v2793
    %2812 = vmatprep.subr.bf16.mxu0 0
    %2813 = vmatpush1.bf16.msra.mxu0 0
    %2814 = vmatprep.subr.bf16.mxu0 0
    %2815 = vmatpush1.bf16.msra.mxu0 0
    %2816 = vmatprep.subr.bf16.mxu0 0
    %2817 = vmatpush1.bf16.msra.mxu0 0
    %2818 = vmatprep.subr.bf16.mxu0 0
    %2819 = vmatpush1.bf16.msra.mxu0 0
    %2820 = vmatprep.subr.bf16.mxu0 0
    %2821 = vmatpush1.bf16.msra.mxu0 0
    %2822 = vmatprep.subr.bf16.mxu0 0
    %2823 = vmatpush1.bf16.msra.mxu0 0
    %2824 = vmatprep.subr.bf16.mxu0 0
    %2825 = vmatpush1.bf16.msra.mxu0 0
    %2826 = vmatprep.subr.bf16.mxu0 0
    %2827 = vmatpush1.bf16.msra.mxu0 0
    %2828 = vmatprep.subr.bf16.mxu0 0
    %2829 = vmatpush1.bf16.msra.mxu0 0
    %2830 = vmatprep.subr.bf16.mxu0 0
    %2831 = vmatpush1.bf16.msra.mxu0 0
    %2832 = vmatprep.subr.bf16.mxu0 0
    %2833 = vmatpush1.bf16.msra.mxu0 0
    %2834 = vmatprep.subr.bf16.mxu0 0
    %2835 = vmatpush1.bf16.msra.mxu0 0
    %2836 = vmatprep.subr.bf16.mxu0 0
    %2837 = vmatpush1.bf16.msra.mxu0 0
    %2838 = vmatprep.mubr.bf16.mxu0 0
    %2839 = vmatmul.mubr.bf16.gmra.mrb[0].mxu0 %v2798
    %v2840 = vpop.f32.mrb[0].mxu0
    %v2841 = vadd.f32 0.0, %v2840
    %v2842 = vpop.f32.mrb[0].mxu0
    %v2843 = vpop.f32.mrb[0].mxu0
    %v2844 = vadd.f32 0.0, %v2843
    %v2845 = vpop.f32.mrb[0].mxu0
    %2846 = vmatprep.mubr.bf16.mxu0 0
    %2847 = vmatmul.mubr.bf16.gmra.mrb[0].mxu0 %v2801
    %v2848 = vpop.f32.mrb[0].mxu0
    %v2849 = vadd.f32 0.0, %v2848
    %v2850 = vpop.f32.mrb[0].mxu0
    %v2851 = vpop.f32.mrb[0].mxu0
    %v2852 = vadd.f32 0.0, %v2851
    %v2853 = vpop.f32.mrb[0].mxu0
    %2854 = vmatprep.mubr.bf16.mxu0 0
    %2855 = vmatmul.mubr.bf16.gmra.mrb[0].mxu0 %v2804
    %v2856 = vpop.f32.mrb[0].mxu0
    %v2857 = vadd.f32 0.0, %v2856
    %v2858 = vpop.f32.mrb[0].mxu0
    %v2859 = vpop.f32.mrb[0].mxu0
    %v2860 = vadd.f32 0.0, %v2859
    %v2861 = vpop.f32.mrb[0].mxu0
    %2862 = vdwg.mxu0
    %v2863 = vpack.c.bf16 %v2844, %v2841
    %v2864 = vpack.c.bf16 %v2852, %v2849
    %v2865 = vpack.c.bf16 %v2860, %v2857
    %2866 = vrot.lane.b32.xlu0 %v2164, 104
    %v2867 = vpop.permute.xlu0 %2866
    %2868 = vrot.lane.b32.xlu0 %v2165, 104
    %v2869 = vpop.permute.xlu0 %2868
    %2870 = vrot.lane.b32.xlu0 %v2166, 104
    %v2871 = vpop.permute.xlu0 %2870
    %2872 = vrot.lane.b32.xlu0 %v2164, 72
    %v2873 = vpop.permute.xlu0 %2872
    %2874 = vrot.lane.b32.xlu0 %v2165, 72
    %v2875 = vpop.permute.xlu0 %2874
    %2876 = vrot.lane.b32.xlu0 %v2166, 72
    %v2877 = vpop.permute.xlu0 %2876
    %v2879 = vsel %vm497, %v2867, 0
    %v2882 = vsel %vm497, %v2869, 0
    %v2885 = vsel %vm497, %v2871, 0
    %v2888 = vsel %vm497, %v2873, 0
    %v2891 = vsel %vm497, %v2875, 0
    %v2894 = vsel %vm497, %v2877, 0
    %2896 = vmatprep.subr.bf16.mxu0 0
    %2897 = vmatpush1.bf16.xpose.msra.mxu0 %v2888
    %2898 = vmatprep.subr.bf16.mxu0 0
    %2899 = vmatpush1.bf16.xpose.msra.mxu0 %v2891
    %2900 = vmatprep.subr.bf16.mxu0 0
    %2901 = vmatpush1.bf16.xpose.msra.mxu0 %v2894
    %2902 = vmatprep.subr.bf16.mxu0 0
    %2903 = vmatpush1.bf16.xpose.msra.mxu0 0
    %2904 = vmatprep.subr.bf16.mxu0 0
    %2905 = vmatpush1.bf16.xpose.msra.mxu0 0
    %2906 = vmatprep.subr.bf16.mxu0 0
    %2907 = vmatpush1.bf16.xpose.msra.mxu0 0
    %2908 = vmatprep.subr.bf16.mxu0 0
    %2909 = vmatpush1.bf16.xpose.msra.mxu0 0
    %2910 = vmatprep.subr.bf16.mxu0 0
    %2911 = vmatpush1.bf16.xpose.msra.mxu0 0
    %2912 = vmatprep.subr.bf16.mxu0 0
    %2913 = vmatpush1.bf16.xpose.msra.mxu0 0
    %2914 = vmatprep.subr.bf16.mxu0 0
    %2915 = vmatpush1.bf16.xpose.msra.mxu0 0
    %2916 = vmatprep.subr.bf16.mxu0 0
    %2917 = vmatpush1.bf16.xpose.msra.mxu0 0
    %2918 = vmatprep.subr.bf16.mxu0 0
    %2919 = vmatpush1.bf16.xpose.msra.mxu0 0
    %2920 = vmatprep.subr.bf16.mxu0 0
    %2921 = vmatpush1.bf16.xpose.msra.mxu0 0
    %2922 = vmatprep.subr.bf16.mxu0 0
    %2923 = vmatpush1.bf16.xpose.msra.mxu0 0
    %2924 = vmatprep.subr.bf16.mxu0 0
    %2925 = vmatpush1.bf16.xpose.msra.mxu0 0
    %2926 = vmatprep.subr.bf16.mxu0 0
    %2927 = vmatpush1.bf16.xpose.msra.mxu0 0
    %2928 = vmatprep.mubr.bf16.mxu0 0
    %2929 = vmatmul.mubr.bf16.gmra.mrb[0].mxu0 %v2879
    %v2930 = vpop.f32.mrb[0].mxu0
    %v2931 = vadd.f32 %v281, %v2930
    %v2932 = vpop.f32.mrb[0].mxu0
    %v2933 = vpop.f32.mrb[0].mxu0
    %v2934 = vadd.f32 %v282, %v2933
    %v2935 = vpop.f32.mrb[0].mxu0
    %2936 = vmatprep.mubr.bf16.mxu0 0
    %2937 = vmatmul.mubr.bf16.gmra.mrb[0].mxu0 %v2882
    %v2938 = vpop.f32.mrb[0].mxu0
    %v2939 = vadd.f32 %v283, %v2938
    %v2940 = vpop.f32.mrb[0].mxu0
    %v2941 = vpop.f32.mrb[0].mxu0
    %v2942 = vadd.f32 %v284, %v2941
    %v2943 = vpop.f32.mrb[0].mxu0
    %2944 = vmatprep.mubr.bf16.mxu0 0
    %2945 = vmatmul.mubr.bf16.gmra.mrb[0].mxu0 %v2885
    %v2946 = vpop.f32.mrb[0].mxu0
    %v2947 = vadd.f32 %v285, %v2946
    %v2948 = vpop.f32.mrb[0].mxu0
    %v2949 = vpop.f32.mrb[0].mxu0
    %v2950 = vadd.f32 %v286, %v2949
    %v2951 = vpop.f32.mrb[0].mxu0
    %2952 = vdwg.mxu0
    %v2953 = vsel %vm573, %v2931, -inf
    %2954 = vmax.xlane.f32.xlu0 %v2953
    %v2955 = vpop.xlane.xlu0 %2954
    %v2956 = vsel %vm573, %v2934, -inf
    %2957 = vmax.xlane.f32.xlu0 %v2956
    %v2958 = vpop.xlane.xlu0 %2957
    %v2959 = vsel %vm573, %v2939, -inf
    %2960 = vmax.xlane.f32.xlu0 %v2959
    %v2961 = vpop.xlane.xlu0 %2960
    %v2962 = vsel %vm573, %v2942, -inf
    %2963 = vmax.xlane.f32.xlu0 %v2962
    %v2964 = vpop.xlane.xlu0 %2963
    %v2965 = vsel %vm573, %v2947, -inf
    %2966 = vmax.xlane.f32.xlu0 %v2965
    %v2967 = vpop.xlane.xlu0 %2966
    %v2968 = vsel %vm573, %v2950, -inf
    %2969 = vmax.xlane.f32.xlu0 %v2968
    %v2970 = vpop.xlane.xlu0 %2969
    %v2971 = vsub.f32 %v2931, %v2955
    %v2972 = vsub.f32 %v2934, %v2958
    %v2973 = vsub.f32 %v2939, %v2961
    %v2974 = vsub.f32 %v2942, %v2964
    %v2975 = vsub.f32 %v2947, %v2967
    %v2976 = vsub.f32 %v2950, %v2970
    %v2977 = vmul.f32 %v2971, 1.442695
    %v2978 = vpow.pop %v2977
    %v2979 = vmul.f32 %v2972, 1.442695
    %v2980 = vpow.pop %v2979
    %v2981 = vmul.f32 %v2973, 1.442695
    %v2982 = vpow.pop %v2981
    %v2983 = vmul.f32 %v2974, 1.442695
    %v2984 = vpow.pop %v2983
    %v2985 = vmul.f32 %v2975, 1.442695
    %v2986 = vpow.pop %v2985
    %v2987 = vmul.f32 %v2976, 1.442695
    %v2988 = vpow.pop %v2987
    %v2989 = vsel %vm573, %v2978, 0.0
    %2990 = vadd.xlane.f32.xlu0 %v2989
    %v2991 = vpop.xlane.xlu0 %2990
    %v2992 = vsel %vm573, %v2980, 0.0
    %2993 = vadd.xlane.f32.xlu0 %v2992
    %v2994 = vpop.xlane.xlu0 %2993
    %v2995 = vsel %vm573, %v2982, 0.0
    %2996 = vadd.xlane.f32.xlu0 %v2995
    %v2997 = vpop.xlane.xlu0 %2996
    %v2998 = vsel %vm573, %v2984, 0.0
    %2999 = vadd.xlane.f32.xlu0 %v2998
    %v3000 = vpop.xlane.xlu0 %2999
    %v3001 = vsel %vm573, %v2986, 0.0
    %3002 = vadd.xlane.f32.xlu0 %v3001
    %v3003 = vpop.xlane.xlu0 %3002
    %v3004 = vsel %vm573, %v2988, 0.0
    %3005 = vadd.xlane.f32.xlu0 %v3004
    %v3006 = vpop.xlane.xlu0 %3005
    %v3007 = vrcp.pop %v2991
    %v3008 = vrcp.pop %v2994
    %v3009 = vrcp.pop %v2997
    %v3010 = vrcp.pop %v3000
    %v3011 = vrcp.pop %v3003
    %v3012 = vrcp.pop %v3006
    %v3013 = vmul.f32 %v2978, %v3007
    %v3014 = vmul.f32 %v2980, %v3008
    %v3015 = vmul.f32 %v2982, %v3009
    %v3016 = vmul.f32 %v2984, %v3010
    %v3017 = vmul.f32 %v2986, %v3011
    %v3018 = vmul.f32 %v2988, %v3012
    %v3019 = vpack.c.bf16 %v3014, %v3013
    %v3020 = vpack.c.bf16 %v3016, %v3015
    %v3021 = vpack.c.bf16 %v3018, %v3017
    %3022 = vrot.lane.b32.xlu0 %v2164, 40
    %v3023 = vpop.permute.xlu0 %3022
    %3024 = vrot.lane.b32.xlu0 %v2165, 40
    %v3025 = vpop.permute.xlu0 %3024
    %3026 = vrot.lane.b32.xlu0 %v2166, 40
    %v3027 = vpop.permute.xlu0 %3026
    %v3032 = vsel %vm573, %v3019, 0
    %v3035 = vsel %vm573, %v3020, 0
    %v3038 = vsel %vm573, %v3021, 0
    %3040 = vmatprep.subr.bf16.mxu0 0
    %3041 = vmatpush1.bf16.msra.mxu0 %v3023
    %3042 = vmatprep.subr.bf16.mxu0 0
    %3043 = vmatpush1.bf16.msra.mxu0 %v3025
    %3044 = vmatprep.subr.bf16.mxu0 0
    %3045 = vmatpush1.bf16.msra.mxu0 %v3027
    %3046 = vmatprep.subr.bf16.mxu0 0
    %3047 = vmatpush1.bf16.msra.mxu0 0
    %3048 = vmatprep.subr.bf16.mxu0 0
    %3049 = vmatpush1.bf16.msra.mxu0 0
    %3050 = vmatprep.subr.bf16.mxu0 0
    %3051 = vmatpush1.bf16.msra.mxu0 0
    %3052 = vmatprep.subr.bf16.mxu0 0
    %3053 = vmatpush1.bf16.msra.mxu0 0
    %3054 = vmatprep.subr.bf16.mxu0 0
    %3055 = vmatpush1.bf16.msra.mxu0 0
    %3056 = vmatprep.subr.bf16.mxu0 0
    %3057 = vmatpush1.bf16.msra.mxu0 0
    %3058 = vmatprep.subr.bf16.mxu0 0
    %3059 = vmatpush1.bf16.msra.mxu0 0
    %3060 = vmatprep.subr.bf16.mxu0 0
    %3061 = vmatpush1.bf16.msra.mxu0 0
    %3062 = vmatprep.subr.bf16.mxu0 0
    %3063 = vmatpush1.bf16.msra.mxu0 0
    %3064 = vmatprep.subr.bf16.mxu0 0
    %3065 = vmatpush1.bf16.msra.mxu0 0
    %3066 = vmatprep.subr.bf16.mxu0 0
    %3067 = vmatpush1.bf16.msra.mxu0 0
    %3068 = vmatprep.subr.bf16.mxu0 0
    %3069 = vmatpush1.bf16.msra.mxu0 0
    %3070 = vmatprep.subr.bf16.mxu0 0
    %3071 = vmatpush1.bf16.msra.mxu0 0
    %3072 = vmatprep.mubr.bf16.mxu0 0
    %3073 = vmatmul.mubr.bf16.gmra.mrb[0].mxu0 %v3032
    %v3074 = vpop.f32.mrb[0].mxu0
    %v3075 = vadd.f32 0.0, %v3074
    %v3076 = vpop.f32.mrb[0].mxu0
    %v3077 = vpop.f32.mrb[0].mxu0
    %v3078 = vadd.f32 0.0, %v3077
    %v3079 = vpop.f32.mrb[0].mxu0
    %3080 = vmatprep.mubr.bf16.mxu0 0
    %3081 = vmatmul.mubr.bf16.gmra.mrb[0].mxu0 %v3035
    %v3082 = vpop.f32.mrb[0].mxu0
    %v3083 = vadd.f32 0.0, %v3082
    %v3084 = vpop.f32.mrb[0].mxu0
    %v3085 = vpop.f32.mrb[0].mxu0
    %v3086 = vadd.f32 0.0, %v3085
    %v3087 = vpop.f32.mrb[0].mxu0
    %3088 = vmatprep.mubr.bf16.mxu0 0
    %3089 = vmatmul.mubr.bf16.gmra.mrb[0].mxu0 %v3038
    %v3090 = vpop.f32.mrb[0].mxu0
    %v3091 = vadd.f32 0.0, %v3090
    %v3092 = vpop.f32.mrb[0].mxu0
    %v3093 = vpop.f32.mrb[0].mxu0
    %v3094 = vadd.f32 0.0, %v3093
    %v3095 = vpop.f32.mrb[0].mxu0
    %3096 = vdwg.mxu0
    %v3097 = vpack.c.bf16 %v3078, %v3075
    %v3098 = vpack.c.bf16 %v3086, %v3083
    %v3099 = vpack.c.bf16 %v3094, %v3091
    %3103 = vrot.lane.b32.xlu0 %v2629, 8
    %v3104 = vpop.permute.xlu0 %3103
    %3105 = vrot.lane.b32.xlu0 %v2630, 8
    %v3106 = vpop.permute.xlu0 %3105
    %3107 = vrot.lane.b32.xlu0 %v2631, 8
    %v3108 = vpop.permute.xlu0 %3107
    %3112 = vrot.lane.b32.xlu0 %v2863, 16
    %v3113 = vpop.permute.xlu0 %3112
    %3114 = vrot.lane.b32.xlu0 %v2864, 16
    %v3115 = vpop.permute.xlu0 %3114
    %3116 = vrot.lane.b32.xlu0 %v2865, 16
    %v3117 = vpop.permute.xlu0 %3116
    %3121 = vrot.lane.b32.xlu0 %v3097, 24
    %v3122 = vpop.permute.xlu0 %3121
    %3123 = vrot.lane.b32.xlu0 %v3098, 24
    %v3124 = vpop.permute.xlu0 %3123
    %3125 = vrot.lane.b32.xlu0 %v3099, 24
    %v3126 = vpop.permute.xlu0 %3125
    %v3129 = vsel %vm497, %v2395, %v3104
    %v3132 = vsel %vm497, %v2396, %v3106
    %v3135 = vsel %vm497, %v2397, %v3108
    %v3137 = vsel %vm1459, %v3129, %v3113
    %v3139 = vsel %vm1459, %v3132, %v3115
    %v3141 = vsel %vm1459, %v3135, %v3117
    %v3143 = vsel %vm1466, %v3137, %v3122
    %v3145 = vsel %vm1466, %v3139, %v3124
    %v3147 = vsel %vm1466, %v3141, %v3126
    %s3148 = scalar_lea.vmem %s8, 16
    %v3149 = vld [vmem:[%s3148] sm:$0xf]
    %v3150 = vld [vmem:[%s3148 + $0x4] sm:$0xf]
    %v3151 = vld [vmem:[%s3148 + $0x8] sm:$0xf]
    %v3152 = vld [vmem:[%s3148 + $0xc] sm:$0xf]
    %v3157 = vunpack.c.l.b16 %v3149
    %v3158 = vunpack.c.l.b16 %v3150
    %v3159 = vunpack.c.l.b16 %v3151
    %v3160 = vunpack.c.l.b16 %v3152
    %v3161 = vpack.c.b16 %v3158, %v3157
    %v3162 = vpack.c.b16 %v3160, %v3159
    %v3165 = vsel %vm289, %v3143, 0
    %v3167 = vsel %vm289, %v3145, 0
    %v3169 = vsel %vm289, %v3147, 0
    %3171 = vmatprep.subr.bf16.mxu0 0
    %3172 = vmatpush1.bf16.msra.mxu0 %v3161
    %3173 = vmatprep.subr.bf16.mxu0 0
    %3174 = vmatpush1.bf16.msra.mxu0 %v3162
    %3175 = vmatprep.subr.bf16.mxu0 0
    %3176 = vmatpush1.bf16.msra.mxu0 0
    %3177 = vmatprep.subr.bf16.mxu0 0
    %3178 = vmatpush1.bf16.msra.mxu0 0
    %3179 = vmatprep.subr.bf16.mxu0 0
    %3180 = vmatpush1.bf16.msra.mxu0 0
    %3181 = vmatprep.subr.bf16.mxu0 0
    %3182 = vmatpush1.bf16.msra.mxu0 0
    %3183 = vmatprep.subr.bf16.mxu0 0
    %3184 = vmatpush1.bf16.msra.mxu0 0
    %3185 = vmatprep.subr.bf16.mxu0 0
    %3186 = vmatpush1.bf16.msra.mxu0 0
    %3187 = vmatprep.subr.bf16.mxu0 0
    %3188 = vmatpush1.bf16.msra.mxu0 0
    %3189 = vmatprep.subr.bf16.mxu0 0
    %3190 = vmatpush1.bf16.msra.mxu0 0
    %3191 = vmatprep.subr.bf16.mxu0 0
    %3192 = vmatpush1.bf16.msra.mxu0 0
    %3193 = vmatprep.subr.bf16.mxu0 0
    %3194 = vmatpush1.bf16.msra.mxu0 0
    %3195 = vmatprep.subr.bf16.mxu0 0
    %3196 = vmatpush1.bf16.msra.mxu0 0
    %3197 = vmatprep.subr.bf16.mxu0 0
    %3198 = vmatpush1.bf16.msra.mxu0 0
    %3199 = vmatprep.subr.bf16.mxu0 0
    %3200 = vmatpush1.bf16.msra.mxu0 0
    %3201 = vmatprep.subr.bf16.mxu0 0
    %3202 = vmatpush1.bf16.msra.mxu0 0
    %3203 = vmatprep.mubr.bf16.mxu0 0
    %3204 = vmatmul.mubr.bf16.gmra.mrb[0].mxu0 %v3165
    %v3205 = vpop.f32.mrb[0].mxu0
    %v3206 = vadd.f32 0.0, %v3205
    %v3207 = vpop.f32.mrb[0].mxu0
    %v3208 = vpop.f32.mrb[0].mxu0
    %v3209 = vadd.f32 0.0, %v3208
    %v3210 = vpop.f32.mrb[0].mxu0
    %3211 = vmatprep.mubr.bf16.mxu0 0
    %3212 = vmatmul.mubr.bf16.gmra.mrb[0].mxu0 %v3167
    %v3213 = vpop.f32.mrb[0].mxu0
    %v3214 = vadd.f32 0.0, %v3213
    %v3215 = vpop.f32.mrb[0].mxu0
    %v3216 = vpop.f32.mrb[0].mxu0
    %v3217 = vadd.f32 0.0, %v3216
    %v3218 = vpop.f32.mrb[0].mxu0
    %3219 = vmatprep.mubr.bf16.mxu0 0
    %3220 = vmatmul.mubr.bf16.gmra.mrb[0].mxu0 %v3169
    %v3221 = vpop.f32.mrb[0].mxu0
    %v3222 = vadd.f32 0.0, %v3221
    %v3223 = vpop.f32.mrb[0].mxu0
    %v3224 = vpop.f32.mrb[0].mxu0
    %v3225 = vadd.f32 0.0, %v3224
    %v3226 = vpop.f32.mrb[0].mxu0
    %3227 = vdwg.mxu0
    %v3228 = vadd.f32 %v1958, %v3206
    %v3229 = vadd.f32 %v1959, %v3209
    %v3230 = vadd.f32 %v1960, %v3214
    %v3231 = vadd.f32 %v1961, %v3217
    %v3232 = vadd.f32 %v1962, %v3222
    %v3233 = vadd.f32 %v1963, %v3225
    %s3234 = scalar_lea.vmem %s9, 1
    %v3235 = vld [vmem:[%s3234] sm:$0x1]
    %v3237 = vlaneseq
    %v3238 = vshrl.u32 %v3237, 7
    %v3239 = vsub.s32 0, %v3238
    %v3240 = vrot.slane %v3235, %v3239
    %v3242 = vadd.f32 %v3228, %v3240
    %v3243 = vadd.f32 %v3229, %v3240
    %v3244 = vadd.f32 %v3230, %v3240
    %v3245 = vadd.f32 %v3231, %v3240
    %v3246 = vadd.f32 %v3232, %v3240
    %v3247 = vadd.f32 %v3233, %v3240
    %s3248 = scalar_lea.vmem %s10, 1
    %v3249 = vld [vmem:[%s3248] sm:$0x1]
    %s3250 = scalar_lea.vmem %s11, 1
    %v3251 = vld [vmem:[%s3250] sm:$0x1]
    %v3252 = vsel %vm289, %v3242, 0.0
    %3253 = vadd.xlane.f32.xlu0 %v3252
    %v3254 = vpop.xlane.xlu0 %3253
    %v3255 = vsel %vm289, %v3243, 0.0
    %3256 = vadd.xlane.f32.xlu0 %v3255
    %v3257 = vpop.xlane.xlu0 %3256
    %v3258 = vsel %vm289, %v3244, 0.0
    %3259 = vadd.xlane.f32.xlu0 %v3258
    %v3260 = vpop.xlane.xlu0 %3259
    %v3261 = vsel %vm289, %v3245, 0.0
    %3262 = vadd.xlane.f32.xlu0 %v3261
    %v3263 = vpop.xlane.xlu0 %3262
    %v3264 = vsel %vm289, %v3246, 0.0
    %3265 = vadd.xlane.f32.xlu0 %v3264
    %v3266 = vpop.xlane.xlu0 %3265
    %v3267 = vsel %vm289, %v3247, 0.0
    %3268 = vadd.xlane.f32.xlu0 %v3267
    %v3269 = vpop.xlane.xlu0 %3268
    %v3270 = vmul.f32 %v3254, %v308
    %v3271 = vmul.f32 %v3257, %v308
    %v3272 = vmul.f32 %v3260, %v308
    %v3273 = vmul.f32 %v3263, %v308
    %v3274 = vmul.f32 %v3266, %v308
    %v3275 = vmul.f32 %v3269, %v308
    %v3276 = vsub.f32 %v3242, %v3270
    %v3277 = vsub.f32 %v3243, %v3271
    %v3278 = vsub.f32 %v3244, %v3272
    %v3279 = vsub.f32 %v3245, %v3273
    %v3280 = vsub.f32 %v3246, %v3274
    %v3281 = vsub.f32 %v3247, %v3275
    %v3282 = vmul.f32 %v3276, %v3276
    %v3283 = vmul.f32 %v3277, %v3277
    %v3284 = vmul.f32 %v3278, %v3278
    %v3285 = vmul.f32 %v3279, %v3279
    %v3286 = vmul.f32 %v3280, %v3280
    %v3287 = vmul.f32 %v3281, %v3281
    %v3288 = vsel %vm289, %v3282, 0.0
    %3289 = vadd.xlane.f32.xlu0 %v3288
    %v3290 = vpop.xlane.xlu0 %3289
    %v3291 = vsel %vm289, %v3283, 0.0
    %3292 = vadd.xlane.f32.xlu0 %v3291
    %v3293 = vpop.xlane.xlu0 %3292
    %v3294 = vsel %vm289, %v3284, 0.0
    %3295 = vadd.xlane.f32.xlu0 %v3294
    %v3296 = vpop.xlane.xlu0 %3295
    %v3297 = vsel %vm289, %v3285, 0.0
    %3298 = vadd.xlane.f32.xlu0 %v3297
    %v3299 = vpop.xlane.xlu0 %3298
    %v3300 = vsel %vm289, %v3286, 0.0
    %3301 = vadd.xlane.f32.xlu0 %v3300
    %v3302 = vpop.xlane.xlu0 %3301
    %v3303 = vsel %vm289, %v3287, 0.0
    %3304 = vadd.xlane.f32.xlu0 %v3303
    %v3305 = vpop.xlane.xlu0 %3304
    %v3306 = vmul.f32 %v3290, %v308
    %v3307 = vmul.f32 %v3293, %v308
    %v3308 = vmul.f32 %v3296, %v308
    %v3309 = vmul.f32 %v3299, %v308
    %v3310 = vmul.f32 %v3302, %v308
    %v3311 = vmul.f32 %v3305, %v308
    %v3312 = vadd.f32 %v3306, 1e-12
    %v3313 = vadd.f32 %v3307, 1e-12
    %v3314 = vadd.f32 %v3308, 1e-12
    %v3315 = vadd.f32 %v3309, 1e-12
    %v3316 = vadd.f32 %v3310, 1e-12
    %v3317 = vadd.f32 %v3311, 1e-12
    %v3318 = vrsqrt.pop %v3312
    %v3319 = vrsqrt.pop %v3313
    %v3320 = vrsqrt.pop %v3314
    %v3321 = vrsqrt.pop %v3315
    %v3322 = vrsqrt.pop %v3316
    %v3323 = vrsqrt.pop %v3317
    %v3324 = vmul.f32 %v3276, %v3318
    %v3325 = vmul.f32 %v3277, %v3319
    %v3326 = vmul.f32 %v3278, %v3320
    %v3327 = vmul.f32 %v3279, %v3321
    %v3328 = vmul.f32 %v3280, %v3322
    %v3329 = vmul.f32 %v3281, %v3323
    %v3331 = vlaneseq
    %v3332 = vshrl.u32 %v3331, 7
    %v3333 = vsub.s32 0, %v3332
    %v3334 = vrot.slane %v3249, %v3333
    %v3336 = vmul.f32 %v3324, %v3334
    %v3337 = vmul.f32 %v3325, %v3334
    %v3338 = vmul.f32 %v3326, %v3334
    %v3339 = vmul.f32 %v3327, %v3334
    %v3340 = vmul.f32 %v3328, %v3334
    %v3341 = vmul.f32 %v3329, %v3334
    %v3343 = vlaneseq
    %v3344 = vshrl.u32 %v3343, 7
    %v3345 = vsub.s32 0, %v3344
    %v3346 = vrot.slane %v3251, %v3345
    %v3348 = vadd.f32 %v3336, %v3346
    %v3349 = vadd.f32 %v3337, %v3346
    %v3350 = vadd.f32 %v3338, %v3346
    %v3351 = vadd.f32 %v3339, %v3346
    %v3352 = vadd.f32 %v3340, %v3346
    %v3353 = vadd.f32 %v3341, %v3346
    %s3354 = scalar_lea.vmem %s12, 16
    %v3355 = vld [vmem:[%s3354] sm:$0xf]
    %v3356 = vld [vmem:[%s3354 + $0x4] sm:$0xf]
    %v3357 = vld [vmem:[%s3354 + $0x8] sm:$0xf]
    %v3358 = vld [vmem:[%s3354 + $0xc] sm:$0xf]
    %v3359 = vpack.c.bf16 %v3349, %v3348
    %v3360 = vpack.c.bf16 %v3351, %v3350
    %v3361 = vpack.c.bf16 %v3353, %v3352
    %s3362 = scalar_lea.vmem %s13, 1
    %v3363 = vld [vmem:[%s3362] sm:$0x1]
    %v3365 = vlaneseq
    %v3366 = vshrl.u32 %v3365, 7
    %v3367 = vsub.s32 0, %v3366
    %v3368 = vrot.slane %v3363, %v3367
    %v3374 = vunpack.c.l.b16 %v3355
    %v3375 = vunpack.c.l.b16 %v3356
    %v3376 = vunpack.c.l.b16 %v3357
    %v3377 = vunpack.c.l.b16 %v3358
    %v3378 = vpack.c.b16 %v3375, %v3374
    %v3379 = vpack.c.b16 %v3377, %v3376
    %v3383 = vsel %vm289, %v3359, 0
    %v3386 = vsel %vm289, %v3360, 0
    %v3389 = vsel %vm289, %v3361, 0
    %3391 = vmatprep.subr.bf16.mxu0 0
    %3392 = vmatpush1.bf16.msra.mxu0 %v3378
    %3393 = vmatprep.subr.bf16.mxu0 0
    %3394 = vmatpush1.bf16.msra.mxu0 %v3379
    %3395 = vmatprep.subr.bf16.mxu0 0
    %3396 = vmatpush1.bf16.msra.mxu0 0
    %3397 = vmatprep.subr.bf16.mxu0 0
    %3398 = vmatpush1.bf16.msra.mxu0 0
    %3399 = vmatprep.subr.bf16.mxu0 0
    %3400 = vmatpush1.bf16.msra.mxu0 0
    %3401 = vmatprep.subr.bf16.mxu0 0
    %3402 = vmatpush1.bf16.msra.mxu0 0
    %3403 = vmatprep.subr.bf16.mxu0 0
    %3404 = vmatpush1.bf16.msra.mxu0 0
    %3405 = vmatprep.subr.bf16.mxu0 0
    %3406 = vmatpush1.bf16.msra.mxu0 0
    %3407 = vmatprep.subr.bf16.mxu0 0
    %3408 = vmatpush1.bf16.msra.mxu0 0
    %3409 = vmatprep.subr.bf16.mxu0 0
    %3410 = vmatpush1.bf16.msra.mxu0 0
    %3411 = vmatprep.subr.bf16.mxu0 0
    %3412 = vmatpush1.bf16.msra.mxu0 0
    %3413 = vmatprep.subr.bf16.mxu0 0
    %3414 = vmatpush1.bf16.msra.mxu0 0
    %3415 = vmatprep.subr.bf16.mxu0 0
    %3416 = vmatpush1.bf16.msra.mxu0 0
    %3417 = vmatprep.subr.bf16.mxu0 0
    %3418 = vmatpush1.bf16.msra.mxu0 0
    %3419 = vmatprep.subr.bf16.mxu0 0
    %3420 = vmatpush1.bf16.msra.mxu0 0
    %3421 = vmatprep.subr.bf16.mxu0 0
    %3422 = vmatpush1.bf16.msra.mxu0 0
    %3423 = vmatprep.mubr.bf16.mxu0 0
    %3424 = vmatmul.mubr.bf16.gmra.mrb[0].mxu0 %v3383
    %v3425 = vpop.f32.mrb[0].mxu0
    %v3426 = vadd.f32 %v3368, %v3425
    %v3427 = vpop.f32.mrb[0].mxu0
    %v3428 = vpop.f32.mrb[0].mxu0
    %v3429 = vadd.f32 %v3368, %v3428
    %v3430 = vpop.f32.mrb[0].mxu0
    %3431 = vmatprep.mubr.bf16.mxu0 0
    %3432 = vmatmul.mubr.bf16.gmra.mrb[0].mxu0 %v3386
    %v3433 = vpop.f32.mrb[0].mxu0
    %v3434 = vadd.f32 %v3368, %v3433
    %v3435 = vpop.f32.mrb[0].mxu0
    %v3436 = vpop.f32.mrb[0].mxu0
    %v3437 = vadd.f32 %v3368, %v3436
    %v3438 = vpop.f32.mrb[0].mxu0
    %3439 = vmatprep.mubr.bf16.mxu0 0
    %3440 = vmatmul.mubr.bf16.gmra.mrb[0].mxu0 %v3389
    %v3441 = vpop.f32.mrb[0].mxu0
    %v3442 = vadd.f32 %v3368, %v3441
    %v3443 = vpop.f32.mrb[0].mxu0
    %v3444 = vpop.f32.mrb[0].mxu0
    %v3445 = vadd.f32 %v3368, %v3444
    %v3446 = vpop.f32.mrb[0].mxu0
    %3447 = vdwg.mxu0
    %v3448 = vmul.f32 %v3426, %v3426
    %v3449 = vmul.f32 %v3429, %v3429
    %v3450 = vmul.f32 %v3434, %v3434
    %v3451 = vmul.f32 %v3437, %v3437
    %v3452 = vmul.f32 %v3442, %v3442
    %v3453 = vmul.f32 %v3445, %v3445
    %v3454 = vmul.f32 %v3426, %v3448
    %v3455 = vmul.f32 %v3429, %v3449
    %v3456 = vmul.f32 %v3434, %v3450
    %v3457 = vmul.f32 %v3437, %v3451
    %v3458 = vmul.f32 %v3442, %v3452
    %v3459 = vmul.f32 %v3445, %v3453
    %v3460 = vmul.f32 %v3454, 0.044715
    %v3461 = vmul.f32 %v3455, 0.044715
    %v3462 = vmul.f32 %v3456, 0.044715
    %v3463 = vmul.f32 %v3457, 0.044715
    %v3464 = vmul.f32 %v3458, 0.044715
    %v3465 = vmul.f32 %v3459, 0.044715
    %v3466 = vadd.f32 %v3426, %v3460
    %v3467 = vadd.f32 %v3429, %v3461
    %v3468 = vadd.f32 %v3434, %v3462
    %v3469 = vadd.f32 %v3437, %v3463
    %v3470 = vadd.f32 %v3442, %v3464
    %v3471 = vadd.f32 %v3445, %v3465
    %v3472 = vmul.f32 %v3466, 0.7978846
    %v3473 = vmul.f32 %v3467, 0.7978846
    %v3474 = vmul.f32 %v3468, 0.7978846
    %v3475 = vmul.f32 %v3469, 0.7978846
    %v3476 = vmul.f32 %v3470, 0.7978846
    %v3477 = vmul.f32 %v3471, 0.7978846
    %v3478 = vtanh.pop %v3472
    %v3479 = vtanh.pop %v3473
    %v3480 = vtanh.pop %v3474
    %v3481 = vtanh.pop %v3475
    %v3482 = vtanh.pop %v3476
    %v3483 = vtanh.pop %v3477
    %v3484 = vadd.f32 %v3478, 1.0
    %v3485 = vadd.f32 %v3479, 1.0
    %v3486 = vadd.f32 %v3480, 1.0
    %v3487 = vadd.f32 %v3481, 1.0
    %v3488 = vadd.f32 %v3482, 1.0
    %v3489 = vadd.f32 %v3483, 1.0
    %v3490 = vmul.f32 %v3484, 0.5
    %v3491 = vmul.f32 %v3485, 0.5
    %v3492 = vmul.f32 %v3486, 0.5
    %v3493 = vmul.f32 %v3487, 0.5
    %v3494 = vmul.f32 %v3488, 0.5
    %v3495 = vmul.f32 %v3489, 0.5
    %v3496 = vmul.f32 %v3426, %v3490
    %v3497 = vmul.f32 %v3429, %v3491
    %v3498 = vmul.f32 %v3434, %v3492
    %v3499 = vmul.f32 %v3437, %v3493
    %v3500 = vmul.f32 %v3442, %v3494
    %v3501 = vmul.f32 %v3445, %v3495
    %s3502 = scalar_lea.vmem %s14, 64
    %v3503 = vld [vmem:[%s3502] sm:$0xf]
    %v3504 = vld [vmem:[%s3502 + $0x4] sm:$0xf]
    %v3505 = vld [vmem:[%s3502 + $0x8] sm:$0xf]
    %v3506 = vld [vmem:[%s3502 + $0xc] sm:$0xf]
    %v3507 = vld [vmem:[%s3502 + $0x10] sm:$0xf]
    %v3508 = vld [vmem:[%s3502 + $0x14] sm:$0xf]
    %v3509 = vld [vmem:[%s3502 + $0x18] sm:$0xf]
    %v3510 = vld [vmem:[%s3502 + $0x1c] sm:$0xf]
    %v3511 = vld [vmem:[%s3502 + $0x20] sm:$0xf]
    %v3512 = vld [vmem:[%s3502 + $0x24] sm:$0xf]
    %v3513 = vld [vmem:[%s3502 + $0x28] sm:$0xf]
    %v3514 = vld [vmem:[%s3502 + $0x2c] sm:$0xf]
    %v3515 = vld [vmem:[%s3502 + $0x30] sm:$0xf]
    %v3516 = vld [vmem:[%s3502 + $0x34] sm:$0xf]
    %v3517 = vld [vmem:[%s3502 + $0x38] sm:$0xf]
    %v3518 = vld [vmem:[%s3502 + $0x3c] sm:$0xf]
    %v3519 = vpack.c.bf16 %v3497, %v3496
    %v3520 = vpack.c.bf16 %v3499, %v3498
    %v3521 = vpack.c.bf16 %v3501, %v3500
    %v3538 = vunpack.c.l.b16 %v3503
    %v3539 = vunpack.c.l.b16 %v3504
    %v3540 = vunpack.c.l.b16 %v3505
    %v3541 = vunpack.c.l.b16 %v3506
    %v3542 = vunpack.c.l.b16 %v3507
    %v3543 = vunpack.c.l.b16 %v3508
    %v3544 = vunpack.c.l.b16 %v3509
    %v3545 = vunpack.c.l.b16 %v3510
    %v3546 = vunpack.c.l.b16 %v3511
    %v3547 = vunpack.c.l.b16 %v3512
    %v3548 = vunpack.c.l.b16 %v3513
    %v3549 = vunpack.c.l.b16 %v3514
    %v3550 = vunpack.c.l.b16 %v3515
    %v3551 = vunpack.c.l.b16 %v3516
    %v3552 = vunpack.c.l.b16 %v3517
    %v3553 = vunpack.c.l.b16 %v3518
    %v3554 = vpack.c.b16 %v3539, %v3538
    %v3555 = vpack.c.b16 %v3541, %v3540
    %v3556 = vpack.c.b16 %v3543, %v3542
    %v3557 = vpack.c.b16 %v3545, %v3544
    %v3558 = vpack.c.b16 %v3547, %v3546
    %v3559 = vpack.c.b16 %v3549, %v3548
    %v3560 = vpack.c.b16 %v3551, %v3550
    %v3561 = vpack.c.b16 %v3553, %v3552
    %3570 = vmatprep.subr.bf16.mxu0 0
    %3571 = vmatpush1.bf16.msra.mxu0 %v3554
    %3572 = vmatprep.subr.bf16.mxu0 0
    %3573 = vmatpush1.bf16.msra.mxu0 %v3555
    %3574 = vmatprep.subr.bf16.mxu0 0
    %3575 = vmatpush1.bf16.msra.mxu0 %v3556
    %3576 = vmatprep.subr.bf16.mxu0 0
    %3577 = vmatpush1.bf16.msra.mxu0 %v3557
    %3578 = vmatprep.subr.bf16.mxu0 0
    %3579 = vmatpush1.bf16.msra.mxu0 %v3558
    %3580 = vmatprep.subr.bf16.mxu0 0
    %3581 = vmatpush1.bf16.msra.mxu0 %v3559
    %3582 = vmatprep.subr.bf16.mxu0 0
    %3583 = vmatpush1.bf16.msra.mxu0 %v3560
    %3584 = vmatprep.subr.bf16.mxu0 0
    %3585 = vmatpush1.bf16.msra.mxu0 %v3561
    %3586 = vmatprep.subr.bf16.mxu0 0
    %3587 = vmatpush1.bf16.msra.mxu0 0
    %3588 = vmatprep.subr.bf16.mxu0 0
    %3589 = vmatpush1.bf16.msra.mxu0 0
    %3590 = vmatprep.subr.bf16.mxu0 0
    %3591 = vmatpush1.bf16.msra.mxu0 0
    %3592 = vmatprep.subr.bf16.mxu0 0
    %3593 = vmatpush1.bf16.msra.mxu0 0
    %3594 = vmatprep.subr.bf16.mxu0 0
    %3595 = vmatpush1.bf16.msra.mxu0 0
    %3596 = vmatprep.subr.bf16.mxu0 0
    %3597 = vmatpush1.bf16.msra.mxu0 0
    %3598 = vmatprep.subr.bf16.mxu0 0
    %3599 = vmatpush1.bf16.msra.mxu0 0
    %3600 = vmatprep.subr.bf16.mxu0 0
    %3601 = vmatpush1.bf16.msra.mxu0 0
    %3602 = vmatprep.mubr.bf16.mxu0 0
    %3603 = vmatmul.mubr.bf16.gmra.mrb[0].mxu0 %v3519
    %v3604 = vpop.f32.mrb[0].mxu0
    %v3605 = vadd.f32 0.0, %v3604
    %v3606 = vpop.f32.mrb[0].mxu0
    %v3607 = vpop.f32.mrb[0].mxu0
    %v3608 = vpop.f32.mrb[0].mxu0
    %3609 = vmatprep.mubr.bf16.mxu0 0
    %3610 = vmatmul.mubr.bf16.gmra.mrb[0].mxu0 %v3520
    %v3611 = vpop.f32.mrb[0].mxu0
    %v3612 = vpop.f32.mrb[0].mxu0
    %v3613 = vpop.f32.mrb[0].mxu0
    %v3614 = vadd.f32 0.0, %v3613
    %v3615 = vpop.f32.mrb[0].mxu0
    %3616 = vmatprep.mubr.bf16.mxu0 0
    %3617 = vmatmul.mubr.bf16.gmra.mrb[0].mxu0 %v3521
    %v3618 = vpop.f32.mrb[0].mxu0
    %v3619 = vpop.f32.mrb[0].mxu0
    %v3620 = vpop.f32.mrb[0].mxu0
    %v3621 = vpop.f32.mrb[0].mxu0
    %3622 = vdwg.mxu0
    %v3623 = vadd.f32 %v3242, %v3605
    %v3624 = vadd.f32 %v3245, %v3614
    %s3625 = scalar_lea.vmem %s15, 1
    %v3626 = vld [vmem:[%s3625] sm:$0x1]
    %v3628 = vlaneseq
    %v3629 = vshrl.u32 %v3628, 7
    %v3630 = vsub.s32 0, %v3629
    %v3631 = vrot.slane %v3626, %v3630
    %v3633 = vadd.f32 %v3623, %v3631
    %v3634 = vadd.f32 %v3624, %v3631
    %v3636 = vrot.slane %v3634, 7
    %vm3638 = vcmask 1040384
    %v3639 = vsel %vm3638, %v3633, %v3636
    %v3640 = vld [vmem:[%s16] sm:$0xff]
    %v3641 = vld [vmem:[%s16 + $0x8] sm:$0xff]
    %v3642 = vld [vmem:[%s16 + $0x10] sm:$0xff]
    %v3643 = vld [vmem:[%s16 + $0x18] sm:$0xff]
    %v3644 = vpack.c.bf16 %v3639, %v3639
    %v3645 = vld [vmem:[%s17] sm:$0x3]
    %v3647 = vlaneseq
    %v3648 = vshrl.u32 %v3647, 7
    %v3649 = vsub.s32 0, %v3648
    %v3650 = vrot.slane %v3645, %v3649
    %v3651 = vlaneseq
    %v3652 = vshrl.u32 %v3651, 7
    %v3653 = vsub.s32 1, %v3652
    %v3654 = vrot.slane %v3645, %v3653
    %v3661 = vunpack.c.l.b16 %v3640
    %v3662 = vunpack.c.h.b16 %v3640
    %v3663 = vunpack.c.l.b16 %v3641
    %v3664 = vunpack.c.h.b16 %v3641
    %v3665 = vunpack.c.l.b16 %v3642
    %v3666 = vunpack.c.h.b16 %v3642
    %v3667 = vunpack.c.l.b16 %v3643
    %v3668 = vunpack.c.h.b16 %v3643
    %v3669 = vpack.c.b16 %v3663, %v3661
    %v3670 = vpack.c.b16 %v3664, %v3662
    %v3671 = vpack.c.b16 %v3667, %v3665
    %v3672 = vpack.c.b16 %v3668, %v3666
    %v3678 = vsel %vm289, %v3644, 0
    %3680 = vmatprep.subr.bf16.mxu0 %v3670
    %3681 = vmatpush1.bf16.msra.mxu0 %v3669
    %3682 = vmatprep.subr.bf16.mxu0 %v3672
    %3683 = vmatpush1.bf16.msra.mxu0 %v3671
    %3684 = vmatprep.subr.bf16.mxu0 0
    %3685 = vmatpush1.bf16.msra.mxu0 0
    %3686 = vmatprep.subr.bf16.mxu0 0
    %3687 = vmatpush1.bf16.msra.mxu0 0
    %3688 = vmatprep.subr.bf16.mxu0 0
    %3689 = vmatpush1.bf16.msra.mxu0 0
    %3690 = vmatprep.subr.bf16.mxu0 0
    %3691 = vmatpush1.bf16.msra.mxu0 0
    %3692 = vmatprep.subr.bf16.mxu0 0
    %3693 = vmatpush1.bf16.msra.mxu0 0
    %3694 = vmatprep.subr.bf16.mxu0 0
    %3695 = vmatpush1.bf16.msra.mxu0 0
    %3696 = vmatprep.subr.bf16.mxu0 0
    %3697 = vmatpush1.bf16.msra.mxu0 0
    %3698 = vmatprep.subr.bf16.mxu0 0
    %3699 = vmatpush1.bf16.msra.mxu0 0
    %3700 = vmatprep.subr.bf16.mxu0 0
    %3701 = vmatpush1.bf16.msra.mxu0 0
    %3702 = vmatprep.subr.bf16.mxu0 0
    %3703 = vmatpush1.bf16.msra.mxu0 0
    %3704 = vmatprep.subr.bf16.mxu0 0
    %3705 = vmatpush1.bf16.msra.mxu0 0
    %3706 = vmatprep.subr.bf16.mxu0 0
    %3707 = vmatpush1.bf16.msra.mxu0 0
    %3708 = vmatprep.subr.bf16.mxu0 0
    %3709 = vmatpush1.bf16.msra.mxu0 0
    %3710 = vmatprep.subr.bf16.mxu0 0
    %3711 = vmatpush1.bf16.msra.mxu0 0
    %3712 = vmatprep.mubr.bf16.mxu0 0
    %3713 = vmatmul.mubr.bf16.gmra.mrb[0].mxu0 %v3678
    %v3714 = vpop.f32.mrb[0].mxu0
    %v3715 = vadd.f32 %v3650, %v3714
    %v3716 = vpop.f32.mrb[0].mxu0
    %v3717 = vadd.f32 %v3654, %v3716
    %v3718 = vpop.f32.mrb[0].mxu0
    %v3719 = vpop.f32.mrb[0].mxu0
    %3720 = vdwg.mxu0
    %v3721 = vmax.f32 %v3715, 0.0
    %v3722 = vmax.f32 %v3717, 0.0
    %v3723 = vld [vmem:[%s18] sm:$0xf]
    %v3724 = vld [vmem:[%s18 + $0x4] sm:$0xf]
    %v3725 = vld [vmem:[%s18 + $0x8] sm:$0xf]
    %v3726 = vld [vmem:[%s18 + $0xc] sm:$0xf]
    %v3727 = vld [vmem:[%s18 + $0x10] sm:$0xf]
    %v3728 = vld [vmem:[%s18 + $0x14] sm:$0xf]
    %v3729 = vld [vmem:[%s18 + $0x18] sm:$0xf]
    %v3730 = vld [vmem:[%s18 + $0x1c] sm:$0xf]
    %v3731 = vld [vmem:[%s18 + $0x20] sm:$0xf]
    %v3732 = vld [vmem:[%s18 + $0x24] sm:$0xf]
    %v3733 = vld [vmem:[%s18 + $0x28] sm:$0xf]
    %v3734 = vld [vmem:[%s18 + $0x2c] sm:$0xf]
    %v3735 = vld [vmem:[%s18 + $0x30] sm:$0xf]
    %v3736 = vld [vmem:[%s18 + $0x34] sm:$0xf]
    %v3737 = vld [vmem:[%s18 + $0x38] sm:$0xf]
    %v3738 = vld [vmem:[%s18 + $0x3c] sm:$0xf]
    %v3739 = vld [vmem:[%s18 + $0x40] sm:$0xf]
    %v3740 = vld [vmem:[%s18 + $0x44] sm:$0xf]
    %v3741 = vld [vmem:[%s18 + $0x48] sm:$0xf]
    %v3742 = vld [vmem:[%s18 + $0x4c] sm:$0xf]
    %v3743 = vld [vmem:[%s18 + $0x50] sm:$0xf]
    %v3744 = vld [vmem:[%s18 + $0x54] sm:$0xf]
    %v3745 = vld [vmem:[%s18 + $0x58] sm:$0xf]
    %v3746 = vld [vmem:[%s18 + $0x5c] sm:$0xf]
    %v3747 = vld [vmem:[%s18 + $0x60] sm:$0xf]
    %v3748 = vld [vmem:[%s18 + $0x64] sm:$0xf]
    %v3749 = vld [vmem:[%s18 + $0x68] sm:$0xf]
    %v3750 = vld [vmem:[%s18 + $0x6c] sm:$0xf]
    %v3751 = vld [vmem:[%s18 + $0x70] sm:$0xf]
    %v3752 = vld [vmem:[%s18 + $0x74] sm:$0xf]
    %v3753 = vld [vmem:[%s18 + $0x78] sm:$0xf]
    %v3754 = vld [vmem:[%s18 + $0x7c] sm:$0xf]
    %v3755 = vpack.c.bf16 %v3721, %v3721
    %v3756 = vpack.c.bf16 %v3722, %v3722
    %v3757 = vld [vmem:[%s19] sm:$0x1]
    %v3759 = vlaneseq
    %v3760 = vshrl.u32 %v3759, 7
    %v3761 = vsub.s32 0, %v3760
    %v3762 = vrot.slane %v3757, %v3761
    %v3796 = vunpack.c.l.b16 %v3723
    %v3797 = vunpack.c.l.b16 %v3724
    %v3798 = vunpack.c.l.b16 %v3725
    %v3799 = vunpack.c.l.b16 %v3726
    %v3800 = vunpack.c.l.b16 %v3727
    %v3801 = vunpack.c.l.b16 %v3728
    %v3802 = vunpack.c.l.b16 %v3729
    %v3803 = vunpack.c.l.b16 %v3730
    %v3804 = vunpack.c.l.b16 %v3731
    %v3805 = vunpack.c.l.b16 %v3732
    %v3806 = vunpack.c.l.b16 %v3733
    %v3807 = vunpack.c.l.b16 %v3734
    %v3808 = vunpack.c.l.b16 %v3735
    %v3809 = vunpack.c.l.b16 %v3736
    %v3810 = vunpack.c.l.b16 %v3737
    %v3811 = vunpack.c.l.b16 %v3738
    %v3812 = vunpack.c.l.b16 %v3739
    %v3813 = vunpack.c.l.b16 %v3740
    %v3814 = vunpack.c.l.b16 %v3741
    %v3815 = vunpack.c.l.b16 %v3742
    %v3816 = vunpack.c.l.b16 %v3743
    %v3817 = vunpack.c.l.b16 %v3744
    %v3818 = vunpack.c.l.b16 %v3745
    %v3819 = vunpack.c.l.b16 %v3746
    %v3820 = vunpack.c.l.b16 %v3747
    %v3821 = vunpack.c.l.b16 %v3748
    %v3822 = vunpack.c.l.b16 %v3749
    %v3823 = vunpack.c.l.b16 %v3750
    %v3824 = vunpack.c.l.b16 %v3751
    %v3825 = vunpack.c.l.b16 %v3752
    %v3826 = vunpack.c.l.b16 %v3753
    %v3827 = vunpack.c.l.b16 %v3754
    %v3828 = vpack.c.b16 %v3797, %v3796
    %v3829 = vpack.c.b16 %v3799, %v3798
    %v3830 = vpack.c.b16 %v3801, %v3800
    %v3831 = vpack.c.b16 %v3803, %v3802
    %v3832 = vpack.c.b16 %v3805, %v3804
    %v3833 = vpack.c.b16 %v3807, %v3806
    %v3834 = vpack.c.b16 %v3809, %v3808
    %v3835 = vpack.c.b16 %v3811, %v3810
    %v3836 = vpack.c.b16 %v3813, %v3812
    %v3837 = vpack.c.b16 %v3815, %v3814
    %v3838 = vpack.c.b16 %v3817, %v3816
    %v3839 = vpack.c.b16 %v3819, %v3818
    %v3840 = vpack.c.b16 %v3821, %v3820
    %v3841 = vpack.c.b16 %v3823, %v3822
    %v3842 = vpack.c.b16 %v3825, %v3824
    %v3843 = vpack.c.b16 %v3827, %v3826
    %3860 = vmatprep.subr.bf16.mxu0 0
    %3861 = vmatpush1.bf16.msra.mxu0 %v3828
    %3862 = vmatprep.subr.bf16.mxu0 0
    %3863 = vmatpush1.bf16.msra.mxu0 %v3829
    %3864 = vmatprep.subr.bf16.mxu0 0
    %3865 = vmatpush1.bf16.msra.mxu0 %v3830
    %3866 = vmatprep.subr.bf16.mxu0 0
    %3867 = vmatpush1.bf16.msra.mxu0 %v3831
    %3868 = vmatprep.subr.bf16.mxu0 0
    %3869 = vmatpush1.bf16.msra.mxu0 %v3832
    %3870 = vmatprep.subr.bf16.mxu0 0
    %3871 = vmatpush1.bf16.msra.mxu0 %v3833
    %3872 = vmatprep.subr.bf16.mxu0 0
    %3873 = vmatpush1.bf16.msra.mxu0 %v3834
    %3874 = vmatprep.subr.bf16.mxu0 0
    %3875 = vmatpush1.bf16.msra.mxu0 %v3835
    %3876 = vmatprep.subr.bf16.mxu0 0
    %3877 = vmatpush1.bf16.msra.mxu0 %v3836
    %3878 = vmatprep.subr.bf16.mxu0 0
    %3879 = vmatpush1.bf16.msra.mxu0 %v3837
    %3880 = vmatprep.subr.bf16.mxu0 0
    %3881 = vmatpush1.bf16.msra.mxu0 %v3838
    %3882 = vmatprep.subr.bf16.mxu0 0
    %3883 = vmatpush1.bf16.msra.mxu0 %v3839
    %3884 = vmatprep.subr.bf16.mxu0 0
    %3885 = vmatpush1.bf16.msra.mxu0 %v3840
    %3886 = vmatprep.subr.bf16.mxu0 0
    %3887 = vmatpush1.bf16.msra.mxu0 %v3841
    %3888 = vmatprep.subr.bf16.mxu0 0
    %3889 = vmatpush1.bf16.msra.mxu0 %v3842
    %3890 = vmatprep.subr.bf16.mxu0 0
    %3891 = vmatpush1.bf16.msra.mxu0 %v3843
    %3892 = vmatprep.mubr.bf16.mxu0 %v3756
    %3893 = vmatmul.mubr.bf16.gmra.mrb[0].mxu0 %v3755
    %v3894 = vpop.f32.mrb[0].mxu0
    %v3895 = vadd.f32 %v3762, %v3894
    %v3896 = vpop.f32.mrb[0].mxu0
    %v3897 = vpop.f32.mrb[0].mxu0
    %v3898 = vpop.f32.mrb[0].mxu0
    %3899 = vdwg.mxu0
    %v3900 = vmax.f32 %v3895, 0.0
    %v3901 = vld [vmem:[%s20] sm:$0xf]
    %v3902 = vld [vmem:[%s20 + $0x4] sm:$0xf]
    %v3903 = vld [vmem:[%s20 + $0x8] sm:$0xf]
    %v3904 = vld [vmem:[%s20 + $0xc] sm:$0xf]
    %v3905 = vld [vmem:[%s20 + $0x10] sm:$0xf]
    %v3906 = vld [vmem:[%s20 + $0x14] sm:$0xf]
    %v3907 = vld [vmem:[%s20 + $0x18] sm:$0xf]
    %v3908 = vld [vmem:[%s20 + $0x1c] sm:$0xf]
    %v3909 = vld [vmem:[%s20 + $0x20] sm:$0xf]
    %v3910 = vld [vmem:[%s20 + $0x24] sm:$0xf]
    %v3911 = vld [vmem:[%s20 + $0x28] sm:$0xf]
    %v3912 = vld [vmem:[%s20 + $0x2c] sm:$0xf]
    %v3913 = vld [vmem:[%s20 + $0x30] sm:$0xf]
    %v3914 = vld [vmem:[%s20 + $0x34] sm:$0xf]
    %v3915 = vld [vmem:[%s20 + $0x38] sm:$0xf]
    %v3916 = vld [vmem:[%s20 + $0x3c] sm:$0xf]
    %v3917 = vpack.c.bf16 %v3900, %v3900
    %v3918 = vld [vmem:[%s21] sm:$0x1]
    %v3920 = vlaneseq
    %v3921 = vshrl.u32 %v3920, 7
    %v3922 = vsub.s32 0, %v3921
    %v3923 = vrot.slane %v3918, %v3922
    %v3941 = vunpack.c.l.b16 %v3901
    %v3942 = vunpack.c.l.b16 %v3902
    %v3943 = vunpack.c.l.b16 %v3903
    %v3944 = vunpack.c.l.b16 %v3904
    %v3945 = vunpack.c.l.b16 %v3905
    %v3946 = vunpack.c.l.b16 %v3906
    %v3947 = vunpack.c.l.b16 %v3907
    %v3948 = vunpack.c.l.b16 %v3908
    %v3949 = vunpack.c.l.b16 %v3909
    %v3950 = vunpack.c.l.b16 %v3910
    %v3951 = vunpack.c.l.b16 %v3911
    %v3952 = vunpack.c.l.b16 %v3912
    %v3953 = vunpack.c.l.b16 %v3913
    %v3954 = vunpack.c.l.b16 %v3914
    %v3955 = vunpack.c.l.b16 %v3915
    %v3956 = vunpack.c.l.b16 %v3916
    %v3957 = vpack.c.b16 %v3942, %v3941
    %v3958 = vpack.c.b16 %v3944, %v3943
    %v3959 = vpack.c.b16 %v3946, %v3945
    %v3960 = vpack.c.b16 %v3948, %v3947
    %v3961 = vpack.c.b16 %v3950, %v3949
    %v3962 = vpack.c.b16 %v3952, %v3951
    %v3963 = vpack.c.b16 %v3954, %v3953
    %v3964 = vpack.c.b16 %v3956, %v3955
    %3973 = vmatprep.subr.bf16.mxu0 0
    %3974 = vmatpush1.bf16.msra.mxu0 %v3957
    %3975 = vmatprep.subr.bf16.mxu0 0
    %3976 = vmatpush1.bf16.msra.mxu0 %v3958
    %3977 = vmatprep.subr.bf16.mxu0 0
    %3978 = vmatpush1.bf16.msra.mxu0 %v3959
    %3979 = vmatprep.subr.bf16.mxu0 0
    %3980 = vmatpush1.bf16.msra.mxu0 %v3960
    %3981 = vmatprep.subr.bf16.mxu0 0
    %3982 = vmatpush1.bf16.msra.mxu0 %v3961
    %3983 = vmatprep.subr.bf16.mxu0 0
    %3984 = vmatpush1.bf16.msra.mxu0 %v3962
    %3985 = vmatprep.subr.bf16.mxu0 0
    %3986 = vmatpush1.bf16.msra.mxu0 %v3963
    %3987 = vmatprep.subr.bf16.mxu0 0
    %3988 = vmatpush1.bf16.msra.mxu0 %v3964
    %3989 = vmatprep.subr.bf16.mxu0 0
    %3990 = vmatpush1.bf16.msra.mxu0 0
    %3991 = vmatprep.subr.bf16.mxu0 0
    %3992 = vmatpush1.bf16.msra.mxu0 0
    %3993 = vmatprep.subr.bf16.mxu0 0
    %3994 = vmatpush1.bf16.msra.mxu0 0
    %3995 = vmatprep.subr.bf16.mxu0 0
    %3996 = vmatpush1.bf16.msra.mxu0 0
    %3997 = vmatprep.subr.bf16.mxu0 0
    %3998 = vmatpush1.bf16.msra.mxu0 0
    %3999 = vmatprep.subr.bf16.mxu0 0
    %4000 = vmatpush1.bf16.msra.mxu0 0
    %4001 = vmatprep.subr.bf16.mxu0 0
    %4002 = vmatpush1.bf16.msra.mxu0 0
    %4003 = vmatprep.subr.bf16.mxu0 0
    %4004 = vmatpush1.bf16.msra.mxu0 0
    %4005 = vmatprep.mubr.bf16.mxu0 0
    %4006 = vmatmul.mubr.bf16.gmra.mrb[0].mxu0 %v3917
    %v4007 = vpop.f32.mrb[0].mxu0
    %v4008 = vadd.f32 %v3923, %v4007
    %v4009 = vpop.f32.mrb[0].mxu0
    %v4010 = vpop.f32.mrb[0].mxu0
    %v4011 = vpop.f32.mrb[0].mxu0
    %4012 = vdwg.mxu0
    %v4013 = vmax.f32 %v4008, 0.0
    %v4014 = vld [vmem:[%s22] sm:$0xf]
    %v4015 = vld [vmem:[%s22 + $0x4] sm:$0xf]
    %v4016 = vld [vmem:[%s22 + $0x8] sm:$0xf]
    %v4017 = vld [vmem:[%s22 + $0xc] sm:$0xf]
    %v4018 = vld [vmem:[%s22 + $0x10] sm:$0xf]
    %v4019 = vld [vmem:[%s22 + $0x14] sm:$0xf]
    %v4020 = vld [vmem:[%s22 + $0x18] sm:$0xf]
    %v4021 = vld [vmem:[%s22 + $0x1c] sm:$0xf]
    %v4022 = vpack.c.bf16 %v4013, %v4013
    %v4023 = vld [vmem:[%s23] sm:$0x1]
    %v4025 = vlaneseq
    %v4026 = vshrl.u32 %v4025, 7
    %v4027 = vsub.s32 0, %v4026
    %v4028 = vrot.slane %v4023, %v4027
    %v4038 = vunpack.c.l.b16 %v4014
    %v4039 = vunpack.c.l.b16 %v4015
    %v4040 = vunpack.c.l.b16 %v4016
    %v4041 = vunpack.c.l.b16 %v4017
    %v4042 = vunpack.c.l.b16 %v4018
    %v4043 = vunpack.c.l.b16 %v4019
    %v4044 = vunpack.c.l.b16 %v4020
    %v4045 = vunpack.c.l.b16 %v4021
    %v4046 = vpack.c.b16 %v4039, %v4038
    %v4047 = vpack.c.b16 %v4041, %v4040
    %v4048 = vpack.c.b16 %v4043, %v4042
    %v4049 = vpack.c.b16 %v4045, %v4044
    %v4055 = vsel %vm214, %v4022, 0
    %4057 = vmatprep.subr.bf16.mxu0 0
    %4058 = vmatpush1.bf16.msra.mxu0 %v4046
    %4059 = vmatprep.subr.bf16.mxu0 0
    %4060 = vmatpush1.bf16.msra.mxu0 %v4047
    %4061 = vmatprep.subr.bf16.mxu0 0
    %4062 = vmatpush1.bf16.msra.mxu0 %v4048
    %4063 = vmatprep.subr.bf16.mxu0 0
    %4064 = vmatpush1.bf16.msra.mxu0 %v4049
    %4065 = vmatprep.subr.bf16.mxu0 0
    %4066 = vmatpush1.bf16.msra.mxu0 0
    %4067 = vmatprep.subr.bf16.mxu0 0
    %4068 = vmatpush1.bf16.msra.mxu0 0
    %4069 = vmatprep.subr.bf16.mxu0 0
    %4070 = vmatpush1.bf16.msra.mxu0 0
    %4071 = vmatprep.subr.bf16.mxu0 0
    %4072 = vmatpush1.bf16.msra.mxu0 0
    %4073 = vmatprep.subr.bf16.mxu0 0
    %4074 = vmatpush1.bf16.msra.mxu0 0
    %4075 = vmatprep.subr.bf16.mxu0 0
    %4076 = vmatpush1.bf16.msra.mxu0 0
    %4077 = vmatprep.subr.bf16.mxu0 0
    %4078 = vmatpush1.bf16.msra.mxu0 0
    %4079 = vmatprep.subr.bf16.mxu0 0
    %4080 = vmatpush1.bf16.msra.mxu0 0
    %4081 = vmatprep.subr.bf16.mxu0 0
    %4082 = vmatpush1.bf16.msra.mxu0 0
    %4083 = vmatprep.subr.bf16.mxu0 0
    %4084 = vmatpush1.bf16.msra.mxu0 0
    %4085 = vmatprep.subr.bf16.mxu0 0
    %4086 = vmatpush1.bf16.msra.mxu0 0
    %4087 = vmatprep.subr.bf16.mxu0 0
    %4088 = vmatpush1.bf16.msra.mxu0 0
    %4089 = vmatprep.mubr.bf16.mxu0 0
    %4090 = vmatmul.mubr.bf16.gmra.mrb[0].mxu0 %v4055
    %v4091 = vpop.f32.mrb[0].mxu0
    %v4092 = vadd.f32 %v4028, %v4091
    %v4093 = vpop.f32.mrb[0].mxu0
    %v4094 = vpop.f32.mrb[0].mxu0
    %v4095 = vpop.f32.mrb[0].mxu0
    %4096 = vdwg.mxu0
    %vm4097 = vcmask 17408
    %4098 = vst.msk [vmem:[#allocation2] sm:$0x3] %vm4097, %v4092
    // Predicated region
    $region98: #{multi_model_forward.1} parent=1 // pred_check
      _
    $region99: #{multi_model_forward.1} parent=1 // pred_check_branch
      %4100 = sbr.rel (0) target = $region101
    $region100: #{multi_model_forward.1} parent=1 // pred_region
      %s4102 = ssub.s32 32, 32
      %4103 = vsyncadd [#allocation3], %s4102
      %s4105 = sshll.u32 [#allocation2], 4
      %s4106 = int_to_ptr.vmem [resolvable:$true] %s4105
      %4108 = dma.vmem_to_hbm [thread:$0]  %s4106, 32, %s24, [#allocation3]
    $region101: #{multi_model_forward.1} parent=1 // pred_fallthru
      _
    // Predicated region
    $region102: #{multi_model_forward.1} parent=1 // pred_check
      _
    $region103: #{multi_model_forward.1} parent=1 // pred_check_branch
      %4110 = sbr.rel (0) target = $region105
    $region104: #{multi_model_forward.1} parent=1 // pred_region
      %4111 = dma.done [#allocation3], 32
    $region105: #{multi_model_forward.1} parent=1 // pred_fallthru
      _
    %4112 = vsyncpa [#allocation3], 1

</llo_original>
